<compile_context>
chip_gen: v7x
topology: tpu7x:2x2x1
jax: 0.10.0
libtpu: 0.0.40
codegen_flags: <defaults>
</compile_context>

<pallas_src>
import numpy as np
import jax
import jax.numpy as jnp
from jax.experimental import pallas as pl
from jax.experimental.pallas import tpu as pltpu


def _bilinear_matrix_np(out_size: int, in_size: int) -> np.ndarray:
    """Row-stochastic [out_size, in_size] bilinear interpolation matrix
    (align_corners=False, PyTorch/torchvision convention). float32 numpy."""
    scale = in_size / out_size
    dst = np.arange(out_size, dtype=np.float64)
    src = (dst + 0.5) * scale - 0.5
    src = np.maximum(src, 0.0)                       # torch clamps negative src
    i0 = np.minimum(np.floor(src).astype(np.int64), in_size - 1)
    i1 = np.minimum(i0 + 1, in_size - 1)
    w1 = (src - i0).astype(np.float32)
    w0 = 1.0 - w1
    W = np.zeros((out_size, in_size), dtype=np.float32)
    W[np.arange(out_size), i0] += w0
    W[np.arange(out_size), i1] += w1
    return W


def _resize_kernel(x_ref, wh_ref, wwdT_ref, o_ref):
    # x_ref:    (TB, H, W*D)   input rows (input dtype, f32 or bf16)
    # wh_ref:   (S, H)         row-interp matrix (same dtype as x)
    # wwdT_ref: (W*D, S*D)     kron(Ww^T, I_D), float32
    # o_ref:    (TB, S, S*D)   resized rows, float32
    tb, H, WD = x_ref.shape
    S = wh_ref.shape[0]
    SD = wwdT_ref.shape[1]

    x = x_ref[...]                                        # no dtype cast
    # Hoisted once per grid step; needed to make the batch dim explicit for the
    # batched dot_general below.
    wh_b = jnp.broadcast_to(wh_ref[...], (tb, S, H))

    # H contraction, batched over TB: (TB,S,H) x (TB,H,W*D) -> (TB,S,W*D).
    # HIGHEST precision keeps f32 accuracy (needed to match the fp64 reference
    # to 1e-4); the bulk of the FLOPs is in the second matmul anyway.
    t1 = jnp.einsum(
        "msh,mhn->msn", wh_b, x,
        precision=jax.lax.Precision.HIGHEST,
        preferred_element_type=jnp.float32)

    # W*D contraction as one flat, lane-dense MXU matmul:
    # (TB*S, W*D) @ (W*D, S*D) -> (TB*S, S*D).
    # S is a multiple of 8 in practice, so the reshape merging (TB,S) is free.
    out = jnp.dot(
        t1.reshape(tb * S, WD), wwdT_ref[...],
        precision=jax.lax.Precision.HIGHEST,
        preferred_element_type=jnp.float32)

    o_ref[...] = out.reshape(tb, S, SD)


def resize3d(img: jnp.ndarray, size: int = 64,
             vmem_block_budget: int = 2 << 20) -> jnp.ndarray:
    """Pallas equivalent of Resize3D(size).forward(img).

    img: [..., H, W, D] with square spatial dims (H == W expected, as implied
    by the PyTorch module). Returns float32 [..., size, size, D].
    """
    lead = img.shape[:-3]
    H, W, D = img.shape[-3:]
    S = int(size)

    # Compute dtype: keep bf16 as bf16 (half the HBM traffic), everything else
    # goes through float32. Output is always float32 (matches the module).
    if img.dtype == jnp.bfloat16:
        cdtype = jnp.bfloat16
    else:
        cdtype = jnp.float32
    x = img.astype(cdtype).reshape(-1, H, W * D)          # free reshape, no transpose
    M = x.shape[0]

    # Interpolation weights (host-side numpy constants).
    wh_np = _bilinear_matrix_np(S, H)                     # (S, H)
    ww_np = _bilinear_matrix_np(S, W)                     # (S, W)
    wwdT_np = np.kron(ww_np.T, np.eye(D, dtype=np.float32))   # (W*D, S*D)
    wh = jnp.asarray(wh_np, dtype=cdtype)
    wwdT = jnp.asarray(wwdT_np, dtype=jnp.float32)

    # Tile size: biggest block that fits a conservative VMEM budget. Per-row
    # footprint counts the double-buffered input/output blocks plus the f32
    # intermediates, so the total stays well inside even v5e's 16 MiB scoped
    # default and v7x's 32 MiB. Keep >= 2 grid steps when possible so both
    # v7x TensorCores get work via dimension_semantics=("parallel",).
    in_row = H * W * D * np.dtype(cdtype).itemsize
    out_row = S * S * D * 4
    t1_row = S * W * D * 4
    per_row = 2 * (in_row + out_row) + t1_row + out_row   # buffers + intermediates
    tb = max(1, min(M, (3 * vmem_block_budget) // per_row))
    if M > 1:
        tb = min(tb, -(-M // 2))
    tb = int(tb)

    # Pad M up to a multiple of tb (never fall back to tb=1).
    Mp = -(-M // tb) * tb
    if Mp != M:
        x = jnp.pad(x, ((0, Mp - M), (0, 0), (0, 0)))
    grid = (Mp // tb,)

    flops = 2 * Mp * S * H * (W * D) + 2 * Mp * S * (W * D) * (S * D)
    bytes_accessed = (Mp * in_row + Mp * out_row
                      + wh.size * np.dtype(cdtype).itemsize + wwdT.size * 4)

    out_flat = pl.pallas_call(
        _resize_kernel,
        out_shape=jax.ShapeDtypeStruct((Mp, S, S * D), jnp.float32),
        grid_spec=pltpu.PrefetchScalarGridSpec(
            num_scalar_prefetch=0,
            grid=grid,
            in_specs=[
                pl.BlockSpec((tb, H, W * D), lambda i: (i, 0, 0)),
                pl.BlockSpec((S, H), lambda i: (0, 0)),
                pl.BlockSpec((W * D, S * D), lambda i: (0, 0)),
            ],
            out_specs=pl.BlockSpec((tb, S, S * D), lambda i: (i, 0, 0)),
        ),
        compiler_params=pltpu.CompilerParams(
            dimension_semantics=("parallel",)),
        cost_estimate=pl.CostEstimate(
            flops=flops, transcendentals=0, bytes_accessed=bytes_accessed),
    )(x, wh, wwdT)

    # [Mp, S, S*D] -> [..., S, S, D]: slice off pad + free reshape (no transpose).
    out = out_flat[:M].reshape(*lead, S, S, D)
    return out


if __name__ == "__main__":
    key = jax.random.PRNGKey(0)
    B, C, H, W, D = 2, 4, 16, 16, 8
    SIZE = 32          # upsampling -> antialias flag irrelevant, exact match
    img = jax.random.normal(key, (B, C, H, W, D), dtype=jnp.float32)

    out = resize3d(img, size=SIZE)
    out = jax.block_until_ready(out)

    assert out.shape == (B, C, SIZE, SIZE, D), out.shape
    assert out.dtype == jnp.float32

    # Exact float64 reference with the same separable bilinear matrices.
    wh64 = _bilinear_matrix_np(SIZE, H).astype(np.float64)
    ww64 = _bilinear_matrix_np(SIZE, W).astype(np.float64)
    ref = np.einsum("sh,bchwd,tw->bcstd", wh64,
                    np.asarray(img, dtype=np.float64), ww64)
    np.testing.assert_allclose(np.asarray(out), ref, rtol=1e-4, atol=1e-4)

    print("KERNEL_OK")
</pallas_src>

<mosaic_0001>
module attributes {stable_mosaic.version = 11 : i64} {
  func.func @_resize_kernel(%arg0: i32, %arg1: memref<4x16x128xf32, #tpu.memory_space<vmem>>, %arg2: memref<32x16xf32, #tpu.memory_space<vmem>>, %arg3: memref<128x256xf32, #tpu.memory_space<vmem>>, %arg4: memref<4x32x256xf32, #tpu.memory_space<vmem>>) attributes {dimension_semantics = [#tpu.dimension_semantics<parallel>], iteration_bounds = array<i64: 2>, scalar_prefetch = 0 : i64, scratch_operands = 0 : i64, tpu.core_type = #tpu.core_type<tc>, window_params = [{transform_indices = @transform_0, window_bounds = array<i64: 4, 16, 128>}, {pipeline_mode = #tpu.pipeline_mode<synchronous>, transform_indices = @transform_1, window_bounds = array<i64: 32, 16>}, {pipeline_mode = #tpu.pipeline_mode<synchronous>, transform_indices = @transform_2, window_bounds = array<i64: 128, 256>}, {transform_indices = @transform_3, window_bounds = array<i64: 4, 32, 256>}]} {
    %c0 = arith.constant 0 : index
    %c0_0 = arith.constant 0 : index
    %c0_1 = arith.constant 0 : index
    %0 = vector.load %arg1[%c0, %c0_0, %c0_1] : memref<4x16x128xf32, #tpu.memory_space<vmem>>, vector<4x16x128xf32>
    %c0_2 = arith.constant 0 : index
    %c0_3 = arith.constant 0 : index
    %1 = vector.load %arg2[%c0_2, %c0_3] : memref<32x16xf32, #tpu.memory_space<vmem>>, vector<32x16xf32>
    %2 = vector.shape_cast %1 : vector<32x16xf32> to vector<1x32x16xf32>
    %3 = vector.broadcast %2 : vector<1x32x16xf32> to vector<4x32x16xf32>
    "tpu.trace_start"() <{level = 10 : i32, message = "msh,mhn->msn"}> : () -> ()
    %cst = arith.constant dense<0.000000e+00> : vector<4x32x128xf32>
    %4 = tpu.matmul %3, %0, %cst {dimension_numbers = #tpu.dot_dimension_numbers<[2], [1], [1], [2], [0, 0, 0, 1, 1, 2], [0], [0]>, precision = #tpu.contract_precision<fp32>} : vector<4x32x16xf32>, vector<4x16x128xf32>, vector<4x32x128xf32> -> vector<4x32x128xf32>
    "tpu.trace_stop"() : () -> ()
    %5 = vector.shape_cast %4 : vector<4x32x128xf32> to vector<128x128xf32>
    %c0_4 = arith.constant 0 : index
    %c0_5 = arith.constant 0 : index
    %6 = vector.load %arg3[%c0_4, %c0_5] : memref<128x256xf32, #tpu.memory_space<vmem>>, vector<128x256xf32>
    %cst_6 = arith.constant dense<0.000000e+00> : vector<128x256xf32>
    %7 = tpu.matmul %5, %6, %cst_6 {dimension_numbers = #tpu.dot_dimension_numbers<[1], [0], [0], [1], [0, 0, 1, 1], [], []>, precision = #tpu.contract_precision<fp32>} : vector<128x128xf32>, vector<128x256xf32>, vector<128x256xf32> -> vector<128x256xf32>
    %8 = vector.shape_cast %7 : vector<128x256xf32> to vector<4x32x256xf32>
    %c0_7 = arith.constant 0 : index
    %c0_8 = arith.constant 0 : index
    %c0_9 = arith.constant 0 : index
    %9 = vector.load %arg4[%c0_7, %c0_8, %c0_9] : memref<4x32x256xf32, #tpu.memory_space<vmem>>, vector<4x32x256xf32>
    tpu.vector_store %arg4[%c0_7, %c0_8, %c0_9], %8 {strides = array<i32>} : memref<4x32x256xf32, #tpu.memory_space<vmem>>, vector<4x32x256xf32>,
    return
  }
  func.func @transform_0(%arg0: i32) -> (i32, i32, i32) {
    %c0_i32 = arith.constant 0 : i32
    %c0_i32_0 = arith.constant 0 : i32
    %c0_i32_1 = arith.constant 0 : i32
    return %arg0, %c0_i32, %c0_i32_0 : i32, i32, i32
  }
  func.func @transform_1(%arg0: i32) -> (i32, i32) {
    %c0_i32 = arith.constant 0 : i32
    %c0_i32_0 = arith.constant 0 : i32
    %c0_i32_1 = arith.constant 0 : i32
    return %c0_i32, %c0_i32_0 : i32, i32
  }
  func.func @transform_2(%arg0: i32) -> (i32, i32) {
    %c0_i32 = arith.constant 0 : i32
    %c0_i32_0 = arith.constant 0 : i32
    %c0_i32_1 = arith.constant 0 : i32
    return %c0_i32, %c0_i32_0 : i32, i32
  }
  func.func @transform_3(%arg0: i32) -> (i32, i32, i32) {
    %c0_i32 = arith.constant 0 : i32
    %c0_i32_0 = arith.constant 0 : i32
    %c0_i32_1 = arith.constant 0 : i32
    return %arg0, %c0_i32, %c0_i32_0 : i32, i32, i32
  }
}

</mosaic_0001>

<llo_original>
// kernel: tpu_custom_call.1
$region0: #{tpu_custom_call.1}
  #allocation0 [shape = 'u32[]', space=smem, size = 0x4, offset = 0x4, fixed_abs, tag = 'smem constant byte address 0x4 - core index']
  #allocation1 [shape = 'u32[144,128]{1,0:T(1,128)}', space=vmem, size = 0x12000, scoped, tag = 'internal scratch']
  %s0 = inlined_call_operand.hbm [shape: f32[8,16,128], index: 0, kind: input, shape index: {}]
  %s1 = inlined_call_operand.vmem [shape: f32[32,16], index: 1, kind: input, shape index: {}]
  %s2 = inlined_call_operand.hbm [shape: f32[128,256], index: 2, kind: input, shape index: {}]
  %s3 = inlined_call_operand.hbm [shape: f32[8,32,256], index: 3, kind: output, shape index: {}]
  %s4 = sld [smem:[#allocation0]]
  $region53: #{tpu_custom_call.1} parent=0
    _
  %s6 = ssub.s32 1, %s4
  %s7 = scalar_select 0, %s6, %s4
  $region1: #{tpu_custom_call.1} parent=0
    #allocation2 [shape = 'u8[65536]{0}', space=vmem, size = 0x10000, scoped, tag = 'input window, operand 0']
    #allocation3 [shape = 's32[2]{0}', space=sflag, size = 0x8, scoped, tag = 'scoped memory for tpu_custom_call.1']
    #allocation4 [shape = 's32[2]{0}', space=sflag, size = 0x8, scoped, tag = 'scoped memory for tpu_custom_call.1']
    #allocation5 [shape = 'u8[131072]{0}', space=vmem, size = 0x20000, scoped, tag = 'input window, operand 2, single buffered']
    #allocation6 [shape = 's32[1]{0}', space=sflag, size = 0x4, scoped, tag = 'scoped memory for tpu_custom_call.1']
    #allocation7 [shape = 'u8[262144]{0}', space=vmem, size = 0x40000, scoped, tag = 'output window, operand 0']
    %8 = vsyncpa [#allocation3], 0
    %s9 = scalar_lea.sflag [#allocation3], 1
    %10 = vsyncpa %s9, 0
    %11 = vsyncpa [#allocation6], 0
    %12 = vsyncpa [#allocation4], 0
    %s13 = scalar_lea.sflag [#allocation4], 1
    %14 = vsyncpa %s13, 0
    loop: start=0, step=1, limit=4
    $region2: #{tpu_custom_call.1} parent=1 // loop_pre_header
      _
    $region3: #{tpu_custom_call.1} parent=1 // loop_header
      %s16 = sphi 0, %s20
      %p17 = scmp.ge.s32.totalorder %s16, 4
      %s26 = sphi 0, %s28
      %s29 = sphi 0, %s26
      %s30 = sphi 0, %s29
      %s46 = sphi 0, %s30
      %s50 = sphi 0, %s50
      %s52 = sphi 0, %s50
      %s53 = sphi 0, %s52
      %s67 = sphi 0, %s53
      %s71 = sphi 0, %s71
      %s73 = sphi 0, %s71
      %s74 = sphi 0, %s73
      %s88 = sphi 0, %s74
      %s94 = sphi 0, %s96
      %s97 = sphi 0, %s94
      %s98 = sphi 0, %s97
      %s114 = sphi 0, %s98
    $region4: #{tpu_custom_call.1} parent=1 // loop_header_branch
      %19 = sbr.rel (%p17) target = $region8
    $region5: #{tpu_custom_call.1} parent=1 // loop_body
      %s21 = ssub.s32 %s16, 1
      %s22 = ssub.s32 %s16, 2
      %s23 = sadd.s32 %s16, 1
      %s24 = ssub.s32 %s16, %s23
      %p25 = scmp.eq.s32.totalorder %s24, 0
      %s27 = sadd.s32 %s26, 1
      %s28 = scalar_select %p25, %s26, %s27
      %p31 = pneg %p25
      %p32 = scmp.eq.s32.totalorder %s16, 1
      %p33 = por %p31, %p32
      %p34 = scmp.ne.s32.totalorder %s26, %s29
      %p35 = scmp.eq.s32.totalorder %s16, 0
      %p36 = por %p34, %p35
      %p37 = scmp.ne.s32.totalorder %s26, %s29
      %p38 = scmp.eq.s32.totalorder %s21, 1
      %p39 = por %p37, %p38
      %p40 = scmp.ne.s32.totalorder %s29, %s30
      %p41 = scmp.eq.s32.totalorder %s21, 0
      %p42 = por %p40, %p41
      %p43 = scmp.ne.s32.totalorder %s29, %s30
      %p44 = scmp.eq.s32.totalorder %s22, 1
      %p45 = por %p43, %p44
      %p47 = scmp.ne.s32.totalorder %s30, %s46
      %p48 = scmp.eq.s32.totalorder %s22, 0
      %p49 = por %p47, %p48
      %s51 = sadd.s32 %s50, 1
      %p54 = scmp.eq.s32.totalorder %s16, 1
      %p55 = scmp.ne.s32.totalorder %s50, %s52
      %p56 = scmp.eq.s32.totalorder %s16, 0
      %p57 = por %p55, %p56
      %p58 = scmp.ne.s32.totalorder %s50, %s52
      %p59 = scmp.eq.s32.totalorder %s21, 1
      %p60 = por %p58, %p59
      %p61 = scmp.ne.s32.totalorder %s52, %s53
      %p62 = scmp.eq.s32.totalorder %s21, 0
      %p63 = por %p61, %p62
      %p64 = scmp.ne.s32.totalorder %s52, %s53
      %p65 = scmp.eq.s32.totalorder %s22, 1
      %p66 = por %p64, %p65
      %p68 = scmp.ne.s32.totalorder %s53, %s67
      %p69 = scmp.eq.s32.totalorder %s22, 0
      %p70 = por %p68, %p69
      %s72 = sadd.s32 %s71, 1
      %p75 = scmp.eq.s32.totalorder %s16, 1
      %p76 = scmp.ne.s32.totalorder %s71, %s73
      %p77 = scmp.eq.s32.totalorder %s16, 0
      %p78 = por %p76, %p77
      %p79 = scmp.ne.s32.totalorder %s71, %s73
      %p80 = scmp.eq.s32.totalorder %s21, 1
      %p81 = por %p79, %p80
      %p82 = scmp.ne.s32.totalorder %s73, %s74
      %p83 = scmp.eq.s32.totalorder %s21, 0
      %p84 = por %p82, %p83
      %p85 = scmp.ne.s32.totalorder %s73, %s74
      %p86 = scmp.eq.s32.totalorder %s22, 1
      %p87 = por %p85, %p86
      %p89 = scmp.ne.s32.totalorder %s74, %s88
      %p90 = scmp.eq.s32.totalorder %s22, 0
      %p91 = por %p89, %p90
      %s92 = ssub.s32 %s16, %s23
      %p93 = scmp.eq.s32.totalorder %s92, 0
      %s95 = sadd.s32 %s94, 1
      %s96 = scalar_select %p93, %s94, %s95
      %p99 = pneg %p93
      %p100 = scmp.eq.s32.totalorder %s16, 1
      %p101 = por %p99, %p100
      %p102 = scmp.ne.s32.totalorder %s94, %s97
      %p103 = scmp.eq.s32.totalorder %s16, 0
      %p104 = por %p102, %p103
      %p105 = scmp.ne.s32.totalorder %s94, %s97
      %p106 = scmp.eq.s32.totalorder %s21, 1
      %p107 = por %p105, %p106
      %p108 = scmp.ne.s32.totalorder %s97, %s98
      %p109 = scmp.eq.s32.totalorder %s21, 0
      %p110 = por %p108, %p109
      %p111 = scmp.ne.s32.totalorder %s97, %s98
      %p112 = scmp.eq.s32.totalorder %s22, 1
      %p113 = por %p111, %p112
      %p115 = scmp.ne.s32.totalorder %s98, %s114
      %p116 = scmp.eq.s32.totalorder %s22, 0
      %p117 = por %p115, %p116
      %p118 = scmp.le.s32.totalorder 1, %s16
      %p119 = scmp.lt.s32.totalorder %s16, 3
      %p120 = pnand %p118, %p119
      %p121 = pneg %p120
      // Predicated region
      $region9: #{tpu_custom_call.1} parent=5 // pred_check
        _
      $region10: #{tpu_custom_call.1} parent=5 // pred_check_branch
        %123 = sbr.rel (%p120) target = $region12
      $region11: #{tpu_custom_call.1} parent=5 // pred_region
        %s124 = ssub.s32 %s16, 1
        // Predicated region
        $region13: #{tpu_custom_call.1} parent=11 // pred_check
          %p125 = pneg %p63
        $region14: #{tpu_custom_call.1} parent=11 // pred_check_branch
          %127 = sbr.rel (%p125) target = $region16
        $region15: #{tpu_custom_call.1} parent=11 // pred_region
          _
        $region16: #{tpu_custom_call.1} parent=11 // pred_fallthru
          _
        // Predicated region
        $region17: #{tpu_custom_call.1} parent=11 // pred_check
          %p128 = pneg %p84
        $region18: #{tpu_custom_call.1} parent=11 // pred_check_branch
          %130 = sbr.rel (%p128) target = $region20
        $region19: #{tpu_custom_call.1} parent=11 // pred_region
          %s132 = ssub.s32 4096, 4096
          %133 = vsyncadd [#allocation6], %s132
          %s134 = sshll.u32 [#allocation5], 4
          %s135 = int_to_ptr.vmem [resolvable:$true] %s134
          %140 = dma.hbm_to_vmem [thread:$0]  %s2, 4096, %s135, [#allocation6], 256, 256, 16
        $region20: #{tpu_custom_call.1} parent=11 // pred_fallthru
          _
      $region12: #{tpu_custom_call.1} parent=5 // pred_fallthru
        _
      %p141 = scmp.lt.s32.totalorder %s16, 2
      // Predicated region
      $region21: #{tpu_custom_call.1} parent=5 // pred_check
        %p142 = pneg %p141
      $region22: #{tpu_custom_call.1} parent=5 // pred_check_branch
        %144 = sbr.rel (%p142) target = $region24
      $region23: #{tpu_custom_call.1} parent=5 // pred_region
        // Predicated region
        $region25: #{tpu_custom_call.1} parent=23 // pred_check
          %p145 = pneg %p36
        $region26: #{tpu_custom_call.1} parent=23 // pred_check_branch
          %147 = sbr.rel (%p145) target = $region28
        $region27: #{tpu_custom_call.1} parent=23 // pred_region
          %s148 = sand.u32 %s26, 1
          %s149 = scalar_lea.sflag [#allocation3], %s148
          %s150 = sand.u32 %s26, 1
          %s151 = smul.addr %s150, 64
          %s152 = scalar_lea.vmem [#allocation2], %s151
          %s153 = smul.u32 4, %s16
          %s155 = ssub.s32 1024, 1024
          %156 = vsyncadd %s149, %s155
          %s157 = smul.addr %s153, 2
          %s158 = smul.addr %s157, 128
          %s159 = scalar_lea.hbm %s0, %s158
          %s160 = sshll.u32 %s152, 4
          %s161 = int_to_ptr.vmem [resolvable:$true] %s160
          %166 = dma.hbm_to_vmem [thread:$0]  %s159, 1024, %s161, %s149, 128, 128, 8
        $region28: #{tpu_custom_call.1} parent=23 // pred_fallthru
          _
      $region24: #{tpu_custom_call.1} parent=5 // pred_fallthru
        _
      %p167 = scmp.le.s32.totalorder 1, %s16
      %p168 = scmp.lt.s32.totalorder %s16, 3
      %p169 = pnand %p167, %p168
      %p170 = pneg %p169
      // Predicated region
      $region29: #{tpu_custom_call.1} parent=5 // pred_check
        _
      $region30: #{tpu_custom_call.1} parent=5 // pred_check_branch
        %172 = sbr.rel (%p169) target = $region32
      $region31: #{tpu_custom_call.1} parent=5 // pred_region
        %s173 = ssub.s32 %s16, 1
        %s174 = sand.u32 %s29, 1
        %s175 = scalar_lea.sflag [#allocation3], %s174
        %s176 = sand.u32 %s29, 1
        %s177 = smul.addr %s176, 64
        %s178 = scalar_lea.vmem [#allocation2], %s177
        // Predicated region
        $region33: #{tpu_custom_call.1} parent=31 // pred_check
          %p179 = pneg %p42
        $region34: #{tpu_custom_call.1} parent=31 // pred_check_branch
          %181 = sbr.rel (%p179) target = $region36
        $region35: #{tpu_custom_call.1} parent=31 // pred_region
          %182 = dma.done %s175, 1024
        $region36: #{tpu_custom_call.1} parent=31 // pred_fallthru
          _
        // Predicated region
        $region37: #{tpu_custom_call.1} parent=31 // pred_check
          %p183 = pneg %p84
        $region38: #{tpu_custom_call.1} parent=31 // pred_check_branch
          %185 = sbr.rel (%p183) target = $region40
        $region39: #{tpu_custom_call.1} parent=31 // pred_region
          %186 = dma.done [#allocation6], 4096
        $region40: #{tpu_custom_call.1} parent=31 // pred_fallthru
          _
        %s187 = sand.u32 %s29, 1
        %s188 = scalar_lea.sflag [#allocation3], %s187
        %s189 = sand.u32 %s29, 1
        %s190 = smul.addr %s189, 64
        %s191 = scalar_lea.vmem [#allocation2], %s190
        %p192 = pneg %p42
        %p193 = pneg %p39
        %p194 = pneg %p63
        %p195 = pneg %p60
        %p196 = pneg %p84
        %p197 = pneg %p81
        %p198 = pneg %p110
        %p199 = pneg %p107
        %s200 = sand.u32 %s97, 1
        %s201 = scalar_lea.sflag [#allocation4], %s200
        %s202 = sand.u32 %s97, 1
        %s203 = smul.addr %s202, 256
        %s204 = scalar_lea.vmem [#allocation7], %s203
        %s205 = smul.u32 4, %s21
        %s206 = smul.u32 4, %s21
        %v207 = vld [vmem:[%s178] sm:$0xff]
        %v208 = vld [vmem:[%s178 + $0x8] sm:$0xff]
        %v209 = vld [vmem:[%s178 + $0x10] sm:$0xff]
        %v210 = vld [vmem:[%s178 + $0x18] sm:$0xff]
        %v211 = vld [vmem:[%s178 + $0x20] sm:$0xff]
        %v212 = vld [vmem:[%s178 + $0x28] sm:$0xff]
        %v213 = vld [vmem:[%s178 + $0x30] sm:$0xff]
        %v214 = vld [vmem:[%s178 + $0x38] sm:$0xff]
        %v215 = vld [vmem:[%s1] sm:$0xff]
        %v216 = vld [vmem:[%s1 + $0x8] sm:$0xff]
        %v217 = vld [vmem:[%s1 + $0x10] sm:$0xff]
        %v218 = vld [vmem:[%s1 + $0x18] sm:$0xff]
        %vm219 = vcmask 130048
        %v221 = vsel %vm219, %v215, 0
        %v224 = vsel %vm219, %v216, 0
        %v227 = vsel %vm219, %v217, 0
        %v230 = vsel %vm219, %v218, 0
        %232 = vmatprep.subr.mxu0 0.0
        %v233 = vand.u32 %v207, 4294901760
        %234 = vmatpush1.msra.mxu0 %v233
        %235 = vmatprep.subr.mxu0 0.0
        %v236 = vand.u32 %v208, 4294901760
        %237 = vmatpush1.msra.mxu0 %v236
        %238 = vmatprep.subr.mxu0 0.0
        %239 = vmatpush1.msra.mxu0 0.0
        %240 = vmatprep.subr.mxu0 0.0
        %241 = vmatpush1.msra.mxu0 0.0
        %242 = vmatprep.subr.mxu0 0.0
        %243 = vmatpush1.msra.mxu0 0.0
        %244 = vmatprep.subr.mxu0 0.0
        %245 = vmatpush1.msra.mxu0 0.0
        %246 = vmatprep.subr.mxu0 0.0
        %247 = vmatpush1.msra.mxu0 0.0
        %248 = vmatprep.subr.mxu0 0.0
        %249 = vmatpush1.msra.mxu0 0.0
        %250 = vmatprep.subr.mxu0 0.0
        %251 = vmatpush1.msra.mxu0 0.0
        %252 = vmatprep.subr.mxu0 0.0
        %253 = vmatpush1.msra.mxu0 0.0
        %254 = vmatprep.subr.mxu0 0.0
        %255 = vmatpush1.msra.mxu0 0.0
        %256 = vmatprep.subr.mxu0 0.0
        %257 = vmatpush1.msra.mxu0 0.0
        %258 = vmatprep.subr.mxu0 0.0
        %259 = vmatpush1.msra.mxu0 0.0
        %260 = vmatprep.subr.mxu0 0.0
        %261 = vmatpush1.msra.mxu0 0.0
        %262 = vmatprep.subr.mxu0 0.0
        %263 = vmatpush1.msra.mxu0 0.0
        %264 = vmatprep.subr.mxu0 0.0
        %265 = vmatpush1.msra.mxu0 0.0
        %266 = vmatprep.subr.mxu0 0.0
        %267 = vmatpush1.msra.mxu0 0.0
        %268 = vmatprep.subr.mxu0 0.0
        %269 = vmatpush1.msra.mxu0 0.0
        %270 = vmatprep.subr.mxu0 0.0
        %271 = vmatpush1.msra.mxu0 0.0
        %272 = vmatprep.subr.mxu0 0.0
        %273 = vmatpush1.msra.mxu0 0.0
        %274 = vmatprep.subr.mxu0 0.0
        %275 = vmatpush1.msra.mxu0 0.0
        %276 = vmatprep.subr.mxu0 0.0
        %277 = vmatpush1.msra.mxu0 0.0
        %278 = vmatprep.subr.mxu0 0.0
        %279 = vmatpush1.msra.mxu0 0.0
        %280 = vmatprep.subr.mxu0 0.0
        %281 = vmatpush1.msra.mxu0 0.0
        %282 = vmatprep.subr.mxu0 0.0
        %283 = vmatpush1.msra.mxu0 0.0
        %284 = vmatprep.subr.mxu0 0.0
        %285 = vmatpush1.msra.mxu0 0.0
        %286 = vmatprep.subr.mxu0 0.0
        %287 = vmatpush1.msra.mxu0 0.0
        %288 = vmatprep.subr.mxu0 0.0
        %289 = vmatpush1.msra.mxu0 0.0
        %290 = vmatprep.subr.mxu0 0.0
        %291 = vmatpush1.msra.mxu0 0.0
        %292 = vmatprep.subr.mxu0 0.0
        %293 = vmatpush1.msra.mxu0 0.0
        %294 = vmatprep.subr.mxu0 0.0
        %295 = vmatpush1.msra.mxu0 0.0
        %296 = vmatprep.subr.mxu0 0.0
        %297 = vmatpush1.msra.mxu0 0.0
        %298 = vmatprep.mubr.f32.mxu0 0.0
        %v299 = vand.u32 %v221, 4294901760
        %v300 = vsub.f32 %v221, %v299
        %v301 = vand.u32 %v300, 4294901760
        %v302 = vsub.f32 %v300, %v301
        %v303 = vand.u32 %v302, 4294901760
        %304 = vmatmul.mubr.f32.gmra.mrb[0].mxu0 %v303
        %v305 = vpop.f32.mrb[0].mxu0
        %v306 = vadd.f32 0.0, %v305
        %v307 = vpop.f32.mrb[0].mxu0
        %308 = vmatprep.mubr.f32.mxu0 0.0
        %v309 = vand.u32 %v224, 4294901760
        %v310 = vsub.f32 %v224, %v309
        %v311 = vand.u32 %v310, 4294901760
        %v312 = vsub.f32 %v310, %v311
        %v313 = vand.u32 %v312, 4294901760
        %314 = vmatmul.mubr.f32.gmra.mrb[0].mxu0 %v313
        %v315 = vpop.f32.mrb[0].mxu0
        %v316 = vadd.f32 0.0, %v315
        %v317 = vpop.f32.mrb[0].mxu0
        %318 = vmatprep.mubr.f32.mxu0 0.0
        %v319 = vand.u32 %v227, 4294901760
        %v320 = vsub.f32 %v227, %v319
        %v321 = vand.u32 %v320, 4294901760
        %v322 = vsub.f32 %v320, %v321
        %v323 = vand.u32 %v322, 4294901760
        %324 = vmatmul.mubr.f32.gmra.mrb[0].mxu0 %v323
        %v325 = vpop.f32.mrb[0].mxu0
        %v326 = vadd.f32 0.0, %v325
        %v327 = vpop.f32.mrb[0].mxu0
        %328 = vmatprep.mubr.f32.mxu0 0.0
        %v329 = vand.u32 %v230, 4294901760
        %v330 = vsub.f32 %v230, %v329
        %v331 = vand.u32 %v330, 4294901760
        %v332 = vsub.f32 %v330, %v331
        %v333 = vand.u32 %v332, 4294901760
        %334 = vmatmul.mubr.f32.gmra.mrb[0].mxu0 %v333
        %v335 = vpop.f32.mrb[0].mxu0
        %v336 = vadd.f32 0.0, %v335
        %v337 = vpop.f32.mrb[0].mxu0
        %338 = vdwg.mxu0
        %339 = vmatprep.subr.mxu0 0.0
        %v340 = vand.u32 %v207, 4294901760
        %v341 = vsub.f32 %v207, %v340
        %v342 = vand.u32 %v341, 4294901760
        %v343 = vsub.f32 %v341, %v342
        %v344 = vand.u32 %v343, 4294901760
        %345 = vmatpush1.msra.mxu0 %v344
        %346 = vmatprep.subr.mxu0 0.0
        %v347 = vand.u32 %v208, 4294901760
        %v348 = vsub.f32 %v208, %v347
        %v349 = vand.u32 %v348, 4294901760
        %v350 = vsub.f32 %v348, %v349
        %v351 = vand.u32 %v350, 4294901760
        %352 = vmatpush1.msra.mxu0 %v351
        %353 = vmatprep.subr.mxu0 0.0
        %354 = vmatpush1.msra.mxu0 0.0
        %355 = vmatprep.subr.mxu0 0.0
        %356 = vmatpush1.msra.mxu0 0.0
        %357 = vmatprep.subr.mxu0 0.0
        %358 = vmatpush1.msra.mxu0 0.0
        %359 = vmatprep.subr.mxu0 0.0
        %360 = vmatpush1.msra.mxu0 0.0
        %361 = vmatprep.subr.mxu0 0.0
        %362 = vmatpush1.msra.mxu0 0.0
        %363 = vmatprep.subr.mxu0 0.0
        %364 = vmatpush1.msra.mxu0 0.0
        %365 = vmatprep.subr.mxu0 0.0
        %366 = vmatpush1.msra.mxu0 0.0
        %367 = vmatprep.subr.mxu0 0.0
        %368 = vmatpush1.msra.mxu0 0.0
        %369 = vmatprep.subr.mxu0 0.0
        %370 = vmatpush1.msra.mxu0 0.0
        %371 = vmatprep.subr.mxu0 0.0
        %372 = vmatpush1.msra.mxu0 0.0
        %373 = vmatprep.subr.mxu0 0.0
        %374 = vmatpush1.msra.mxu0 0.0
        %375 = vmatprep.subr.mxu0 0.0
        %376 = vmatpush1.msra.mxu0 0.0
        %377 = vmatprep.subr.mxu0 0.0
        %378 = vmatpush1.msra.mxu0 0.0
        %379 = vmatprep.subr.mxu0 0.0
        %380 = vmatpush1.msra.mxu0 0.0
        %381 = vmatprep.subr.mxu0 0.0
        %382 = vmatpush1.msra.mxu0 0.0
        %383 = vmatprep.subr.mxu0 0.0
        %384 = vmatpush1.msra.mxu0 0.0
        %385 = vmatprep.subr.mxu0 0.0
        %386 = vmatpush1.msra.mxu0 0.0
        %387 = vmatprep.subr.mxu0 0.0
        %388 = vmatpush1.msra.mxu0 0.0
        %389 = vmatprep.subr.mxu0 0.0
        %390 = vmatpush1.msra.mxu0 0.0
        %391 = vmatprep.subr.mxu0 0.0
        %392 = vmatpush1.msra.mxu0 0.0
        %393 = vmatprep.subr.mxu0 0.0
        %394 = vmatpush1.msra.mxu0 0.0
        %395 = vmatprep.subr.mxu0 0.0
        %396 = vmatpush1.msra.mxu0 0.0
        %397 = vmatprep.subr.mxu0 0.0
        %398 = vmatpush1.msra.mxu0 0.0
        %399 = vmatprep.subr.mxu0 0.0
        %400 = vmatpush1.msra.mxu0 0.0
        %401 = vmatprep.subr.mxu0 0.0
        %402 = vmatpush1.msra.mxu0 0.0
        %403 = vmatprep.subr.mxu0 0.0
        %404 = vmatpush1.msra.mxu0 0.0
        %405 = vmatprep.subr.mxu0 0.0
        %406 = vmatpush1.msra.mxu0 0.0
        %407 = vmatprep.subr.mxu0 0.0
        %408 = vmatpush1.msra.mxu0 0.0
        %409 = vmatprep.subr.mxu0 0.0
        %410 = vmatpush1.msra.mxu0 0.0
        %411 = vmatprep.subr.mxu0 0.0
        %412 = vmatpush1.msra.mxu0 0.0
        %413 = vmatprep.mubr.f32.mxu0 0.0
        %v414 = vand.u32 %v221, 4294901760
        %415 = vmatmul.mubr.f32.gmra.mrb[0].mxu0 %v414
        %v416 = vpop.f32.mrb[0].mxu0
        %v417 = vadd.f32 %v306, %v416
        %v418 = vpop.f32.mrb[0].mxu0
        %419 = vmatprep.mubr.f32.mxu0 0.0
        %v420 = vand.u32 %v224, 4294901760
        %421 = vmatmul.mubr.f32.gmra.mrb[0].mxu0 %v420
        %v422 = vpop.f32.mrb[0].mxu0
        %v423 = vadd.f32 %v316, %v422
        %v424 = vpop.f32.mrb[0].mxu0
        %425 = vmatprep.mubr.f32.mxu0 0.0
        %v426 = vand.u32 %v227, 4294901760
        %427 = vmatmul.mubr.f32.gmra.mrb[0].mxu0 %v426
        %v428 = vpop.f32.mrb[0].mxu0
        %v429 = vadd.f32 %v326, %v428
        %v430 = vpop.f32.mrb[0].mxu0
        %431 = vmatprep.mubr.f32.mxu0 0.0
        %v432 = vand.u32 %v230, 4294901760
        %433 = vmatmul.mubr.f32.gmra.mrb[0].mxu0 %v432
        %v434 = vpop.f32.mrb[0].mxu0
        %v435 = vadd.f32 %v336, %v434
        %v436 = vpop.f32.mrb[0].mxu0
        %437 = vdwg.mxu0
        %438 = vmatprep.subr.mxu0 0.0
        %v439 = vand.u32 %v207, 4294901760
        %v440 = vsub.f32 %v207, %v439
        %441 = vmatpush1.msra.mxu0 %v440
        %442 = vmatprep.subr.mxu0 0.0
        %v443 = vand.u32 %v208, 4294901760
        %v444 = vsub.f32 %v208, %v443
        %445 = vmatpush1.msra.mxu0 %v444
        %446 = vmatprep.subr.mxu0 0.0
        %447 = vmatpush1.msra.mxu0 0.0
        %448 = vmatprep.subr.mxu0 0.0
        %449 = vmatpush1.msra.mxu0 0.0
        %450 = vmatprep.subr.mxu0 0.0
        %451 = vmatpush1.msra.mxu0 0.0
        %452 = vmatprep.subr.mxu0 0.0
        %453 = vmatpush1.msra.mxu0 0.0
        %454 = vmatprep.subr.mxu0 0.0
        %455 = vmatpush1.msra.mxu0 0.0
        %456 = vmatprep.subr.mxu0 0.0
        %457 = vmatpush1.msra.mxu0 0.0
        %458 = vmatprep.subr.mxu0 0.0
        %459 = vmatpush1.msra.mxu0 0.0
        %460 = vmatprep.subr.mxu0 0.0
        %461 = vmatpush1.msra.mxu0 0.0
        %462 = vmatprep.subr.mxu0 0.0
        %463 = vmatpush1.msra.mxu0 0.0
        %464 = vmatprep.subr.mxu0 0.0
        %465 = vmatpush1.msra.mxu0 0.0
        %466 = vmatprep.subr.mxu0 0.0
        %467 = vmatpush1.msra.mxu0 0.0
        %468 = vmatprep.subr.mxu0 0.0
        %469 = vmatpush1.msra.mxu0 0.0
        %470 = vmatprep.subr.mxu0 0.0
        %471 = vmatpush1.msra.mxu0 0.0
        %472 = vmatprep.subr.mxu0 0.0
        %473 = vmatpush1.msra.mxu0 0.0
        %474 = vmatprep.subr.mxu0 0.0
        %475 = vmatpush1.msra.mxu0 0.0
        %476 = vmatprep.subr.mxu0 0.0
        %477 = vmatpush1.msra.mxu0 0.0
        %478 = vmatprep.subr.mxu0 0.0
        %479 = vmatpush1.msra.mxu0 0.0
        %480 = vmatprep.subr.mxu0 0.0
        %481 = vmatpush1.msra.mxu0 0.0
        %482 = vmatprep.subr.mxu0 0.0
        %483 = vmatpush1.msra.mxu0 0.0
        %484 = vmatprep.subr.mxu0 0.0
        %485 = vmatpush1.msra.mxu0 0.0
        %486 = vmatprep.subr.mxu0 0.0
        %487 = vmatpush1.msra.mxu0 0.0
        %488 = vmatprep.subr.mxu0 0.0
        %489 = vmatpush1.msra.mxu0 0.0
        %490 = vmatprep.subr.mxu0 0.0
        %491 = vmatpush1.msra.mxu0 0.0
        %492 = vmatprep.subr.mxu0 0.0
        %493 = vmatpush1.msra.mxu0 0.0
        %494 = vmatprep.subr.mxu0 0.0
        %495 = vmatpush1.msra.mxu0 0.0
        %496 = vmatprep.subr.mxu0 0.0
        %497 = vmatpush1.msra.mxu0 0.0
        %498 = vmatprep.subr.mxu0 0.0
        %499 = vmatpush1.msra.mxu0 0.0
        %500 = vmatprep.subr.mxu0 0.0
        %501 = vmatpush1.msra.mxu0 0.0
        %502 = vmatprep.subr.mxu0 0.0
        %503 = vmatpush1.msra.mxu0 0.0
        %504 = vmatprep.subr.mxu0 0.0
        %505 = vmatpush1.msra.mxu0 0.0
        %506 = vmatprep.mubr.f32.mxu0 0.0
        %v507 = vand.u32 %v221, 4294901760
        %v508 = vsub.f32 %v221, %v507
        %509 = vmatmul.mubr.f32.gmra.mrb[0].mxu0 %v508
        %v510 = vpop.f32.mrb[0].mxu0
        %v511 = vadd.f32 %v417, %v510
        %v512 = vpop.f32.mrb[0].mxu0
        %513 = vmatprep.mubr.f32.mxu0 0.0
        %v514 = vand.u32 %v224, 4294901760
        %v515 = vsub.f32 %v224, %v514
        %516 = vmatmul.mubr.f32.gmra.mrb[0].mxu0 %v515
        %v517 = vpop.f32.mrb[0].mxu0
        %v518 = vadd.f32 %v423, %v517
        %v519 = vpop.f32.mrb[0].mxu0
        %520 = vmatprep.mubr.f32.mxu0 0.0
        %v521 = vand.u32 %v227, 4294901760
        %v522 = vsub.f32 %v227, %v521
        %523 = vmatmul.mubr.f32.gmra.mrb[0].mxu0 %v522
        %v524 = vpop.f32.mrb[0].mxu0
        %v525 = vadd.f32 %v429, %v524
        %v526 = vpop.f32.mrb[0].mxu0
        %527 = vmatprep.mubr.f32.mxu0 0.0
        %v528 = vand.u32 %v230, 4294901760
        %v529 = vsub.f32 %v230, %v528
        %530 = vmatmul.mubr.f32.gmra.mrb[0].mxu0 %v529
        %v531 = vpop.f32.mrb[0].mxu0
        %v532 = vadd.f32 %v435, %v531
        %v533 = vpop.f32.mrb[0].mxu0
        %534 = vdwg.mxu0
        %535 = vmatprep.subr.mxu0 0.0
        %v536 = vand.u32 %v207, 4294901760
        %537 = vmatpush1.msra.mxu0 %v536
        %538 = vmatprep.subr.mxu0 0.0
        %v539 = vand.u32 %v208, 4294901760
        %540 = vmatpush1.msra.mxu0 %v539
        %541 = vmatprep.subr.mxu0 0.0
        %542 = vmatpush1.msra.mxu0 0.0
        %543 = vmatprep.subr.mxu0 0.0
        %544 = vmatpush1.msra.mxu0 0.0
        %545 = vmatprep.subr.mxu0 0.0
        %546 = vmatpush1.msra.mxu0 0.0
        %547 = vmatprep.subr.mxu0 0.0
        %548 = vmatpush1.msra.mxu0 0.0
        %549 = vmatprep.subr.mxu0 0.0
        %550 = vmatpush1.msra.mxu0 0.0
        %551 = vmatprep.subr.mxu0 0.0
        %552 = vmatpush1.msra.mxu0 0.0
        %553 = vmatprep.subr.mxu0 0.0
        %554 = vmatpush1.msra.mxu0 0.0
        %555 = vmatprep.subr.mxu0 0.0
        %556 = vmatpush1.msra.mxu0 0.0
        %557 = vmatprep.subr.mxu0 0.0
        %558 = vmatpush1.msra.mxu0 0.0
        %559 = vmatprep.subr.mxu0 0.0
        %560 = vmatpush1.msra.mxu0 0.0
        %561 = vmatprep.subr.mxu0 0.0
        %562 = vmatpush1.msra.mxu0 0.0
        %563 = vmatprep.subr.mxu0 0.0
        %564 = vmatpush1.msra.mxu0 0.0
        %565 = vmatprep.subr.mxu0 0.0
        %566 = vmatpush1.msra.mxu0 0.0
        %567 = vmatprep.subr.mxu0 0.0
        %568 = vmatpush1.msra.mxu0 0.0
        %569 = vmatprep.subr.mxu0 0.0
        %570 = vmatpush1.msra.mxu0 0.0
        %571 = vmatprep.subr.mxu0 0.0
        %572 = vmatpush1.msra.mxu0 0.0
        %573 = vmatprep.subr.mxu0 0.0
        %574 = vmatpush1.msra.mxu0 0.0
        %575 = vmatprep.subr.mxu0 0.0
        %576 = vmatpush1.msra.mxu0 0.0
        %577 = vmatprep.subr.mxu0 0.0
        %578 = vmatpush1.msra.mxu0 0.0
        %579 = vmatprep.subr.mxu0 0.0
        %580 = vmatpush1.msra.mxu0 0.0
        %581 = vmatprep.subr.mxu0 0.0
        %582 = vmatpush1.msra.mxu0 0.0
        %583 = vmatprep.subr.mxu0 0.0
        %584 = vmatpush1.msra.mxu0 0.0
        %585 = vmatprep.subr.mxu0 0.0
        %586 = vmatpush1.msra.mxu0 0.0
        %587 = vmatprep.subr.mxu0 0.0
        %588 = vmatpush1.msra.mxu0 0.0
        %589 = vmatprep.subr.mxu0 0.0
        %590 = vmatpush1.msra.mxu0 0.0
        %591 = vmatprep.subr.mxu0 0.0
        %592 = vmatpush1.msra.mxu0 0.0
        %593 = vmatprep.subr.mxu0 0.0
        %594 = vmatpush1.msra.mxu0 0.0
        %595 = vmatprep.subr.mxu0 0.0
        %596 = vmatpush1.msra.mxu0 0.0
        %597 = vmatprep.subr.mxu0 0.0
        %598 = vmatpush1.msra.mxu0 0.0
        %599 = vmatprep.subr.mxu0 0.0
        %600 = vmatpush1.msra.mxu0 0.0
        %601 = vmatprep.mubr.f32.mxu0 0.0
        %v602 = vand.u32 %v221, 4294901760
        %v603 = vsub.f32 %v221, %v602
        %v604 = vand.u32 %v603, 4294901760
        %605 = vmatmul.mubr.f32.gmra.mrb[0].mxu0 %v604
        %v606 = vpop.f32.mrb[0].mxu0
        %v607 = vadd.f32 %v511, %v606
        %v608 = vpop.f32.mrb[0].mxu0
        %609 = vmatprep.mubr.f32.mxu0 0.0
        %v610 = vand.u32 %v224, 4294901760
        %v611 = vsub.f32 %v224, %v610
        %v612 = vand.u32 %v611, 4294901760
        %613 = vmatmul.mubr.f32.gmra.mrb[0].mxu0 %v612
        %v614 = vpop.f32.mrb[0].mxu0
        %v615 = vadd.f32 %v518, %v614
        %v616 = vpop.f32.mrb[0].mxu0
        %617 = vmatprep.mubr.f32.mxu0 0.0
        %v618 = vand.u32 %v227, 4294901760
        %v619 = vsub.f32 %v227, %v618
        %v620 = vand.u32 %v619, 4294901760
        %621 = vmatmul.mubr.f32.gmra.mrb[0].mxu0 %v620
        %v622 = vpop.f32.mrb[0].mxu0
        %v623 = vadd.f32 %v525, %v622
        %v624 = vpop.f32.mrb[0].mxu0
        %625 = vmatprep.mubr.f32.mxu0 0.0
        %v626 = vand.u32 %v230, 4294901760
        %v627 = vsub.f32 %v230, %v626
        %v628 = vand.u32 %v627, 4294901760
        %629 = vmatmul.mubr.f32.gmra.mrb[0].mxu0 %v628
        %v630 = vpop.f32.mrb[0].mxu0
        %v631 = vadd.f32 %v532, %v630
        %v632 = vpop.f32.mrb[0].mxu0
        %633 = vdwg.mxu0
        %634 = vmatprep.subr.mxu0 0.0
        %v635 = vand.u32 %v207, 4294901760
        %v636 = vsub.f32 %v207, %v635
        %v637 = vand.u32 %v636, 4294901760
        %638 = vmatpush1.msra.mxu0 %v637
        %639 = vmatprep.subr.mxu0 0.0
        %v640 = vand.u32 %v208, 4294901760
        %v641 = vsub.f32 %v208, %v640
        %v642 = vand.u32 %v641, 4294901760
        %643 = vmatpush1.msra.mxu0 %v642
        %644 = vmatprep.subr.mxu0 0.0
        %645 = vmatpush1.msra.mxu0 0.0
        %646 = vmatprep.subr.mxu0 0.0
        %647 = vmatpush1.msra.mxu0 0.0
        %648 = vmatprep.subr.mxu0 0.0
        %649 = vmatpush1.msra.mxu0 0.0
        %650 = vmatprep.subr.mxu0 0.0
        %651 = vmatpush1.msra.mxu0 0.0
        %652 = vmatprep.subr.mxu0 0.0
        %653 = vmatpush1.msra.mxu0 0.0
        %654 = vmatprep.subr.mxu0 0.0
        %655 = vmatpush1.msra.mxu0 0.0
        %656 = vmatprep.subr.mxu0 0.0
        %657 = vmatpush1.msra.mxu0 0.0
        %658 = vmatprep.subr.mxu0 0.0
        %659 = vmatpush1.msra.mxu0 0.0
        %660 = vmatprep.subr.mxu0 0.0
        %661 = vmatpush1.msra.mxu0 0.0
        %662 = vmatprep.subr.mxu0 0.0
        %663 = vmatpush1.msra.mxu0 0.0
        %664 = vmatprep.subr.mxu0 0.0
        %665 = vmatpush1.msra.mxu0 0.0
        %666 = vmatprep.subr.mxu0 0.0
        %667 = vmatpush1.msra.mxu0 0.0
        %668 = vmatprep.subr.mxu0 0.0
        %669 = vmatpush1.msra.mxu0 0.0
        %670 = vmatprep.subr.mxu0 0.0
        %671 = vmatpush1.msra.mxu0 0.0
        %672 = vmatprep.subr.mxu0 0.0
        %673 = vmatpush1.msra.mxu0 0.0
        %674 = vmatprep.subr.mxu0 0.0
        %675 = vmatpush1.msra.mxu0 0.0
        %676 = vmatprep.subr.mxu0 0.0
        %677 = vmatpush1.msra.mxu0 0.0
        %678 = vmatprep.subr.mxu0 0.0
        %679 = vmatpush1.msra.mxu0 0.0
        %680 = vmatprep.subr.mxu0 0.0
        %681 = vmatpush1.msra.mxu0 0.0
        %682 = vmatprep.subr.mxu0 0.0
        %683 = vmatpush1.msra.mxu0 0.0
        %684 = vmatprep.subr.mxu0 0.0
        %685 = vmatpush1.msra.mxu0 0.0
        %686 = vmatprep.subr.mxu0 0.0
        %687 = vmatpush1.msra.mxu0 0.0
        %688 = vmatprep.subr.mxu0 0.0
        %689 = vmatpush1.msra.mxu0 0.0
        %690 = vmatprep.subr.mxu0 0.0
        %691 = vmatpush1.msra.mxu0 0.0
        %692 = vmatprep.subr.mxu0 0.0
        %693 = vmatpush1.msra.mxu0 0.0
        %694 = vmatprep.subr.mxu0 0.0
        %695 = vmatpush1.msra.mxu0 0.0
        %696 = vmatprep.subr.mxu0 0.0
        %697 = vmatpush1.msra.mxu0 0.0
        %698 = vmatprep.subr.mxu0 0.0
        %699 = vmatpush1.msra.mxu0 0.0
        %700 = vmatprep.subr.mxu0 0.0
        %701 = vmatpush1.msra.mxu0 0.0
        %702 = vmatprep.subr.mxu0 0.0
        %703 = vmatpush1.msra.mxu0 0.0
        %704 = vmatprep.mubr.f32.mxu0 0.0
        %v705 = vand.u32 %v221, 4294901760
        %706 = vmatmul.mubr.f32.gmra.mrb[0].mxu0 %v705
        %v707 = vpop.f32.mrb[0].mxu0
        %v708 = vadd.f32 %v607, %v707
        %v709 = vpop.f32.mrb[0].mxu0
        %710 = vmatprep.mubr.f32.mxu0 0.0
        %v711 = vand.u32 %v224, 4294901760
        %712 = vmatmul.mubr.f32.gmra.mrb[0].mxu0 %v711
        %v713 = vpop.f32.mrb[0].mxu0
        %v714 = vadd.f32 %v615, %v713
        %v715 = vpop.f32.mrb[0].mxu0
        %716 = vmatprep.mubr.f32.mxu0 0.0
        %v717 = vand.u32 %v227, 4294901760
        %718 = vmatmul.mubr.f32.gmra.mrb[0].mxu0 %v717
        %v719 = vpop.f32.mrb[0].mxu0
        %v720 = vadd.f32 %v623, %v719
        %v721 = vpop.f32.mrb[0].mxu0
        %722 = vmatprep.mubr.f32.mxu0 0.0
        %v723 = vand.u32 %v230, 4294901760
        %724 = vmatmul.mubr.f32.gmra.mrb[0].mxu0 %v723
        %v725 = vpop.f32.mrb[0].mxu0
        %v726 = vadd.f32 %v631, %v725
        %v727 = vpop.f32.mrb[0].mxu0
        %728 = vdwg.mxu0
        %729 = vmatprep.subr.mxu0 0.0
        %v730 = vand.u32 %v207, 4294901760
        %731 = vmatpush1.msra.mxu0 %v730
        %732 = vmatprep.subr.mxu0 0.0
        %v733 = vand.u32 %v208, 4294901760
        %734 = vmatpush1.msra.mxu0 %v733
        %735 = vmatprep.subr.mxu0 0.0
        %736 = vmatpush1.msra.mxu0 0.0
        %737 = vmatprep.subr.mxu0 0.0
        %738 = vmatpush1.msra.mxu0 0.0
        %739 = vmatprep.subr.mxu0 0.0
        %740 = vmatpush1.msra.mxu0 0.0
        %741 = vmatprep.subr.mxu0 0.0
        %742 = vmatpush1.msra.mxu0 0.0
        %743 = vmatprep.subr.mxu0 0.0
        %744 = vmatpush1.msra.mxu0 0.0
        %745 = vmatprep.subr.mxu0 0.0
        %746 = vmatpush1.msra.mxu0 0.0
        %747 = vmatprep.subr.mxu0 0.0
        %748 = vmatpush1.msra.mxu0 0.0
        %749 = vmatprep.subr.mxu0 0.0
        %750 = vmatpush1.msra.mxu0 0.0
        %751 = vmatprep.subr.mxu0 0.0
        %752 = vmatpush1.msra.mxu0 0.0
        %753 = vmatprep.subr.mxu0 0.0
        %754 = vmatpush1.msra.mxu0 0.0
        %755 = vmatprep.subr.mxu0 0.0
        %756 = vmatpush1.msra.mxu0 0.0
        %757 = vmatprep.subr.mxu0 0.0
        %758 = vmatpush1.msra.mxu0 0.0
        %759 = vmatprep.subr.mxu0 0.0
        %760 = vmatpush1.msra.mxu0 0.0
        %761 = vmatprep.subr.mxu0 0.0
        %762 = vmatpush1.msra.mxu0 0.0
        %763 = vmatprep.subr.mxu0 0.0
        %764 = vmatpush1.msra.mxu0 0.0
        %765 = vmatprep.subr.mxu0 0.0
        %766 = vmatpush1.msra.mxu0 0.0
        %767 = vmatprep.subr.mxu0 0.0
        %768 = vmatpush1.msra.mxu0 0.0
        %769 = vmatprep.subr.mxu0 0.0
        %770 = vmatpush1.msra.mxu0 0.0
        %771 = vmatprep.subr.mxu0 0.0
        %772 = vmatpush1.msra.mxu0 0.0
        %773 = vmatprep.subr.mxu0 0.0
        %774 = vmatpush1.msra.mxu0 0.0
        %775 = vmatprep.subr.mxu0 0.0
        %776 = vmatpush1.msra.mxu0 0.0
        %777 = vmatprep.subr.mxu0 0.0
        %778 = vmatpush1.msra.mxu0 0.0
        %779 = vmatprep.subr.mxu0 0.0
        %780 = vmatpush1.msra.mxu0 0.0
        %781 = vmatprep.subr.mxu0 0.0
        %782 = vmatpush1.msra.mxu0 0.0
        %783 = vmatprep.subr.mxu0 0.0
        %784 = vmatpush1.msra.mxu0 0.0
        %785 = vmatprep.subr.mxu0 0.0
        %786 = vmatpush1.msra.mxu0 0.0
        %787 = vmatprep.subr.mxu0 0.0
        %788 = vmatpush1.msra.mxu0 0.0
        %789 = vmatprep.subr.mxu0 0.0
        %790 = vmatpush1.msra.mxu0 0.0
        %791 = vmatprep.subr.mxu0 0.0
        %792 = vmatpush1.msra.mxu0 0.0
        %793 = vmatprep.subr.mxu0 0.0
        %794 = vmatpush1.msra.mxu0 0.0
        %795 = vmatprep.mubr.f32.mxu0 0.0
        %v796 = vand.u32 %v221, 4294901760
        %797 = vmatmul.mubr.f32.gmra.mrb[0].mxu0 %v796
        %v798 = vpop.f32.mrb[0].mxu0
        %v799 = vadd.f32 %v708, %v798
        %v800 = vpop.f32.mrb[0].mxu0
        %801 = vmatprep.mubr.f32.mxu0 0.0
        %v802 = vand.u32 %v224, 4294901760
        %803 = vmatmul.mubr.f32.gmra.mrb[0].mxu0 %v802
        %v804 = vpop.f32.mrb[0].mxu0
        %v805 = vadd.f32 %v714, %v804
        %v806 = vpop.f32.mrb[0].mxu0
        %807 = vmatprep.mubr.f32.mxu0 0.0
        %v808 = vand.u32 %v227, 4294901760
        %809 = vmatmul.mubr.f32.gmra.mrb[0].mxu0 %v808
        %v810 = vpop.f32.mrb[0].mxu0
        %v811 = vadd.f32 %v720, %v810
        %v812 = vpop.f32.mrb[0].mxu0
        %813 = vmatprep.mubr.f32.mxu0 0.0
        %v814 = vand.u32 %v230, 4294901760
        %815 = vmatmul.mubr.f32.gmra.mrb[0].mxu0 %v814
        %v816 = vpop.f32.mrb[0].mxu0
        %v817 = vadd.f32 %v726, %v816
        %v818 = vpop.f32.mrb[0].mxu0
        %819 = vdwg.mxu0
        %820 = vmatprep.subr.mxu0 0.0
        %v821 = vand.u32 %v209, 4294901760
        %822 = vmatpush1.msra.mxu0 %v821
        %823 = vmatprep.subr.mxu0 0.0
        %v824 = vand.u32 %v210, 4294901760
        %825 = vmatpush1.msra.mxu0 %v824
        %826 = vmatprep.subr.mxu0 0.0
        %827 = vmatpush1.msra.mxu0 0.0
        %828 = vmatprep.subr.mxu0 0.0
        %829 = vmatpush1.msra.mxu0 0.0
        %830 = vmatprep.subr.mxu0 0.0
        %831 = vmatpush1.msra.mxu0 0.0
        %832 = vmatprep.subr.mxu0 0.0
        %833 = vmatpush1.msra.mxu0 0.0
        %834 = vmatprep.subr.mxu0 0.0
        %835 = vmatpush1.msra.mxu0 0.0
        %836 = vmatprep.subr.mxu0 0.0
        %837 = vmatpush1.msra.mxu0 0.0
        %838 = vmatprep.subr.mxu0 0.0
        %839 = vmatpush1.msra.mxu0 0.0
        %840 = vmatprep.subr.mxu0 0.0
        %841 = vmatpush1.msra.mxu0 0.0
        %842 = vmatprep.subr.mxu0 0.0
        %843 = vmatpush1.msra.mxu0 0.0
        %844 = vmatprep.subr.mxu0 0.0
        %845 = vmatpush1.msra.mxu0 0.0
        %846 = vmatprep.subr.mxu0 0.0
        %847 = vmatpush1.msra.mxu0 0.0
        %848 = vmatprep.subr.mxu0 0.0
        %849 = vmatpush1.msra.mxu0 0.0
        %850 = vmatprep.subr.mxu0 0.0
        %851 = vmatpush1.msra.mxu0 0.0
        %852 = vmatprep.subr.mxu0 0.0
        %853 = vmatpush1.msra.mxu0 0.0
        %854 = vmatprep.subr.mxu0 0.0
        %855 = vmatpush1.msra.mxu0 0.0
        %856 = vmatprep.subr.mxu0 0.0
        %857 = vmatpush1.msra.mxu0 0.0
        %858 = vmatprep.subr.mxu0 0.0
        %859 = vmatpush1.msra.mxu0 0.0
        %860 = vmatprep.subr.mxu0 0.0
        %861 = vmatpush1.msra.mxu0 0.0
        %862 = vmatprep.subr.mxu0 0.0
        %863 = vmatpush1.msra.mxu0 0.0
        %864 = vmatprep.subr.mxu0 0.0
        %865 = vmatpush1.msra.mxu0 0.0
        %866 = vmatprep.subr.mxu0 0.0
        %867 = vmatpush1.msra.mxu0 0.0
        %868 = vmatprep.subr.mxu0 0.0
        %869 = vmatpush1.msra.mxu0 0.0
        %870 = vmatprep.subr.mxu0 0.0
        %871 = vmatpush1.msra.mxu0 0.0
        %872 = vmatprep.subr.mxu0 0.0
        %873 = vmatpush1.msra.mxu0 0.0
        %874 = vmatprep.subr.mxu0 0.0
        %875 = vmatpush1.msra.mxu0 0.0
        %876 = vmatprep.subr.mxu0 0.0
        %877 = vmatpush1.msra.mxu0 0.0
        %878 = vmatprep.subr.mxu0 0.0
        %879 = vmatpush1.msra.mxu0 0.0
        %880 = vmatprep.subr.mxu0 0.0
        %881 = vmatpush1.msra.mxu0 0.0
        %882 = vmatprep.subr.mxu0 0.0
        %883 = vmatpush1.msra.mxu0 0.0
        %884 = vmatprep.subr.mxu0 0.0
        %885 = vmatpush1.msra.mxu0 0.0
        %886 = vmatprep.mubr.f32.mxu0 0.0
        %v887 = vand.u32 %v221, 4294901760
        %v888 = vsub.f32 %v221, %v887
        %v889 = vand.u32 %v888, 4294901760
        %v890 = vsub.f32 %v888, %v889
        %v891 = vand.u32 %v890, 4294901760
        %892 = vmatmul.mubr.f32.gmra.mrb[0].mxu0 %v891
        %v893 = vpop.f32.mrb[0].mxu0
        %v894 = vadd.f32 0.0, %v893
        %v895 = vpop.f32.mrb[0].mxu0
        %896 = vmatprep.mubr.f32.mxu0 0.0
        %v897 = vand.u32 %v224, 4294901760
        %v898 = vsub.f32 %v224, %v897
        %v899 = vand.u32 %v898, 4294901760
        %v900 = vsub.f32 %v898, %v899
        %v901 = vand.u32 %v900, 4294901760
        %902 = vmatmul.mubr.f32.gmra.mrb[0].mxu0 %v901
        %v903 = vpop.f32.mrb[0].mxu0
        %v904 = vadd.f32 0.0, %v903
        %v905 = vpop.f32.mrb[0].mxu0
        %906 = vmatprep.mubr.f32.mxu0 0.0
        %v907 = vand.u32 %v227, 4294901760
        %v908 = vsub.f32 %v227, %v907
        %v909 = vand.u32 %v908, 4294901760
        %v910 = vsub.f32 %v908, %v909
        %v911 = vand.u32 %v910, 4294901760
        %912 = vmatmul.mubr.f32.gmra.mrb[0].mxu0 %v911
        %v913 = vpop.f32.mrb[0].mxu0
        %v914 = vadd.f32 0.0, %v913
        %v915 = vpop.f32.mrb[0].mxu0
        %916 = vmatprep.mubr.f32.mxu0 0.0
        %v917 = vand.u32 %v230, 4294901760
        %v918 = vsub.f32 %v230, %v917
        %v919 = vand.u32 %v918, 4294901760
        %v920 = vsub.f32 %v918, %v919
        %v921 = vand.u32 %v920, 4294901760
        %922 = vmatmul.mubr.f32.gmra.mrb[0].mxu0 %v921
        %v923 = vpop.f32.mrb[0].mxu0
        %v924 = vadd.f32 0.0, %v923
        %v925 = vpop.f32.mrb[0].mxu0
        %926 = vdwg.mxu0
        %927 = vmatprep.subr.mxu0 0.0
        %v928 = vand.u32 %v209, 4294901760
        %v929 = vsub.f32 %v209, %v928
        %v930 = vand.u32 %v929, 4294901760
        %v931 = vsub.f32 %v929, %v930
        %v932 = vand.u32 %v931, 4294901760
        %933 = vmatpush1.msra.mxu0 %v932
        %934 = vmatprep.subr.mxu0 0.0
        %v935 = vand.u32 %v210, 4294901760
        %v936 = vsub.f32 %v210, %v935
        %v937 = vand.u32 %v936, 4294901760
        %v938 = vsub.f32 %v936, %v937
        %v939 = vand.u32 %v938, 4294901760
        %940 = vmatpush1.msra.mxu0 %v939
        %941 = vmatprep.subr.mxu0 0.0
        %942 = vmatpush1.msra.mxu0 0.0
        %943 = vmatprep.subr.mxu0 0.0
        %944 = vmatpush1.msra.mxu0 0.0
        %945 = vmatprep.subr.mxu0 0.0
        %946 = vmatpush1.msra.mxu0 0.0
        %947 = vmatprep.subr.mxu0 0.0
        %948 = vmatpush1.msra.mxu0 0.0
        %949 = vmatprep.subr.mxu0 0.0
        %950 = vmatpush1.msra.mxu0 0.0
        %951 = vmatprep.subr.mxu0 0.0
        %952 = vmatpush1.msra.mxu0 0.0
        %953 = vmatprep.subr.mxu0 0.0
        %954 = vmatpush1.msra.mxu0 0.0
        %955 = vmatprep.subr.mxu0 0.0
        %956 = vmatpush1.msra.mxu0 0.0
        %957 = vmatprep.subr.mxu0 0.0
        %958 = vmatpush1.msra.mxu0 0.0
        %959 = vmatprep.subr.mxu0 0.0
        %960 = vmatpush1.msra.mxu0 0.0
        %961 = vmatprep.subr.mxu0 0.0
        %962 = vmatpush1.msra.mxu0 0.0
        %963 = vmatprep.subr.mxu0 0.0
        %964 = vmatpush1.msra.mxu0 0.0
        %965 = vmatprep.subr.mxu0 0.0
        %966 = vmatpush1.msra.mxu0 0.0
        %967 = vmatprep.subr.mxu0 0.0
        %968 = vmatpush1.msra.mxu0 0.0
        %969 = vmatprep.subr.mxu0 0.0
        %970 = vmatpush1.msra.mxu0 0.0
        %971 = vmatprep.subr.mxu0 0.0
        %972 = vmatpush1.msra.mxu0 0.0
        %973 = vmatprep.subr.mxu0 0.0
        %974 = vmatpush1.msra.mxu0 0.0
        %975 = vmatprep.subr.mxu0 0.0
        %976 = vmatpush1.msra.mxu0 0.0
        %977 = vmatprep.subr.mxu0 0.0
        %978 = vmatpush1.msra.mxu0 0.0
        %979 = vmatprep.subr.mxu0 0.0
        %980 = vmatpush1.msra.mxu0 0.0
        %981 = vmatprep.subr.mxu0 0.0
        %982 = vmatpush1.msra.mxu0 0.0
        %983 = vmatprep.subr.mxu0 0.0
        %984 = vmatpush1.msra.mxu0 0.0
        %985 = vmatprep.subr.mxu0 0.0
        %986 = vmatpush1.msra.mxu0 0.0
        %987 = vmatprep.subr.mxu0 0.0
        %988 = vmatpush1.msra.mxu0 0.0
        %989 = vmatprep.subr.mxu0 0.0
        %990 = vmatpush1.msra.mxu0 0.0
        %991 = vmatprep.subr.mxu0 0.0
        %992 = vmatpush1.msra.mxu0 0.0
        %993 = vmatprep.subr.mxu0 0.0
        %994 = vmatpush1.msra.mxu0 0.0
        %995 = vmatprep.subr.mxu0 0.0
        %996 = vmatpush1.msra.mxu0 0.0
        %997 = vmatprep.subr.mxu0 0.0
        %998 = vmatpush1.msra.mxu0 0.0
        %999 = vmatprep.subr.mxu0 0.0
        %1000 = vmatpush1.msra.mxu0 0.0
        %1001 = vmatprep.mubr.f32.mxu0 0.0
        %v1002 = vand.u32 %v221, 4294901760
        %1003 = vmatmul.mubr.f32.gmra.mrb[0].mxu0 %v1002
        %v1004 = vpop.f32.mrb[0].mxu0
        %v1005 = vadd.f32 %v894, %v1004
        %v1006 = vpop.f32.mrb[0].mxu0
        %1007 = vmatprep.mubr.f32.mxu0 0.0
        %v1008 = vand.u32 %v224, 4294901760
        %1009 = vmatmul.mubr.f32.gmra.mrb[0].mxu0 %v1008
        %v1010 = vpop.f32.mrb[0].mxu0
        %v1011 = vadd.f32 %v904, %v1010
        %v1012 = vpop.f32.mrb[0].mxu0
        %1013 = vmatprep.mubr.f32.mxu0 0.0
        %v1014 = vand.u32 %v227, 4294901760
        %1015 = vmatmul.mubr.f32.gmra.mrb[0].mxu0 %v1014
        %v1016 = vpop.f32.mrb[0].mxu0
        %v1017 = vadd.f32 %v914, %v1016
        %v1018 = vpop.f32.mrb[0].mxu0
        %1019 = vmatprep.mubr.f32.mxu0 0.0
        %v1020 = vand.u32 %v230, 4294901760
        %1021 = vmatmul.mubr.f32.gmra.mrb[0].mxu0 %v1020
        %v1022 = vpop.f32.mrb[0].mxu0
        %v1023 = vadd.f32 %v924, %v1022
        %v1024 = vpop.f32.mrb[0].mxu0
        %1025 = vdwg.mxu0
        %1026 = vmatprep.subr.mxu0 0.0
        %v1027 = vand.u32 %v209, 4294901760
        %v1028 = vsub.f32 %v209, %v1027
        %1029 = vmatpush1.msra.mxu0 %v1028
        %1030 = vmatprep.subr.mxu0 0.0
        %v1031 = vand.u32 %v210, 4294901760
        %v1032 = vsub.f32 %v210, %v1031
        %1033 = vmatpush1.msra.mxu0 %v1032
        %1034 = vmatprep.subr.mxu0 0.0
        %1035 = vmatpush1.msra.mxu0 0.0
        %1036 = vmatprep.subr.mxu0 0.0
        %1037 = vmatpush1.msra.mxu0 0.0
        %1038 = vmatprep.subr.mxu0 0.0
        %1039 = vmatpush1.msra.mxu0 0.0
        %1040 = vmatprep.subr.mxu0 0.0
        %1041 = vmatpush1.msra.mxu0 0.0
        %1042 = vmatprep.subr.mxu0 0.0
        %1043 = vmatpush1.msra.mxu0 0.0
        %1044 = vmatprep.subr.mxu0 0.0
        %1045 = vmatpush1.msra.mxu0 0.0
        %1046 = vmatprep.subr.mxu0 0.0
        %1047 = vmatpush1.msra.mxu0 0.0
        %1048 = vmatprep.subr.mxu0 0.0
        %1049 = vmatpush1.msra.mxu0 0.0
        %1050 = vmatprep.subr.mxu0 0.0
        %1051 = vmatpush1.msra.mxu0 0.0
        %1052 = vmatprep.subr.mxu0 0.0
        %1053 = vmatpush1.msra.mxu0 0.0
        %1054 = vmatprep.subr.mxu0 0.0
        %1055 = vmatpush1.msra.mxu0 0.0
        %1056 = vmatprep.subr.mxu0 0.0
        %1057 = vmatpush1.msra.mxu0 0.0
        %1058 = vmatprep.subr.mxu0 0.0
        %1059 = vmatpush1.msra.mxu0 0.0
        %1060 = vmatprep.subr.mxu0 0.0
        %1061 = vmatpush1.msra.mxu0 0.0
        %1062 = vmatprep.subr.mxu0 0.0
        %1063 = vmatpush1.msra.mxu0 0.0
        %1064 = vmatprep.subr.mxu0 0.0
        %1065 = vmatpush1.msra.mxu0 0.0
        %1066 = vmatprep.subr.mxu0 0.0
        %1067 = vmatpush1.msra.mxu0 0.0
        %1068 = vmatprep.subr.mxu0 0.0
        %1069 = vmatpush1.msra.mxu0 0.0
        %1070 = vmatprep.subr.mxu0 0.0
        %1071 = vmatpush1.msra.mxu0 0.0
        %1072 = vmatprep.subr.mxu0 0.0
        %1073 = vmatpush1.msra.mxu0 0.0
        %1074 = vmatprep.subr.mxu0 0.0
        %1075 = vmatpush1.msra.mxu0 0.0
        %1076 = vmatprep.subr.mxu0 0.0
        %1077 = vmatpush1.msra.mxu0 0.0
        %1078 = vmatprep.subr.mxu0 0.0
        %1079 = vmatpush1.msra.mxu0 0.0
        %1080 = vmatprep.subr.mxu0 0.0
        %1081 = vmatpush1.msra.mxu0 0.0
        %1082 = vmatprep.subr.mxu0 0.0
        %1083 = vmatpush1.msra.mxu0 0.0
        %1084 = vmatprep.subr.mxu0 0.0
        %1085 = vmatpush1.msra.mxu0 0.0
        %1086 = vmatprep.subr.mxu0 0.0
        %1087 = vmatpush1.msra.mxu0 0.0
        %1088 = vmatprep.subr.mxu0 0.0
        %1089 = vmatpush1.msra.mxu0 0.0
        %1090 = vmatprep.subr.mxu0 0.0
        %1091 = vmatpush1.msra.mxu0 0.0
        %1092 = vmatprep.subr.mxu0 0.0
        %1093 = vmatpush1.msra.mxu0 0.0
        %1094 = vmatprep.mubr.f32.mxu0 0.0
        %v1095 = vand.u32 %v221, 4294901760
        %v1096 = vsub.f32 %v221, %v1095
        %1097 = vmatmul.mubr.f32.gmra.mrb[0].mxu0 %v1096
        %v1098 = vpop.f32.mrb[0].mxu0
        %v1099 = vadd.f32 %v1005, %v1098
        %v1100 = vpop.f32.mrb[0].mxu0
        %1101 = vmatprep.mubr.f32.mxu0 0.0
        %v1102 = vand.u32 %v224, 4294901760
        %v1103 = vsub.f32 %v224, %v1102
        %1104 = vmatmul.mubr.f32.gmra.mrb[0].mxu0 %v1103
        %v1105 = vpop.f32.mrb[0].mxu0
        %v1106 = vadd.f32 %v1011, %v1105
        %v1107 = vpop.f32.mrb[0].mxu0
        %1108 = vmatprep.mubr.f32.mxu0 0.0
        %v1109 = vand.u32 %v227, 4294901760
        %v1110 = vsub.f32 %v227, %v1109
        %1111 = vmatmul.mubr.f32.gmra.mrb[0].mxu0 %v1110
        %v1112 = vpop.f32.mrb[0].mxu0
        %v1113 = vadd.f32 %v1017, %v1112
        %v1114 = vpop.f32.mrb[0].mxu0
        %1115 = vmatprep.mubr.f32.mxu0 0.0
        %v1116 = vand.u32 %v230, 4294901760
        %v1117 = vsub.f32 %v230, %v1116
        %1118 = vmatmul.mubr.f32.gmra.mrb[0].mxu0 %v1117
        %v1119 = vpop.f32.mrb[0].mxu0
        %v1120 = vadd.f32 %v1023, %v1119
        %v1121 = vpop.f32.mrb[0].mxu0
        %1122 = vdwg.mxu0
        %1123 = vmatprep.subr.mxu0 0.0
        %v1124 = vand.u32 %v209, 4294901760
        %1125 = vmatpush1.msra.mxu0 %v1124
        %1126 = vmatprep.subr.mxu0 0.0
        %v1127 = vand.u32 %v210, 4294901760
        %1128 = vmatpush1.msra.mxu0 %v1127
        %1129 = vmatprep.subr.mxu0 0.0
        %1130 = vmatpush1.msra.mxu0 0.0
        %1131 = vmatprep.subr.mxu0 0.0
        %1132 = vmatpush1.msra.mxu0 0.0
        %1133 = vmatprep.subr.mxu0 0.0
        %1134 = vmatpush1.msra.mxu0 0.0
        %1135 = vmatprep.subr.mxu0 0.0
        %1136 = vmatpush1.msra.mxu0 0.0
        %1137 = vmatprep.subr.mxu0 0.0
        %1138 = vmatpush1.msra.mxu0 0.0
        %1139 = vmatprep.subr.mxu0 0.0
        %1140 = vmatpush1.msra.mxu0 0.0
        %1141 = vmatprep.subr.mxu0 0.0
        %1142 = vmatpush1.msra.mxu0 0.0
        %1143 = vmatprep.subr.mxu0 0.0
        %1144 = vmatpush1.msra.mxu0 0.0
        %1145 = vmatprep.subr.mxu0 0.0
        %1146 = vmatpush1.msra.mxu0 0.0
        %1147 = vmatprep.subr.mxu0 0.0
        %1148 = vmatpush1.msra.mxu0 0.0
        %1149 = vmatprep.subr.mxu0 0.0
        %1150 = vmatpush1.msra.mxu0 0.0
        %1151 = vmatprep.subr.mxu0 0.0
        %1152 = vmatpush1.msra.mxu0 0.0
        %1153 = vmatprep.subr.mxu0 0.0
        %1154 = vmatpush1.msra.mxu0 0.0
        %1155 = vmatprep.subr.mxu0 0.0
        %1156 = vmatpush1.msra.mxu0 0.0
        %1157 = vmatprep.subr.mxu0 0.0
        %1158 = vmatpush1.msra.mxu0 0.0
        %1159 = vmatprep.subr.mxu0 0.0
        %1160 = vmatpush1.msra.mxu0 0.0
        %1161 = vmatprep.subr.mxu0 0.0
        %1162 = vmatpush1.msra.mxu0 0.0
        %1163 = vmatprep.subr.mxu0 0.0
        %1164 = vmatpush1.msra.mxu0 0.0
        %1165 = vmatprep.subr.mxu0 0.0
        %1166 = vmatpush1.msra.mxu0 0.0
        %1167 = vmatprep.subr.mxu0 0.0
        %1168 = vmatpush1.msra.mxu0 0.0
        %1169 = vmatprep.subr.mxu0 0.0
        %1170 = vmatpush1.msra.mxu0 0.0
        %1171 = vmatprep.subr.mxu0 0.0
        %1172 = vmatpush1.msra.mxu0 0.0
        %1173 = vmatprep.subr.mxu0 0.0
        %1174 = vmatpush1.msra.mxu0 0.0
        %1175 = vmatprep.subr.mxu0 0.0
        %1176 = vmatpush1.msra.mxu0 0.0
        %1177 = vmatprep.subr.mxu0 0.0
        %1178 = vmatpush1.msra.mxu0 0.0
        %1179 = vmatprep.subr.mxu0 0.0
        %1180 = vmatpush1.msra.mxu0 0.0
        %1181 = vmatprep.subr.mxu0 0.0
        %1182 = vmatpush1.msra.mxu0 0.0
        %1183 = vmatprep.subr.mxu0 0.0
        %1184 = vmatpush1.msra.mxu0 0.0
        %1185 = vmatprep.subr.mxu0 0.0
        %1186 = vmatpush1.msra.mxu0 0.0
        %1187 = vmatprep.subr.mxu0 0.0
        %1188 = vmatpush1.msra.mxu0 0.0
        %1189 = vmatprep.mubr.f32.mxu0 0.0
        %v1190 = vand.u32 %v221, 4294901760
        %v1191 = vsub.f32 %v221, %v1190
        %v1192 = vand.u32 %v1191, 4294901760
        %1193 = vmatmul.mubr.f32.gmra.mrb[0].mxu0 %v1192
        %v1194 = vpop.f32.mrb[0].mxu0
        %v1195 = vadd.f32 %v1099, %v1194
        %v1196 = vpop.f32.mrb[0].mxu0
        %1197 = vmatprep.mubr.f32.mxu0 0.0
        %v1198 = vand.u32 %v224, 4294901760
        %v1199 = vsub.f32 %v224, %v1198
        %v1200 = vand.u32 %v1199, 4294901760
        %1201 = vmatmul.mubr.f32.gmra.mrb[0].mxu0 %v1200
        %v1202 = vpop.f32.mrb[0].mxu0
        %v1203 = vadd.f32 %v1106, %v1202
        %v1204 = vpop.f32.mrb[0].mxu0
        %1205 = vmatprep.mubr.f32.mxu0 0.0
        %v1206 = vand.u32 %v227, 4294901760
        %v1207 = vsub.f32 %v227, %v1206
        %v1208 = vand.u32 %v1207, 4294901760
        %1209 = vmatmul.mubr.f32.gmra.mrb[0].mxu0 %v1208
        %v1210 = vpop.f32.mrb[0].mxu0
        %v1211 = vadd.f32 %v1113, %v1210
        %v1212 = vpop.f32.mrb[0].mxu0
        %1213 = vmatprep.mubr.f32.mxu0 0.0
        %v1214 = vand.u32 %v230, 4294901760
        %v1215 = vsub.f32 %v230, %v1214
        %v1216 = vand.u32 %v1215, 4294901760
        %1217 = vmatmul.mubr.f32.gmra.mrb[0].mxu0 %v1216
        %v1218 = vpop.f32.mrb[0].mxu0
        %v1219 = vadd.f32 %v1120, %v1218
        %v1220 = vpop.f32.mrb[0].mxu0
        %1221 = vdwg.mxu0
        %1222 = vmatprep.subr.mxu0 0.0
        %v1223 = vand.u32 %v209, 4294901760
        %v1224 = vsub.f32 %v209, %v1223
        %v1225 = vand.u32 %v1224, 4294901760
        %1226 = vmatpush1.msra.mxu0 %v1225
        %1227 = vmatprep.subr.mxu0 0.0
        %v1228 = vand.u32 %v210, 4294901760
        %v1229 = vsub.f32 %v210, %v1228
        %v1230 = vand.u32 %v1229, 4294901760
        %1231 = vmatpush1.msra.mxu0 %v1230
        %1232 = vmatprep.subr.mxu0 0.0
        %1233 = vmatpush1.msra.mxu0 0.0
        %1234 = vmatprep.subr.mxu0 0.0
        %1235 = vmatpush1.msra.mxu0 0.0
        %1236 = vmatprep.subr.mxu0 0.0
        %1237 = vmatpush1.msra.mxu0 0.0
        %1238 = vmatprep.subr.mxu0 0.0
        %1239 = vmatpush1.msra.mxu0 0.0
        %1240 = vmatprep.subr.mxu0 0.0
        %1241 = vmatpush1.msra.mxu0 0.0
        %1242 = vmatprep.subr.mxu0 0.0
        %1243 = vmatpush1.msra.mxu0 0.0
        %1244 = vmatprep.subr.mxu0 0.0
        %1245 = vmatpush1.msra.mxu0 0.0
        %1246 = vmatprep.subr.mxu0 0.0
        %1247 = vmatpush1.msra.mxu0 0.0
        %1248 = vmatprep.subr.mxu0 0.0
        %1249 = vmatpush1.msra.mxu0 0.0
        %1250 = vmatprep.subr.mxu0 0.0
        %1251 = vmatpush1.msra.mxu0 0.0
        %1252 = vmatprep.subr.mxu0 0.0
        %1253 = vmatpush1.msra.mxu0 0.0
        %1254 = vmatprep.subr.mxu0 0.0
        %1255 = vmatpush1.msra.mxu0 0.0
        %1256 = vmatprep.subr.mxu0 0.0
        %1257 = vmatpush1.msra.mxu0 0.0
        %1258 = vmatprep.subr.mxu0 0.0
        %1259 = vmatpush1.msra.mxu0 0.0
        %1260 = vmatprep.subr.mxu0 0.0
        %1261 = vmatpush1.msra.mxu0 0.0
        %1262 = vmatprep.subr.mxu0 0.0
        %1263 = vmatpush1.msra.mxu0 0.0
        %1264 = vmatprep.subr.mxu0 0.0
        %1265 = vmatpush1.msra.mxu0 0.0
        %1266 = vmatprep.subr.mxu0 0.0
        %1267 = vmatpush1.msra.mxu0 0.0
        %1268 = vmatprep.subr.mxu0 0.0
        %1269 = vmatpush1.msra.mxu0 0.0
        %1270 = vmatprep.subr.mxu0 0.0
        %1271 = vmatpush1.msra.mxu0 0.0
        %1272 = vmatprep.subr.mxu0 0.0
        %1273 = vmatpush1.msra.mxu0 0.0
        %1274 = vmatprep.subr.mxu0 0.0
        %1275 = vmatpush1.msra.mxu0 0.0
        %1276 = vmatprep.subr.mxu0 0.0
        %1277 = vmatpush1.msra.mxu0 0.0
        %1278 = vmatprep.subr.mxu0 0.0
        %1279 = vmatpush1.msra.mxu0 0.0
        %1280 = vmatprep.subr.mxu0 0.0
        %1281 = vmatpush1.msra.mxu0 0.0
        %1282 = vmatprep.subr.mxu0 0.0
        %1283 = vmatpush1.msra.mxu0 0.0
        %1284 = vmatprep.subr.mxu0 0.0
        %1285 = vmatpush1.msra.mxu0 0.0
        %1286 = vmatprep.subr.mxu0 0.0
        %1287 = vmatpush1.msra.mxu0 0.0
        %1288 = vmatprep.subr.mxu0 0.0
        %1289 = vmatpush1.msra.mxu0 0.0
        %1290 = vmatprep.subr.mxu0 0.0
        %1291 = vmatpush1.msra.mxu0 0.0
        %1292 = vmatprep.mubr.f32.mxu0 0.0
        %v1293 = vand.u32 %v221, 4294901760
        %1294 = vmatmul.mubr.f32.gmra.mrb[0].mxu0 %v1293
        %v1295 = vpop.f32.mrb[0].mxu0
        %v1296 = vadd.f32 %v1195, %v1295
        %v1297 = vpop.f32.mrb[0].mxu0
        %1298 = vmatprep.mubr.f32.mxu0 0.0
        %v1299 = vand.u32 %v224, 4294901760
        %1300 = vmatmul.mubr.f32.gmra.mrb[0].mxu0 %v1299
        %v1301 = vpop.f32.mrb[0].mxu0
        %v1302 = vadd.f32 %v1203, %v1301
        %v1303 = vpop.f32.mrb[0].mxu0
        %1304 = vmatprep.mubr.f32.mxu0 0.0
        %v1305 = vand.u32 %v227, 4294901760
        %1306 = vmatmul.mubr.f32.gmra.mrb[0].mxu0 %v1305
        %v1307 = vpop.f32.mrb[0].mxu0
        %v1308 = vadd.f32 %v1211, %v1307
        %v1309 = vpop.f32.mrb[0].mxu0
        %1310 = vmatprep.mubr.f32.mxu0 0.0
        %v1311 = vand.u32 %v230, 4294901760
        %1312 = vmatmul.mubr.f32.gmra.mrb[0].mxu0 %v1311
        %v1313 = vpop.f32.mrb[0].mxu0
        %v1314 = vadd.f32 %v1219, %v1313
        %v1315 = vpop.f32.mrb[0].mxu0
        %1316 = vdwg.mxu0
        %1317 = vmatprep.subr.mxu0 0.0
        %v1318 = vand.u32 %v209, 4294901760
        %1319 = vmatpush1.msra.mxu0 %v1318
        %1320 = vmatprep.subr.mxu0 0.0
        %v1321 = vand.u32 %v210, 4294901760
        %1322 = vmatpush1.msra.mxu0 %v1321
        %1323 = vmatprep.subr.mxu0 0.0
        %1324 = vmatpush1.msra.mxu0 0.0
        %1325 = vmatprep.subr.mxu0 0.0
        %1326 = vmatpush1.msra.mxu0 0.0
        %1327 = vmatprep.subr.mxu0 0.0
        %1328 = vmatpush1.msra.mxu0 0.0
        %1329 = vmatprep.subr.mxu0 0.0
        %1330 = vmatpush1.msra.mxu0 0.0
        %1331 = vmatprep.subr.mxu0 0.0
        %1332 = vmatpush1.msra.mxu0 0.0
        %1333 = vmatprep.subr.mxu0 0.0
        %1334 = vmatpush1.msra.mxu0 0.0
        %1335 = vmatprep.subr.mxu0 0.0
        %1336 = vmatpush1.msra.mxu0 0.0
        %1337 = vmatprep.subr.mxu0 0.0
        %1338 = vmatpush1.msra.mxu0 0.0
        %1339 = vmatprep.subr.mxu0 0.0
        %1340 = vmatpush1.msra.mxu0 0.0
        %1341 = vmatprep.subr.mxu0 0.0
        %1342 = vmatpush1.msra.mxu0 0.0
        %1343 = vmatprep.subr.mxu0 0.0
        %1344 = vmatpush1.msra.mxu0 0.0
        %1345 = vmatprep.subr.mxu0 0.0
        %1346 = vmatpush1.msra.mxu0 0.0
        %1347 = vmatprep.subr.mxu0 0.0
        %1348 = vmatpush1.msra.mxu0 0.0
        %1349 = vmatprep.subr.mxu0 0.0
        %1350 = vmatpush1.msra.mxu0 0.0
        %1351 = vmatprep.subr.mxu0 0.0
        %1352 = vmatpush1.msra.mxu0 0.0
        %1353 = vmatprep.subr.mxu0 0.0
        %1354 = vmatpush1.msra.mxu0 0.0
        %1355 = vmatprep.subr.mxu0 0.0
        %1356 = vmatpush1.msra.mxu0 0.0
        %1357 = vmatprep.subr.mxu0 0.0
        %1358 = vmatpush1.msra.mxu0 0.0
        %1359 = vmatprep.subr.mxu0 0.0
        %1360 = vmatpush1.msra.mxu0 0.0
        %1361 = vmatprep.subr.mxu0 0.0
        %1362 = vmatpush1.msra.mxu0 0.0
        %1363 = vmatprep.subr.mxu0 0.0
        %1364 = vmatpush1.msra.mxu0 0.0
        %1365 = vmatprep.subr.mxu0 0.0
        %1366 = vmatpush1.msra.mxu0 0.0
        %1367 = vmatprep.subr.mxu0 0.0
        %1368 = vmatpush1.msra.mxu0 0.0
        %1369 = vmatprep.subr.mxu0 0.0
        %1370 = vmatpush1.msra.mxu0 0.0
        %1371 = vmatprep.subr.mxu0 0.0
        %1372 = vmatpush1.msra.mxu0 0.0
        %1373 = vmatprep.subr.mxu0 0.0
        %1374 = vmatpush1.msra.mxu0 0.0
        %1375 = vmatprep.subr.mxu0 0.0
        %1376 = vmatpush1.msra.mxu0 0.0
        %1377 = vmatprep.subr.mxu0 0.0
        %1378 = vmatpush1.msra.mxu0 0.0
        %1379 = vmatprep.subr.mxu0 0.0
        %1380 = vmatpush1.msra.mxu0 0.0
        %1381 = vmatprep.subr.mxu0 0.0
        %1382 = vmatpush1.msra.mxu0 0.0
        %1383 = vmatprep.mubr.f32.mxu0 0.0
        %v1384 = vand.u32 %v221, 4294901760
        %1385 = vmatmul.mubr.f32.gmra.mrb[0].mxu0 %v1384
        %v1386 = vpop.f32.mrb[0].mxu0
        %v1387 = vadd.f32 %v1296, %v1386
        %v1388 = vpop.f32.mrb[0].mxu0
        %1389 = vmatprep.mubr.f32.mxu0 0.0
        %v1390 = vand.u32 %v224, 4294901760
        %1391 = vmatmul.mubr.f32.gmra.mrb[0].mxu0 %v1390
        %v1392 = vpop.f32.mrb[0].mxu0
        %v1393 = vadd.f32 %v1302, %v1392
        %v1394 = vpop.f32.mrb[0].mxu0
        %1395 = vmatprep.mubr.f32.mxu0 0.0
        %v1396 = vand.u32 %v227, 4294901760
        %1397 = vmatmul.mubr.f32.gmra.mrb[0].mxu0 %v1396
        %v1398 = vpop.f32.mrb[0].mxu0
        %v1399 = vadd.f32 %v1308, %v1398
        %v1400 = vpop.f32.mrb[0].mxu0
        %1401 = vmatprep.mubr.f32.mxu0 0.0
        %v1402 = vand.u32 %v230, 4294901760
        %1403 = vmatmul.mubr.f32.gmra.mrb[0].mxu0 %v1402
        %v1404 = vpop.f32.mrb[0].mxu0
        %v1405 = vadd.f32 %v1314, %v1404
        %v1406 = vpop.f32.mrb[0].mxu0
        %1407 = vdwg.mxu0
        %1408 = vmatprep.subr.mxu0 0.0
        %v1409 = vand.u32 %v211, 4294901760
        %1410 = vmatpush1.msra.mxu0 %v1409
        %1411 = vmatprep.subr.mxu0 0.0
        %v1412 = vand.u32 %v212, 4294901760
        %1413 = vmatpush1.msra.mxu0 %v1412
        %1414 = vmatprep.subr.mxu0 0.0
        %1415 = vmatpush1.msra.mxu0 0.0
        %1416 = vmatprep.subr.mxu0 0.0
        %1417 = vmatpush1.msra.mxu0 0.0
        %1418 = vmatprep.subr.mxu0 0.0
        %1419 = vmatpush1.msra.mxu0 0.0
        %1420 = vmatprep.subr.mxu0 0.0
        %1421 = vmatpush1.msra.mxu0 0.0
        %1422 = vmatprep.subr.mxu0 0.0
        %1423 = vmatpush1.msra.mxu0 0.0
        %1424 = vmatprep.subr.mxu0 0.0
        %1425 = vmatpush1.msra.mxu0 0.0
        %1426 = vmatprep.subr.mxu0 0.0
        %1427 = vmatpush1.msra.mxu0 0.0
        %1428 = vmatprep.subr.mxu0 0.0
        %1429 = vmatpush1.msra.mxu0 0.0
        %1430 = vmatprep.subr.mxu0 0.0
        %1431 = vmatpush1.msra.mxu0 0.0
        %1432 = vmatprep.subr.mxu0 0.0
        %1433 = vmatpush1.msra.mxu0 0.0
        %1434 = vmatprep.subr.mxu0 0.0
        %1435 = vmatpush1.msra.mxu0 0.0
        %1436 = vmatprep.subr.mxu0 0.0
        %1437 = vmatpush1.msra.mxu0 0.0
        %1438 = vmatprep.subr.mxu0 0.0
        %1439 = vmatpush1.msra.mxu0 0.0
        %1440 = vmatprep.subr.mxu0 0.0
        %1441 = vmatpush1.msra.mxu0 0.0
        %1442 = vmatprep.subr.mxu0 0.0
        %1443 = vmatpush1.msra.mxu0 0.0
        %1444 = vmatprep.subr.mxu0 0.0
        %1445 = vmatpush1.msra.mxu0 0.0
        %1446 = vmatprep.subr.mxu0 0.0
        %1447 = vmatpush1.msra.mxu0 0.0
        %1448 = vmatprep.subr.mxu0 0.0
        %1449 = vmatpush1.msra.mxu0 0.0
        %1450 = vmatprep.subr.mxu0 0.0
        %1451 = vmatpush1.msra.mxu0 0.0
        %1452 = vmatprep.subr.mxu0 0.0
        %1453 = vmatpush1.msra.mxu0 0.0
        %1454 = vmatprep.subr.mxu0 0.0
        %1455 = vmatpush1.msra.mxu0 0.0
        %1456 = vmatprep.subr.mxu0 0.0
        %1457 = vmatpush1.msra.mxu0 0.0
        %1458 = vmatprep.subr.mxu0 0.0
        %1459 = vmatpush1.msra.mxu0 0.0
        %1460 = vmatprep.subr.mxu0 0.0
        %1461 = vmatpush1.msra.mxu0 0.0
        %1462 = vmatprep.subr.mxu0 0.0
        %1463 = vmatpush1.msra.mxu0 0.0
        %1464 = vmatprep.subr.mxu0 0.0
        %1465 = vmatpush1.msra.mxu0 0.0
        %1466 = vmatprep.subr.mxu0 0.0
        %1467 = vmatpush1.msra.mxu0 0.0
        %1468 = vmatprep.subr.mxu0 0.0
        %1469 = vmatpush1.msra.mxu0 0.0
        %1470 = vmatprep.subr.mxu0 0.0
        %1471 = vmatpush1.msra.mxu0 0.0
        %1472 = vmatprep.subr.mxu0 0.0
        %1473 = vmatpush1.msra.mxu0 0.0
        %1474 = vmatprep.mubr.f32.mxu0 0.0
        %v1475 = vand.u32 %v221, 4294901760
        %v1476 = vsub.f32 %v221, %v1475
        %v1477 = vand.u32 %v1476, 4294901760
        %v1478 = vsub.f32 %v1476, %v1477
        %v1479 = vand.u32 %v1478, 4294901760
        %1480 = vmatmul.mubr.f32.gmra.mrb[0].mxu0 %v1479
        %v1481 = vpop.f32.mrb[0].mxu0
        %v1482 = vadd.f32 0.0, %v1481
        %v1483 = vpop.f32.mrb[0].mxu0
        %1484 = vmatprep.mubr.f32.mxu0 0.0
        %v1485 = vand.u32 %v224, 4294901760
        %v1486 = vsub.f32 %v224, %v1485
        %v1487 = vand.u32 %v1486, 4294901760
        %v1488 = vsub.f32 %v1486, %v1487
        %v1489 = vand.u32 %v1488, 4294901760
        %1490 = vmatmul.mubr.f32.gmra.mrb[0].mxu0 %v1489
        %v1491 = vpop.f32.mrb[0].mxu0
        %v1492 = vadd.f32 0.0, %v1491
        %v1493 = vpop.f32.mrb[0].mxu0
        %1494 = vmatprep.mubr.f32.mxu0 0.0
        %v1495 = vand.u32 %v227, 4294901760
        %v1496 = vsub.f32 %v227, %v1495
        %v1497 = vand.u32 %v1496, 4294901760
        %v1498 = vsub.f32 %v1496, %v1497
        %v1499 = vand.u32 %v1498, 4294901760
        %1500 = vmatmul.mubr.f32.gmra.mrb[0].mxu0 %v1499
        %v1501 = vpop.f32.mrb[0].mxu0
        %v1502 = vadd.f32 0.0, %v1501
        %v1503 = vpop.f32.mrb[0].mxu0
        %1504 = vmatprep.mubr.f32.mxu0 0.0
        %v1505 = vand.u32 %v230, 4294901760
        %v1506 = vsub.f32 %v230, %v1505
        %v1507 = vand.u32 %v1506, 4294901760
        %v1508 = vsub.f32 %v1506, %v1507
        %v1509 = vand.u32 %v1508, 4294901760
        %1510 = vmatmul.mubr.f32.gmra.mrb[0].mxu0 %v1509
        %v1511 = vpop.f32.mrb[0].mxu0
        %v1512 = vadd.f32 0.0, %v1511
        %v1513 = vpop.f32.mrb[0].mxu0
        %1514 = vdwg.mxu0
        %1515 = vmatprep.subr.mxu0 0.0
        %v1516 = vand.u32 %v211, 4294901760
        %v1517 = vsub.f32 %v211, %v1516
        %v1518 = vand.u32 %v1517, 4294901760
        %v1519 = vsub.f32 %v1517, %v1518
        %v1520 = vand.u32 %v1519, 4294901760
        %1521 = vmatpush1.msra.mxu0 %v1520
        %1522 = vmatprep.subr.mxu0 0.0
        %v1523 = vand.u32 %v212, 4294901760
        %v1524 = vsub.f32 %v212, %v1523
        %v1525 = vand.u32 %v1524, 4294901760
        %v1526 = vsub.f32 %v1524, %v1525
        %v1527 = vand.u32 %v1526, 4294901760
        %1528 = vmatpush1.msra.mxu0 %v1527
        %1529 = vmatprep.subr.mxu0 0.0
        %1530 = vmatpush1.msra.mxu0 0.0
        %1531 = vmatprep.subr.mxu0 0.0
        %1532 = vmatpush1.msra.mxu0 0.0
        %1533 = vmatprep.subr.mxu0 0.0
        %1534 = vmatpush1.msra.mxu0 0.0
        %1535 = vmatprep.subr.mxu0 0.0
        %1536 = vmatpush1.msra.mxu0 0.0
        %1537 = vmatprep.subr.mxu0 0.0
        %1538 = vmatpush1.msra.mxu0 0.0
        %1539 = vmatprep.subr.mxu0 0.0
        %1540 = vmatpush1.msra.mxu0 0.0
        %1541 = vmatprep.subr.mxu0 0.0
        %1542 = vmatpush1.msra.mxu0 0.0
        %1543 = vmatprep.subr.mxu0 0.0
        %1544 = vmatpush1.msra.mxu0 0.0
        %1545 = vmatprep.subr.mxu0 0.0
        %1546 = vmatpush1.msra.mxu0 0.0
        %1547 = vmatprep.subr.mxu0 0.0
        %1548 = vmatpush1.msra.mxu0 0.0
        %1549 = vmatprep.subr.mxu0 0.0
        %1550 = vmatpush1.msra.mxu0 0.0
        %1551 = vmatprep.subr.mxu0 0.0
        %1552 = vmatpush1.msra.mxu0 0.0
        %1553 = vmatprep.subr.mxu0 0.0
        %1554 = vmatpush1.msra.mxu0 0.0
        %1555 = vmatprep.subr.mxu0 0.0
        %1556 = vmatpush1.msra.mxu0 0.0
        %1557 = vmatprep.subr.mxu0 0.0
        %1558 = vmatpush1.msra.mxu0 0.0
        %1559 = vmatprep.subr.mxu0 0.0
        %1560 = vmatpush1.msra.mxu0 0.0
        %1561 = vmatprep.subr.mxu0 0.0
        %1562 = vmatpush1.msra.mxu0 0.0
        %1563 = vmatprep.subr.mxu0 0.0
        %1564 = vmatpush1.msra.mxu0 0.0
        %1565 = vmatprep.subr.mxu0 0.0
        %1566 = vmatpush1.msra.mxu0 0.0
        %1567 = vmatprep.subr.mxu0 0.0
        %1568 = vmatpush1.msra.mxu0 0.0
        %1569 = vmatprep.subr.mxu0 0.0
        %1570 = vmatpush1.msra.mxu0 0.0
        %1571 = vmatprep.subr.mxu0 0.0
        %1572 = vmatpush1.msra.mxu0 0.0
        %1573 = vmatprep.subr.mxu0 0.0
        %1574 = vmatpush1.msra.mxu0 0.0
        %1575 = vmatprep.subr.mxu0 0.0
        %1576 = vmatpush1.msra.mxu0 0.0
        %1577 = vmatprep.subr.mxu0 0.0
        %1578 = vmatpush1.msra.mxu0 0.0
        %1579 = vmatprep.subr.mxu0 0.0
        %1580 = vmatpush1.msra.mxu0 0.0
        %1581 = vmatprep.subr.mxu0 0.0
        %1582 = vmatpush1.msra.mxu0 0.0
        %1583 = vmatprep.subr.mxu0 0.0
        %1584 = vmatpush1.msra.mxu0 0.0
        %1585 = vmatprep.subr.mxu0 0.0
        %1586 = vmatpush1.msra.mxu0 0.0
        %1587 = vmatprep.subr.mxu0 0.0
        %1588 = vmatpush1.msra.mxu0 0.0
        %1589 = vmatprep.mubr.f32.mxu0 0.0
        %v1590 = vand.u32 %v221, 4294901760
        %1591 = vmatmul.mubr.f32.gmra.mrb[0].mxu0 %v1590
        %v1592 = vpop.f32.mrb[0].mxu0
        %v1593 = vadd.f32 %v1482, %v1592
        %v1594 = vpop.f32.mrb[0].mxu0
        %1595 = vmatprep.mubr.f32.mxu0 0.0
        %v1596 = vand.u32 %v224, 4294901760
        %1597 = vmatmul.mubr.f32.gmra.mrb[0].mxu0 %v1596
        %v1598 = vpop.f32.mrb[0].mxu0
        %v1599 = vadd.f32 %v1492, %v1598
        %v1600 = vpop.f32.mrb[0].mxu0
        %1601 = vmatprep.mubr.f32.mxu0 0.0
        %v1602 = vand.u32 %v227, 4294901760
        %1603 = vmatmul.mubr.f32.gmra.mrb[0].mxu0 %v1602
        %v1604 = vpop.f32.mrb[0].mxu0
        %v1605 = vadd.f32 %v1502, %v1604
        %v1606 = vpop.f32.mrb[0].mxu0
        %1607 = vmatprep.mubr.f32.mxu0 0.0
        %v1608 = vand.u32 %v230, 4294901760
        %1609 = vmatmul.mubr.f32.gmra.mrb[0].mxu0 %v1608
        %v1610 = vpop.f32.mrb[0].mxu0
        %v1611 = vadd.f32 %v1512, %v1610
        %v1612 = vpop.f32.mrb[0].mxu0
        %1613 = vdwg.mxu0
        %1614 = vmatprep.subr.mxu0 0.0
        %v1615 = vand.u32 %v211, 4294901760
        %v1616 = vsub.f32 %v211, %v1615
        %1617 = vmatpush1.msra.mxu0 %v1616
        %1618 = vmatprep.subr.mxu0 0.0
        %v1619 = vand.u32 %v212, 4294901760
        %v1620 = vsub.f32 %v212, %v1619
        %1621 = vmatpush1.msra.mxu0 %v1620
        %1622 = vmatprep.subr.mxu0 0.0
        %1623 = vmatpush1.msra.mxu0 0.0
        %1624 = vmatprep.subr.mxu0 0.0
        %1625 = vmatpush1.msra.mxu0 0.0
        %1626 = vmatprep.subr.mxu0 0.0
        %1627 = vmatpush1.msra.mxu0 0.0
        %1628 = vmatprep.subr.mxu0 0.0
        %1629 = vmatpush1.msra.mxu0 0.0
        %1630 = vmatprep.subr.mxu0 0.0
        %1631 = vmatpush1.msra.mxu0 0.0
        %1632 = vmatprep.subr.mxu0 0.0
        %1633 = vmatpush1.msra.mxu0 0.0
        %1634 = vmatprep.subr.mxu0 0.0
        %1635 = vmatpush1.msra.mxu0 0.0
        %1636 = vmatprep.subr.mxu0 0.0
        %1637 = vmatpush1.msra.mxu0 0.0
        %1638 = vmatprep.subr.mxu0 0.0
        %1639 = vmatpush1.msra.mxu0 0.0
        %1640 = vmatprep.subr.mxu0 0.0
        %1641 = vmatpush1.msra.mxu0 0.0
        %1642 = vmatprep.subr.mxu0 0.0
        %1643 = vmatpush1.msra.mxu0 0.0
        %1644 = vmatprep.subr.mxu0 0.0
        %1645 = vmatpush1.msra.mxu0 0.0
        %1646 = vmatprep.subr.mxu0 0.0
        %1647 = vmatpush1.msra.mxu0 0.0
        %1648 = vmatprep.subr.mxu0 0.0
        %1649 = vmatpush1.msra.mxu0 0.0
        %1650 = vmatprep.subr.mxu0 0.0
        %1651 = vmatpush1.msra.mxu0 0.0
        %1652 = vmatprep.subr.mxu0 0.0
        %1653 = vmatpush1.msra.mxu0 0.0
        %1654 = vmatprep.subr.mxu0 0.0
        %1655 = vmatpush1.msra.mxu0 0.0
        %1656 = vmatprep.subr.mxu0 0.0
        %1657 = vmatpush1.msra.mxu0 0.0
        %1658 = vmatprep.subr.mxu0 0.0
        %1659 = vmatpush1.msra.mxu0 0.0
        %1660 = vmatprep.subr.mxu0 0.0
        %1661 = vmatpush1.msra.mxu0 0.0
        %1662 = vmatprep.subr.mxu0 0.0
        %1663 = vmatpush1.msra.mxu0 0.0
        %1664 = vmatprep.subr.mxu0 0.0
        %1665 = vmatpush1.msra.mxu0 0.0
        %1666 = vmatprep.subr.mxu0 0.0
        %1667 = vmatpush1.msra.mxu0 0.0
        %1668 = vmatprep.subr.mxu0 0.0
        %1669 = vmatpush1.msra.mxu0 0.0
        %1670 = vmatprep.subr.mxu0 0.0
        %1671 = vmatpush1.msra.mxu0 0.0
        %1672 = vmatprep.subr.mxu0 0.0
        %1673 = vmatpush1.msra.mxu0 0.0
        %1674 = vmatprep.subr.mxu0 0.0
        %1675 = vmatpush1.msra.mxu0 0.0
        %1676 = vmatprep.subr.mxu0 0.0
        %1677 = vmatpush1.msra.mxu0 0.0
        %1678 = vmatprep.subr.mxu0 0.0
        %1679 = vmatpush1.msra.mxu0 0.0
        %1680 = vmatprep.subr.mxu0 0.0
        %1681 = vmatpush1.msra.mxu0 0.0
        %1682 = vmatprep.mubr.f32.mxu0 0.0
        %v1683 = vand.u32 %v221, 4294901760
        %v1684 = vsub.f32 %v221, %v1683
        %1685 = vmatmul.mubr.f32.gmra.mrb[0].mxu0 %v1684
        %v1686 = vpop.f32.mrb[0].mxu0
        %v1687 = vadd.f32 %v1593, %v1686
        %v1688 = vpop.f32.mrb[0].mxu0
        %1689 = vmatprep.mubr.f32.mxu0 0.0
        %v1690 = vand.u32 %v224, 4294901760
        %v1691 = vsub.f32 %v224, %v1690
        %1692 = vmatmul.mubr.f32.gmra.mrb[0].mxu0 %v1691
        %v1693 = vpop.f32.mrb[0].mxu0
        %v1694 = vadd.f32 %v1599, %v1693
        %v1695 = vpop.f32.mrb[0].mxu0
        %1696 = vmatprep.mubr.f32.mxu0 0.0
        %v1697 = vand.u32 %v227, 4294901760
        %v1698 = vsub.f32 %v227, %v1697
        %1699 = vmatmul.mubr.f32.gmra.mrb[0].mxu0 %v1698
        %v1700 = vpop.f32.mrb[0].mxu0
        %v1701 = vadd.f32 %v1605, %v1700
        %v1702 = vpop.f32.mrb[0].mxu0
        %1703 = vmatprep.mubr.f32.mxu0 0.0
        %v1704 = vand.u32 %v230, 4294901760
        %v1705 = vsub.f32 %v230, %v1704
        %1706 = vmatmul.mubr.f32.gmra.mrb[0].mxu0 %v1705
        %v1707 = vpop.f32.mrb[0].mxu0
        %v1708 = vadd.f32 %v1611, %v1707
        %v1709 = vpop.f32.mrb[0].mxu0
        %1710 = vdwg.mxu0
        %1711 = vmatprep.subr.mxu0 0.0
        %v1712 = vand.u32 %v211, 4294901760
        %1713 = vmatpush1.msra.mxu0 %v1712
        %1714 = vmatprep.subr.mxu0 0.0
        %v1715 = vand.u32 %v212, 4294901760
        %1716 = vmatpush1.msra.mxu0 %v1715
        %1717 = vmatprep.subr.mxu0 0.0
        %1718 = vmatpush1.msra.mxu0 0.0
        %1719 = vmatprep.subr.mxu0 0.0
        %1720 = vmatpush1.msra.mxu0 0.0
        %1721 = vmatprep.subr.mxu0 0.0
        %1722 = vmatpush1.msra.mxu0 0.0
        %1723 = vmatprep.subr.mxu0 0.0
        %1724 = vmatpush1.msra.mxu0 0.0
        %1725 = vmatprep.subr.mxu0 0.0
        %1726 = vmatpush1.msra.mxu0 0.0
        %1727 = vmatprep.subr.mxu0 0.0
        %1728 = vmatpush1.msra.mxu0 0.0
        %1729 = vmatprep.subr.mxu0 0.0
        %1730 = vmatpush1.msra.mxu0 0.0
        %1731 = vmatprep.subr.mxu0 0.0
        %1732 = vmatpush1.msra.mxu0 0.0
        %1733 = vmatprep.subr.mxu0 0.0
        %1734 = vmatpush1.msra.mxu0 0.0
        %1735 = vmatprep.subr.mxu0 0.0
        %1736 = vmatpush1.msra.mxu0 0.0
        %1737 = vmatprep.subr.mxu0 0.0
        %1738 = vmatpush1.msra.mxu0 0.0
        %1739 = vmatprep.subr.mxu0 0.0
        %1740 = vmatpush1.msra.mxu0 0.0
        %1741 = vmatprep.subr.mxu0 0.0
        %1742 = vmatpush1.msra.mxu0 0.0
        %1743 = vmatprep.subr.mxu0 0.0
        %1744 = vmatpush1.msra.mxu0 0.0
        %1745 = vmatprep.subr.mxu0 0.0
        %1746 = vmatpush1.msra.mxu0 0.0
        %1747 = vmatprep.subr.mxu0 0.0
        %1748 = vmatpush1.msra.mxu0 0.0
        %1749 = vmatprep.subr.mxu0 0.0
        %1750 = vmatpush1.msra.mxu0 0.0
        %1751 = vmatprep.subr.mxu0 0.0
        %1752 = vmatpush1.msra.mxu0 0.0
        %1753 = vmatprep.subr.mxu0 0.0
        %1754 = vmatpush1.msra.mxu0 0.0
        %1755 = vmatprep.subr.mxu0 0.0
        %1756 = vmatpush1.msra.mxu0 0.0
        %1757 = vmatprep.subr.mxu0 0.0
        %1758 = vmatpush1.msra.mxu0 0.0
        %1759 = vmatprep.subr.mxu0 0.0
        %1760 = vmatpush1.msra.mxu0 0.0
        %1761 = vmatprep.subr.mxu0 0.0
        %1762 = vmatpush1.msra.mxu0 0.0
        %1763 = vmatprep.subr.mxu0 0.0
        %1764 = vmatpush1.msra.mxu0 0.0
        %1765 = vmatprep.subr.mxu0 0.0
        %1766 = vmatpush1.msra.mxu0 0.0
        %1767 = vmatprep.subr.mxu0 0.0
        %1768 = vmatpush1.msra.mxu0 0.0
        %1769 = vmatprep.subr.mxu0 0.0
        %1770 = vmatpush1.msra.mxu0 0.0
        %1771 = vmatprep.subr.mxu0 0.0
        %1772 = vmatpush1.msra.mxu0 0.0
        %1773 = vmatprep.subr.mxu0 0.0
        %1774 = vmatpush1.msra.mxu0 0.0
        %1775 = vmatprep.subr.mxu0 0.0
        %1776 = vmatpush1.msra.mxu0 0.0
        %1777 = vmatprep.mubr.f32.mxu0 0.0
        %v1778 = vand.u32 %v221, 4294901760
        %v1779 = vsub.f32 %v221, %v1778
        %v1780 = vand.u32 %v1779, 4294901760
        %1781 = vmatmul.mubr.f32.gmra.mrb[0].mxu0 %v1780
        %v1782 = vpop.f32.mrb[0].mxu0
        %v1783 = vadd.f32 %v1687, %v1782
        %v1784 = vpop.f32.mrb[0].mxu0
        %1785 = vmatprep.mubr.f32.mxu0 0.0
        %v1786 = vand.u32 %v224, 4294901760
        %v1787 = vsub.f32 %v224, %v1786
        %v1788 = vand.u32 %v1787, 4294901760
        %1789 = vmatmul.mubr.f32.gmra.mrb[0].mxu0 %v1788
        %v1790 = vpop.f32.mrb[0].mxu0
        %v1791 = vadd.f32 %v1694, %v1790
        %v1792 = vpop.f32.mrb[0].mxu0
        %1793 = vmatprep.mubr.f32.mxu0 0.0
        %v1794 = vand.u32 %v227, 4294901760
        %v1795 = vsub.f32 %v227, %v1794
        %v1796 = vand.u32 %v1795, 4294901760
        %1797 = vmatmul.mubr.f32.gmra.mrb[0].mxu0 %v1796
        %v1798 = vpop.f32.mrb[0].mxu0
        %v1799 = vadd.f32 %v1701, %v1798
        %v1800 = vpop.f32.mrb[0].mxu0
        %1801 = vmatprep.mubr.f32.mxu0 0.0
        %v1802 = vand.u32 %v230, 4294901760
        %v1803 = vsub.f32 %v230, %v1802
        %v1804 = vand.u32 %v1803, 4294901760
        %1805 = vmatmul.mubr.f32.gmra.mrb[0].mxu0 %v1804
        %v1806 = vpop.f32.mrb[0].mxu0
        %v1807 = vadd.f32 %v1708, %v1806
        %v1808 = vpop.f32.mrb[0].mxu0
        %1809 = vdwg.mxu0
        %1810 = vmatprep.subr.mxu0 0.0
        %v1811 = vand.u32 %v211, 4294901760
        %v1812 = vsub.f32 %v211, %v1811
        %v1813 = vand.u32 %v1812, 4294901760
        %1814 = vmatpush1.msra.mxu0 %v1813
        %1815 = vmatprep.subr.mxu0 0.0
        %v1816 = vand.u32 %v212, 4294901760
        %v1817 = vsub.f32 %v212, %v1816
        %v1818 = vand.u32 %v1817, 4294901760
        %1819 = vmatpush1.msra.mxu0 %v1818
        %1820 = vmatprep.subr.mxu0 0.0
        %1821 = vmatpush1.msra.mxu0 0.0
        %1822 = vmatprep.subr.mxu0 0.0
        %1823 = vmatpush1.msra.mxu0 0.0
        %1824 = vmatprep.subr.mxu0 0.0
        %1825 = vmatpush1.msra.mxu0 0.0
        %1826 = vmatprep.subr.mxu0 0.0
        %1827 = vmatpush1.msra.mxu0 0.0
        %1828 = vmatprep.subr.mxu0 0.0
        %1829 = vmatpush1.msra.mxu0 0.0
        %1830 = vmatprep.subr.mxu0 0.0
        %1831 = vmatpush1.msra.mxu0 0.0
        %1832 = vmatprep.subr.mxu0 0.0
        %1833 = vmatpush1.msra.mxu0 0.0
        %1834 = vmatprep.subr.mxu0 0.0
        %1835 = vmatpush1.msra.mxu0 0.0
        %1836 = vmatprep.subr.mxu0 0.0
        %1837 = vmatpush1.msra.mxu0 0.0
        %1838 = vmatprep.subr.mxu0 0.0
        %1839 = vmatpush1.msra.mxu0 0.0
        %1840 = vmatprep.subr.mxu0 0.0
        %1841 = vmatpush1.msra.mxu0 0.0
        %1842 = vmatprep.subr.mxu0 0.0
        %1843 = vmatpush1.msra.mxu0 0.0
        %1844 = vmatprep.subr.mxu0 0.0
        %1845 = vmatpush1.msra.mxu0 0.0
        %1846 = vmatprep.subr.mxu0 0.0
        %1847 = vmatpush1.msra.mxu0 0.0
        %1848 = vmatprep.subr.mxu0 0.0
        %1849 = vmatpush1.msra.mxu0 0.0
        %1850 = vmatprep.subr.mxu0 0.0
        %1851 = vmatpush1.msra.mxu0 0.0
        %1852 = vmatprep.subr.mxu0 0.0
        %1853 = vmatpush1.msra.mxu0 0.0
        %1854 = vmatprep.subr.mxu0 0.0
        %1855 = vmatpush1.msra.mxu0 0.0
        %1856 = vmatprep.subr.mxu0 0.0
        %1857 = vmatpush1.msra.mxu0 0.0
        %1858 = vmatprep.subr.mxu0 0.0
        %1859 = vmatpush1.msra.mxu0 0.0
        %1860 = vmatprep.subr.mxu0 0.0
        %1861 = vmatpush1.msra.mxu0 0.0
        %1862 = vmatprep.subr.mxu0 0.0
        %1863 = vmatpush1.msra.mxu0 0.0
        %1864 = vmatprep.subr.mxu0 0.0
        %1865 = vmatpush1.msra.mxu0 0.0
        %1866 = vmatprep.subr.mxu0 0.0
        %1867 = vmatpush1.msra.mxu0 0.0
        %1868 = vmatprep.subr.mxu0 0.0
        %1869 = vmatpush1.msra.mxu0 0.0
        %1870 = vmatprep.subr.mxu0 0.0
        %1871 = vmatpush1.msra.mxu0 0.0
        %1872 = vmatprep.subr.mxu0 0.0
        %1873 = vmatpush1.msra.mxu0 0.0
        %1874 = vmatprep.subr.mxu0 0.0
        %1875 = vmatpush1.msra.mxu0 0.0
        %1876 = vmatprep.subr.mxu0 0.0
        %1877 = vmatpush1.msra.mxu0 0.0
        %1878 = vmatprep.subr.mxu0 0.0
        %1879 = vmatpush1.msra.mxu0 0.0
        %1880 = vmatprep.mubr.f32.mxu0 0.0
        %v1881 = vand.u32 %v221, 4294901760
        %1882 = vmatmul.mubr.f32.gmra.mrb[0].mxu0 %v1881
        %v1883 = vpop.f32.mrb[0].mxu0
        %v1884 = vadd.f32 %v1783, %v1883
        %v1885 = vpop.f32.mrb[0].mxu0
        %1886 = vmatprep.mubr.f32.mxu0 0.0
        %v1887 = vand.u32 %v224, 4294901760
        %1888 = vmatmul.mubr.f32.gmra.mrb[0].mxu0 %v1887
        %v1889 = vpop.f32.mrb[0].mxu0
        %v1890 = vadd.f32 %v1791, %v1889
        %v1891 = vpop.f32.mrb[0].mxu0
        %1892 = vmatprep.mubr.f32.mxu0 0.0
        %v1893 = vand.u32 %v227, 4294901760
        %1894 = vmatmul.mubr.f32.gmra.mrb[0].mxu0 %v1893
        %v1895 = vpop.f32.mrb[0].mxu0
        %v1896 = vadd.f32 %v1799, %v1895
        %v1897 = vpop.f32.mrb[0].mxu0
        %1898 = vmatprep.mubr.f32.mxu0 0.0
        %v1899 = vand.u32 %v230, 4294901760
        %1900 = vmatmul.mubr.f32.gmra.mrb[0].mxu0 %v1899
        %v1901 = vpop.f32.mrb[0].mxu0
        %v1902 = vadd.f32 %v1807, %v1901
        %v1903 = vpop.f32.mrb[0].mxu0
        %1904 = vdwg.mxu0
        %1905 = vmatprep.subr.mxu0 0.0
        %v1906 = vand.u32 %v211, 4294901760
        %1907 = vmatpush1.msra.mxu0 %v1906
        %1908 = vmatprep.subr.mxu0 0.0
        %v1909 = vand.u32 %v212, 4294901760
        %1910 = vmatpush1.msra.mxu0 %v1909
        %1911 = vmatprep.subr.mxu0 0.0
        %1912 = vmatpush1.msra.mxu0 0.0
        %1913 = vmatprep.subr.mxu0 0.0
        %1914 = vmatpush1.msra.mxu0 0.0
        %1915 = vmatprep.subr.mxu0 0.0
        %1916 = vmatpush1.msra.mxu0 0.0
        %1917 = vmatprep.subr.mxu0 0.0
        %1918 = vmatpush1.msra.mxu0 0.0
        %1919 = vmatprep.subr.mxu0 0.0
        %1920 = vmatpush1.msra.mxu0 0.0
        %1921 = vmatprep.subr.mxu0 0.0
        %1922 = vmatpush1.msra.mxu0 0.0
        %1923 = vmatprep.subr.mxu0 0.0
        %1924 = vmatpush1.msra.mxu0 0.0
        %1925 = vmatprep.subr.mxu0 0.0
        %1926 = vmatpush1.msra.mxu0 0.0
        %1927 = vmatprep.subr.mxu0 0.0
        %1928 = vmatpush1.msra.mxu0 0.0
        %1929 = vmatprep.subr.mxu0 0.0
        %1930 = vmatpush1.msra.mxu0 0.0
        %1931 = vmatprep.subr.mxu0 0.0
        %1932 = vmatpush1.msra.mxu0 0.0
        %1933 = vmatprep.subr.mxu0 0.0
        %1934 = vmatpush1.msra.mxu0 0.0
        %1935 = vmatprep.subr.mxu0 0.0
        %1936 = vmatpush1.msra.mxu0 0.0
        %1937 = vmatprep.subr.mxu0 0.0
        %1938 = vmatpush1.msra.mxu0 0.0
        %1939 = vmatprep.subr.mxu0 0.0
        %1940 = vmatpush1.msra.mxu0 0.0
        %1941 = vmatprep.subr.mxu0 0.0
        %1942 = vmatpush1.msra.mxu0 0.0
        %1943 = vmatprep.subr.mxu0 0.0
        %1944 = vmatpush1.msra.mxu0 0.0
        %1945 = vmatprep.subr.mxu0 0.0
        %1946 = vmatpush1.msra.mxu0 0.0
        %1947 = vmatprep.subr.mxu0 0.0
        %1948 = vmatpush1.msra.mxu0 0.0
        %1949 = vmatprep.subr.mxu0 0.0
        %1950 = vmatpush1.msra.mxu0 0.0
        %1951 = vmatprep.subr.mxu0 0.0
        %1952 = vmatpush1.msra.mxu0 0.0
        %1953 = vmatprep.subr.mxu0 0.0
        %1954 = vmatpush1.msra.mxu0 0.0
        %1955 = vmatprep.subr.mxu0 0.0
        %1956 = vmatpush1.msra.mxu0 0.0
        %1957 = vmatprep.subr.mxu0 0.0
        %1958 = vmatpush1.msra.mxu0 0.0
        %1959 = vmatprep.subr.mxu0 0.0
        %1960 = vmatpush1.msra.mxu0 0.0
        %1961 = vmatprep.subr.mxu0 0.0
        %1962 = vmatpush1.msra.mxu0 0.0
        %1963 = vmatprep.subr.mxu0 0.0
        %1964 = vmatpush1.msra.mxu0 0.0
        %1965 = vmatprep.subr.mxu0 0.0
        %1966 = vmatpush1.msra.mxu0 0.0
        %1967 = vmatprep.subr.mxu0 0.0
        %1968 = vmatpush1.msra.mxu0 0.0
        %1969 = vmatprep.subr.mxu0 0.0
        %1970 = vmatpush1.msra.mxu0 0.0
        %1971 = vmatprep.mubr.f32.mxu0 0.0
        %v1972 = vand.u32 %v221, 4294901760
        %1973 = vmatmul.mubr.f32.gmra.mrb[0].mxu0 %v1972
        %v1974 = vpop.f32.mrb[0].mxu0
        %v1975 = vadd.f32 %v1884, %v1974
        %v1976 = vpop.f32.mrb[0].mxu0
        %1977 = vmatprep.mubr.f32.mxu0 0.0
        %v1978 = vand.u32 %v224, 4294901760
        %1979 = vmatmul.mubr.f32.gmra.mrb[0].mxu0 %v1978
        %v1980 = vpop.f32.mrb[0].mxu0
        %v1981 = vadd.f32 %v1890, %v1980
        %v1982 = vpop.f32.mrb[0].mxu0
        %1983 = vmatprep.mubr.f32.mxu0 0.0
        %v1984 = vand.u32 %v227, 4294901760
        %1985 = vmatmul.mubr.f32.gmra.mrb[0].mxu0 %v1984
        %v1986 = vpop.f32.mrb[0].mxu0
        %v1987 = vadd.f32 %v1896, %v1986
        %v1988 = vpop.f32.mrb[0].mxu0
        %1989 = vmatprep.mubr.f32.mxu0 0.0
        %v1990 = vand.u32 %v230, 4294901760
        %1991 = vmatmul.mubr.f32.gmra.mrb[0].mxu0 %v1990
        %v1992 = vpop.f32.mrb[0].mxu0
        %v1993 = vadd.f32 %v1902, %v1992
        %v1994 = vpop.f32.mrb[0].mxu0
        %1995 = vdwg.mxu0
        %1996 = vmatprep.subr.mxu0 0.0
        %v1997 = vand.u32 %v213, 4294901760
        %1998 = vmatpush1.msra.mxu0 %v1997
        %1999 = vmatprep.subr.mxu0 0.0
        %v2000 = vand.u32 %v214, 4294901760
        %2001 = vmatpush1.msra.mxu0 %v2000
        %2002 = vmatprep.subr.mxu0 0.0
        %2003 = vmatpush1.msra.mxu0 0.0
        %2004 = vmatprep.subr.mxu0 0.0
        %2005 = vmatpush1.msra.mxu0 0.0
        %2006 = vmatprep.subr.mxu0 0.0
        %2007 = vmatpush1.msra.mxu0 0.0
        %2008 = vmatprep.subr.mxu0 0.0
        %2009 = vmatpush1.msra.mxu0 0.0
        %2010 = vmatprep.subr.mxu0 0.0
        %2011 = vmatpush1.msra.mxu0 0.0
        %2012 = vmatprep.subr.mxu0 0.0
        %2013 = vmatpush1.msra.mxu0 0.0
        %2014 = vmatprep.subr.mxu0 0.0
        %2015 = vmatpush1.msra.mxu0 0.0
        %2016 = vmatprep.subr.mxu0 0.0
        %2017 = vmatpush1.msra.mxu0 0.0
        %2018 = vmatprep.subr.mxu0 0.0
        %2019 = vmatpush1.msra.mxu0 0.0
        %2020 = vmatprep.subr.mxu0 0.0
        %2021 = vmatpush1.msra.mxu0 0.0
        %2022 = vmatprep.subr.mxu0 0.0
        %2023 = vmatpush1.msra.mxu0 0.0
        %2024 = vmatprep.subr.mxu0 0.0
        %2025 = vmatpush1.msra.mxu0 0.0
        %2026 = vmatprep.subr.mxu0 0.0
        %2027 = vmatpush1.msra.mxu0 0.0
        %2028 = vmatprep.subr.mxu0 0.0
        %2029 = vmatpush1.msra.mxu0 0.0
        %2030 = vmatprep.subr.mxu0 0.0
        %2031 = vmatpush1.msra.mxu0 0.0
        %2032 = vmatprep.subr.mxu0 0.0
        %2033 = vmatpush1.msra.mxu0 0.0
        %2034 = vmatprep.subr.mxu0 0.0
        %2035 = vmatpush1.msra.mxu0 0.0
        %2036 = vmatprep.subr.mxu0 0.0
        %2037 = vmatpush1.msra.mxu0 0.0
        %2038 = vmatprep.subr.mxu0 0.0
        %2039 = vmatpush1.msra.mxu0 0.0
        %2040 = vmatprep.subr.mxu0 0.0
        %2041 = vmatpush1.msra.mxu0 0.0
        %2042 = vmatprep.subr.mxu0 0.0
        %2043 = vmatpush1.msra.mxu0 0.0
        %2044 = vmatprep.subr.mxu0 0.0
        %2045 = vmatpush1.msra.mxu0 0.0
        %2046 = vmatprep.subr.mxu0 0.0
        %2047 = vmatpush1.msra.mxu0 0.0
        %2048 = vmatprep.subr.mxu0 0.0
        %2049 = vmatpush1.msra.mxu0 0.0
        %2050 = vmatprep.subr.mxu0 0.0
        %2051 = vmatpush1.msra.mxu0 0.0
        %2052 = vmatprep.subr.mxu0 0.0
        %2053 = vmatpush1.msra.mxu0 0.0
        %2054 = vmatprep.subr.mxu0 0.0
        %2055 = vmatpush1.msra.mxu0 0.0
        %2056 = vmatprep.subr.mxu0 0.0
        %2057 = vmatpush1.msra.mxu0 0.0
        %2058 = vmatprep.subr.mxu0 0.0
        %2059 = vmatpush1.msra.mxu0 0.0
        %2060 = vmatprep.subr.mxu0 0.0
        %2061 = vmatpush1.msra.mxu0 0.0
        %2062 = vmatprep.mubr.f32.mxu0 0.0
        %v2063 = vand.u32 %v221, 4294901760
        %v2064 = vsub.f32 %v221, %v2063
        %v2065 = vand.u32 %v2064, 4294901760
        %v2066 = vsub.f32 %v2064, %v2065
        %v2067 = vand.u32 %v2066, 4294901760
        %2068 = vmatmul.mubr.f32.gmra.mrb[0].mxu0 %v2067
        %v2069 = vpop.f32.mrb[0].mxu0
        %v2070 = vadd.f32 0.0, %v2069
        %v2071 = vpop.f32.mrb[0].mxu0
        %2072 = vmatprep.mubr.f32.mxu0 0.0
        %v2073 = vand.u32 %v224, 4294901760
        %v2074 = vsub.f32 %v224, %v2073
        %v2075 = vand.u32 %v2074, 4294901760
        %v2076 = vsub.f32 %v2074, %v2075
        %v2077 = vand.u32 %v2076, 4294901760
        %2078 = vmatmul.mubr.f32.gmra.mrb[0].mxu0 %v2077
        %v2079 = vpop.f32.mrb[0].mxu0
        %v2080 = vadd.f32 0.0, %v2079
        %v2081 = vpop.f32.mrb[0].mxu0
        %2082 = vmatprep.mubr.f32.mxu0 0.0
        %v2083 = vand.u32 %v227, 4294901760
        %v2084 = vsub.f32 %v227, %v2083
        %v2085 = vand.u32 %v2084, 4294901760
        %v2086 = vsub.f32 %v2084, %v2085
        %v2087 = vand.u32 %v2086, 4294901760
        %2088 = vmatmul.mubr.f32.gmra.mrb[0].mxu0 %v2087
        %v2089 = vpop.f32.mrb[0].mxu0
        %v2090 = vadd.f32 0.0, %v2089
        %v2091 = vpop.f32.mrb[0].mxu0
        %2092 = vmatprep.mubr.f32.mxu0 0.0
        %v2093 = vand.u32 %v230, 4294901760
        %v2094 = vsub.f32 %v230, %v2093
        %v2095 = vand.u32 %v2094, 4294901760
        %v2096 = vsub.f32 %v2094, %v2095
        %v2097 = vand.u32 %v2096, 4294901760
        %2098 = vmatmul.mubr.f32.gmra.mrb[0].mxu0 %v2097
        %v2099 = vpop.f32.mrb[0].mxu0
        %v2100 = vadd.f32 0.0, %v2099
        %v2101 = vpop.f32.mrb[0].mxu0
        %2102 = vdwg.mxu0
        %2103 = vmatprep.subr.mxu0 0.0
        %v2104 = vand.u32 %v213, 4294901760
        %v2105 = vsub.f32 %v213, %v2104
        %v2106 = vand.u32 %v2105, 4294901760
        %v2107 = vsub.f32 %v2105, %v2106
        %v2108 = vand.u32 %v2107, 4294901760
        %2109 = vmatpush1.msra.mxu0 %v2108
        %2110 = vmatprep.subr.mxu0 0.0
        %v2111 = vand.u32 %v214, 4294901760
        %v2112 = vsub.f32 %v214, %v2111
        %v2113 = vand.u32 %v2112, 4294901760
        %v2114 = vsub.f32 %v2112, %v2113
        %v2115 = vand.u32 %v2114, 4294901760
        %2116 = vmatpush1.msra.mxu0 %v2115
        %2117 = vmatprep.subr.mxu0 0.0
        %2118 = vmatpush1.msra.mxu0 0.0
        %2119 = vmatprep.subr.mxu0 0.0
        %2120 = vmatpush1.msra.mxu0 0.0
        %2121 = vmatprep.subr.mxu0 0.0
        %2122 = vmatpush1.msra.mxu0 0.0
        %2123 = vmatprep.subr.mxu0 0.0
        %2124 = vmatpush1.msra.mxu0 0.0
        %2125 = vmatprep.subr.mxu0 0.0
        %2126 = vmatpush1.msra.mxu0 0.0
        %2127 = vmatprep.subr.mxu0 0.0
        %2128 = vmatpush1.msra.mxu0 0.0
        %2129 = vmatprep.subr.mxu0 0.0
        %2130 = vmatpush1.msra.mxu0 0.0
        %2131 = vmatprep.subr.mxu0 0.0
        %2132 = vmatpush1.msra.mxu0 0.0
        %2133 = vmatprep.subr.mxu0 0.0
        %2134 = vmatpush1.msra.mxu0 0.0
        %2135 = vmatprep.subr.mxu0 0.0
        %2136 = vmatpush1.msra.mxu0 0.0
        %2137 = vmatprep.subr.mxu0 0.0
        %2138 = vmatpush1.msra.mxu0 0.0
        %2139 = vmatprep.subr.mxu0 0.0
        %2140 = vmatpush1.msra.mxu0 0.0
        %2141 = vmatprep.subr.mxu0 0.0
        %2142 = vmatpush1.msra.mxu0 0.0
        %2143 = vmatprep.subr.mxu0 0.0
        %2144 = vmatpush1.msra.mxu0 0.0
        %2145 = vmatprep.subr.mxu0 0.0
        %2146 = vmatpush1.msra.mxu0 0.0
        %2147 = vmatprep.subr.mxu0 0.0
        %2148 = vmatpush1.msra.mxu0 0.0
        %2149 = vmatprep.subr.mxu0 0.0
        %2150 = vmatpush1.msra.mxu0 0.0
        %2151 = vmatprep.subr.mxu0 0.0
        %2152 = vmatpush1.msra.mxu0 0.0
        %2153 = vmatprep.subr.mxu0 0.0
        %2154 = vmatpush1.msra.mxu0 0.0
        %2155 = vmatprep.subr.mxu0 0.0
        %2156 = vmatpush1.msra.mxu0 0.0
        %2157 = vmatprep.subr.mxu0 0.0
        %2158 = vmatpush1.msra.mxu0 0.0
        %2159 = vmatprep.subr.mxu0 0.0
        %2160 = vmatpush1.msra.mxu0 0.0
        %2161 = vmatprep.subr.mxu0 0.0
        %2162 = vmatpush1.msra.mxu0 0.0
        %2163 = vmatprep.subr.mxu0 0.0
        %2164 = vmatpush1.msra.mxu0 0.0
        %2165 = vmatprep.subr.mxu0 0.0
        %2166 = vmatpush1.msra.mxu0 0.0
        %2167 = vmatprep.subr.mxu0 0.0
        %2168 = vmatpush1.msra.mxu0 0.0
        %2169 = vmatprep.subr.mxu0 0.0
        %2170 = vmatpush1.msra.mxu0 0.0
        %2171 = vmatprep.subr.mxu0 0.0
        %2172 = vmatpush1.msra.mxu0 0.0
        %2173 = vmatprep.subr.mxu0 0.0
        %2174 = vmatpush1.msra.mxu0 0.0
        %2175 = vmatprep.subr.mxu0 0.0
        %2176 = vmatpush1.msra.mxu0 0.0
        %2177 = vmatprep.mubr.f32.mxu0 0.0
        %v2178 = vand.u32 %v221, 4294901760
        %2179 = vmatmul.mubr.f32.gmra.mrb[0].mxu0 %v2178
        %v2180 = vpop.f32.mrb[0].mxu0
        %v2181 = vadd.f32 %v2070, %v2180
        %v2182 = vpop.f32.mrb[0].mxu0
        %2183 = vmatprep.mubr.f32.mxu0 0.0
        %v2184 = vand.u32 %v224, 4294901760
        %2185 = vmatmul.mubr.f32.gmra.mrb[0].mxu0 %v2184
        %v2186 = vpop.f32.mrb[0].mxu0
        %v2187 = vadd.f32 %v2080, %v2186
        %v2188 = vpop.f32.mrb[0].mxu0
        %2189 = vmatprep.mubr.f32.mxu0 0.0
        %v2190 = vand.u32 %v227, 4294901760
        %2191 = vmatmul.mubr.f32.gmra.mrb[0].mxu0 %v2190
        %v2192 = vpop.f32.mrb[0].mxu0
        %v2193 = vadd.f32 %v2090, %v2192
        %v2194 = vpop.f32.mrb[0].mxu0
        %2195 = vmatprep.mubr.f32.mxu0 0.0
        %v2196 = vand.u32 %v230, 4294901760
        %2197 = vmatmul.mubr.f32.gmra.mrb[0].mxu0 %v2196
        %v2198 = vpop.f32.mrb[0].mxu0
        %v2199 = vadd.f32 %v2100, %v2198
        %v2200 = vpop.f32.mrb[0].mxu0
        %2201 = vdwg.mxu0
        %2202 = vmatprep.subr.mxu0 0.0
        %v2203 = vand.u32 %v213, 4294901760
        %v2204 = vsub.f32 %v213, %v2203
        %2205 = vmatpush1.msra.mxu0 %v2204
        %2206 = vmatprep.subr.mxu0 0.0
        %v2207 = vand.u32 %v214, 4294901760
        %v2208 = vsub.f32 %v214, %v2207
        %2209 = vmatpush1.msra.mxu0 %v2208
        %2210 = vmatprep.subr.mxu0 0.0
        %2211 = vmatpush1.msra.mxu0 0.0
        %2212 = vmatprep.subr.mxu0 0.0
        %2213 = vmatpush1.msra.mxu0 0.0
        %2214 = vmatprep.subr.mxu0 0.0
        %2215 = vmatpush1.msra.mxu0 0.0
        %2216 = vmatprep.subr.mxu0 0.0
        %2217 = vmatpush1.msra.mxu0 0.0
        %2218 = vmatprep.subr.mxu0 0.0
        %2219 = vmatpush1.msra.mxu0 0.0
        %2220 = vmatprep.subr.mxu0 0.0
        %2221 = vmatpush1.msra.mxu0 0.0
        %2222 = vmatprep.subr.mxu0 0.0
        %2223 = vmatpush1.msra.mxu0 0.0
        %2224 = vmatprep.subr.mxu0 0.0
        %2225 = vmatpush1.msra.mxu0 0.0
        %2226 = vmatprep.subr.mxu0 0.0
        %2227 = vmatpush1.msra.mxu0 0.0
        %2228 = vmatprep.subr.mxu0 0.0
        %2229 = vmatpush1.msra.mxu0 0.0
        %2230 = vmatprep.subr.mxu0 0.0
        %2231 = vmatpush1.msra.mxu0 0.0
        %2232 = vmatprep.subr.mxu0 0.0
        %2233 = vmatpush1.msra.mxu0 0.0
        %2234 = vmatprep.subr.mxu0 0.0
        %2235 = vmatpush1.msra.mxu0 0.0
        %2236 = vmatprep.subr.mxu0 0.0
        %2237 = vmatpush1.msra.mxu0 0.0
        %2238 = vmatprep.subr.mxu0 0.0
        %2239 = vmatpush1.msra.mxu0 0.0
        %2240 = vmatprep.subr.mxu0 0.0
        %2241 = vmatpush1.msra.mxu0 0.0
        %2242 = vmatprep.subr.mxu0 0.0
        %2243 = vmatpush1.msra.mxu0 0.0
        %2244 = vmatprep.subr.mxu0 0.0
        %2245 = vmatpush1.msra.mxu0 0.0
        %2246 = vmatprep.subr.mxu0 0.0
        %2247 = vmatpush1.msra.mxu0 0.0
        %2248 = vmatprep.subr.mxu0 0.0
        %2249 = vmatpush1.msra.mxu0 0.0
        %2250 = vmatprep.subr.mxu0 0.0
        %2251 = vmatpush1.msra.mxu0 0.0
        %2252 = vmatprep.subr.mxu0 0.0
        %2253 = vmatpush1.msra.mxu0 0.0
        %2254 = vmatprep.subr.mxu0 0.0
        %2255 = vmatpush1.msra.mxu0 0.0
        %2256 = vmatprep.subr.mxu0 0.0
        %2257 = vmatpush1.msra.mxu0 0.0
        %2258 = vmatprep.subr.mxu0 0.0
        %2259 = vmatpush1.msra.mxu0 0.0
        %2260 = vmatprep.subr.mxu0 0.0
        %2261 = vmatpush1.msra.mxu0 0.0
        %2262 = vmatprep.subr.mxu0 0.0
        %2263 = vmatpush1.msra.mxu0 0.0
        %2264 = vmatprep.subr.mxu0 0.0
        %2265 = vmatpush1.msra.mxu0 0.0
        %2266 = vmatprep.subr.mxu0 0.0
        %2267 = vmatpush1.msra.mxu0 0.0
        %2268 = vmatprep.subr.mxu0 0.0
        %2269 = vmatpush1.msra.mxu0 0.0
        %2270 = vmatprep.mubr.f32.mxu0 0.0
        %v2271 = vand.u32 %v221, 4294901760
        %v2272 = vsub.f32 %v221, %v2271
        %2273 = vmatmul.mubr.f32.gmra.mrb[0].mxu0 %v2272
        %v2274 = vpop.f32.mrb[0].mxu0
        %v2275 = vadd.f32 %v2181, %v2274
        %v2276 = vpop.f32.mrb[0].mxu0
        %2277 = vmatprep.mubr.f32.mxu0 0.0
        %v2278 = vand.u32 %v224, 4294901760
        %v2279 = vsub.f32 %v224, %v2278
        %2280 = vmatmul.mubr.f32.gmra.mrb[0].mxu0 %v2279
        %v2281 = vpop.f32.mrb[0].mxu0
        %v2282 = vadd.f32 %v2187, %v2281
        %v2283 = vpop.f32.mrb[0].mxu0
        %2284 = vmatprep.mubr.f32.mxu0 0.0
        %v2285 = vand.u32 %v227, 4294901760
        %v2286 = vsub.f32 %v227, %v2285
        %2287 = vmatmul.mubr.f32.gmra.mrb[0].mxu0 %v2286
        %v2288 = vpop.f32.mrb[0].mxu0
        %v2289 = vadd.f32 %v2193, %v2288
        %v2290 = vpop.f32.mrb[0].mxu0
        %2291 = vmatprep.mubr.f32.mxu0 0.0
        %v2292 = vand.u32 %v230, 4294901760
        %v2293 = vsub.f32 %v230, %v2292
        %2294 = vmatmul.mubr.f32.gmra.mrb[0].mxu0 %v2293
        %v2295 = vpop.f32.mrb[0].mxu0
        %v2296 = vadd.f32 %v2199, %v2295
        %v2297 = vpop.f32.mrb[0].mxu0
        %2298 = vdwg.mxu0
        %2299 = vmatprep.subr.mxu0 0.0
        %v2300 = vand.u32 %v213, 4294901760
        %2301 = vmatpush1.msra.mxu0 %v2300
        %2302 = vmatprep.subr.mxu0 0.0
        %v2303 = vand.u32 %v214, 4294901760
        %2304 = vmatpush1.msra.mxu0 %v2303
        %2305 = vmatprep.subr.mxu0 0.0
        %2306 = vmatpush1.msra.mxu0 0.0
        %2307 = vmatprep.subr.mxu0 0.0
        %2308 = vmatpush1.msra.mxu0 0.0
        %2309 = vmatprep.subr.mxu0 0.0
        %2310 = vmatpush1.msra.mxu0 0.0
        %2311 = vmatprep.subr.mxu0 0.0
        %2312 = vmatpush1.msra.mxu0 0.0
        %2313 = vmatprep.subr.mxu0 0.0
        %2314 = vmatpush1.msra.mxu0 0.0
        %2315 = vmatprep.subr.mxu0 0.0
        %2316 = vmatpush1.msra.mxu0 0.0
        %2317 = vmatprep.subr.mxu0 0.0
        %2318 = vmatpush1.msra.mxu0 0.0
        %2319 = vmatprep.subr.mxu0 0.0
        %2320 = vmatpush1.msra.mxu0 0.0
        %2321 = vmatprep.subr.mxu0 0.0
        %2322 = vmatpush1.msra.mxu0 0.0
        %2323 = vmatprep.subr.mxu0 0.0
        %2324 = vmatpush1.msra.mxu0 0.0
        %2325 = vmatprep.subr.mxu0 0.0
        %2326 = vmatpush1.msra.mxu0 0.0
        %2327 = vmatprep.subr.mxu0 0.0
        %2328 = vmatpush1.msra.mxu0 0.0
        %2329 = vmatprep.subr.mxu0 0.0
        %2330 = vmatpush1.msra.mxu0 0.0
        %2331 = vmatprep.subr.mxu0 0.0
        %2332 = vmatpush1.msra.mxu0 0.0
        %2333 = vmatprep.subr.mxu0 0.0
        %2334 = vmatpush1.msra.mxu0 0.0
        %2335 = vmatprep.subr.mxu0 0.0
        %2336 = vmatpush1.msra.mxu0 0.0
        %2337 = vmatprep.subr.mxu0 0.0
        %2338 = vmatpush1.msra.mxu0 0.0
        %2339 = vmatprep.subr.mxu0 0.0
        %2340 = vmatpush1.msra.mxu0 0.0
        %2341 = vmatprep.subr.mxu0 0.0
        %2342 = vmatpush1.msra.mxu0 0.0
        %2343 = vmatprep.subr.mxu0 0.0
        %2344 = vmatpush1.msra.mxu0 0.0
        %2345 = vmatprep.subr.mxu0 0.0
        %2346 = vmatpush1.msra.mxu0 0.0
        %2347 = vmatprep.subr.mxu0 0.0
        %2348 = vmatpush1.msra.mxu0 0.0
        %2349 = vmatprep.subr.mxu0 0.0
        %2350 = vmatpush1.msra.mxu0 0.0
        %2351 = vmatprep.subr.mxu0 0.0
        %2352 = vmatpush1.msra.mxu0 0.0
        %2353 = vmatprep.subr.mxu0 0.0
        %2354 = vmatpush1.msra.mxu0 0.0
        %2355 = vmatprep.subr.mxu0 0.0
        %2356 = vmatpush1.msra.mxu0 0.0
        %2357 = vmatprep.subr.mxu0 0.0
        %2358 = vmatpush1.msra.mxu0 0.0
        %2359 = vmatprep.subr.mxu0 0.0
        %2360 = vmatpush1.msra.mxu0 0.0
        %2361 = vmatprep.subr.mxu0 0.0
        %2362 = vmatpush1.msra.mxu0 0.0
        %2363 = vmatprep.subr.mxu0 0.0
        %2364 = vmatpush1.msra.mxu0 0.0
        %2365 = vmatprep.mubr.f32.mxu0 0.0
        %v2366 = vand.u32 %v221, 4294901760
        %v2367 = vsub.f32 %v221, %v2366
        %v2368 = vand.u32 %v2367, 4294901760
        %2369 = vmatmul.mubr.f32.gmra.mrb[0].mxu0 %v2368
        %v2370 = vpop.f32.mrb[0].mxu0
        %v2371 = vadd.f32 %v2275, %v2370
        %v2372 = vpop.f32.mrb[0].mxu0
        %2373 = vmatprep.mubr.f32.mxu0 0.0
        %v2374 = vand.u32 %v224, 4294901760
        %v2375 = vsub.f32 %v224, %v2374
        %v2376 = vand.u32 %v2375, 4294901760
        %2377 = vmatmul.mubr.f32.gmra.mrb[0].mxu0 %v2376
        %v2378 = vpop.f32.mrb[0].mxu0
        %v2379 = vadd.f32 %v2282, %v2378
        %v2380 = vpop.f32.mrb[0].mxu0
        %2381 = vmatprep.mubr.f32.mxu0 0.0
        %v2382 = vand.u32 %v227, 4294901760
        %v2383 = vsub.f32 %v227, %v2382
        %v2384 = vand.u32 %v2383, 4294901760
        %2385 = vmatmul.mubr.f32.gmra.mrb[0].mxu0 %v2384
        %v2386 = vpop.f32.mrb[0].mxu0
        %v2387 = vadd.f32 %v2289, %v2386
        %v2388 = vpop.f32.mrb[0].mxu0
        %2389 = vmatprep.mubr.f32.mxu0 0.0
        %v2390 = vand.u32 %v230, 4294901760
        %v2391 = vsub.f32 %v230, %v2390
        %v2392 = vand.u32 %v2391, 4294901760
        %2393 = vmatmul.mubr.f32.gmra.mrb[0].mxu0 %v2392
        %v2394 = vpop.f32.mrb[0].mxu0
        %v2395 = vadd.f32 %v2296, %v2394
        %v2396 = vpop.f32.mrb[0].mxu0
        %2397 = vdwg.mxu0
        %2398 = vmatprep.subr.mxu0 0.0
        %v2399 = vand.u32 %v213, 4294901760
        %v2400 = vsub.f32 %v213, %v2399
        %v2401 = vand.u32 %v2400, 4294901760
        %2402 = vmatpush1.msra.mxu0 %v2401
        %2403 = vmatprep.subr.mxu0 0.0
        %v2404 = vand.u32 %v214, 4294901760
        %v2405 = vsub.f32 %v214, %v2404
        %v2406 = vand.u32 %v2405, 4294901760
        %2407 = vmatpush1.msra.mxu0 %v2406
        %2408 = vmatprep.subr.mxu0 0.0
        %2409 = vmatpush1.msra.mxu0 0.0
        %2410 = vmatprep.subr.mxu0 0.0
        %2411 = vmatpush1.msra.mxu0 0.0
        %2412 = vmatprep.subr.mxu0 0.0
        %2413 = vmatpush1.msra.mxu0 0.0
        %2414 = vmatprep.subr.mxu0 0.0
        %2415 = vmatpush1.msra.mxu0 0.0
        %2416 = vmatprep.subr.mxu0 0.0
        %2417 = vmatpush1.msra.mxu0 0.0
        %2418 = vmatprep.subr.mxu0 0.0
        %2419 = vmatpush1.msra.mxu0 0.0
        %2420 = vmatprep.subr.mxu0 0.0
        %2421 = vmatpush1.msra.mxu0 0.0
        %2422 = vmatprep.subr.mxu0 0.0
        %2423 = vmatpush1.msra.mxu0 0.0
        %2424 = vmatprep.subr.mxu0 0.0
        %2425 = vmatpush1.msra.mxu0 0.0
        %2426 = vmatprep.subr.mxu0 0.0
        %2427 = vmatpush1.msra.mxu0 0.0
        %2428 = vmatprep.subr.mxu0 0.0
        %2429 = vmatpush1.msra.mxu0 0.0
        %2430 = vmatprep.subr.mxu0 0.0
        %2431 = vmatpush1.msra.mxu0 0.0
        %2432 = vmatprep.subr.mxu0 0.0
        %2433 = vmatpush1.msra.mxu0 0.0
        %2434 = vmatprep.subr.mxu0 0.0
        %2435 = vmatpush1.msra.mxu0 0.0
        %2436 = vmatprep.subr.mxu0 0.0
        %2437 = vmatpush1.msra.mxu0 0.0
        %2438 = vmatprep.subr.mxu0 0.0
        %2439 = vmatpush1.msra.mxu0 0.0
        %2440 = vmatprep.subr.mxu0 0.0
        %2441 = vmatpush1.msra.mxu0 0.0
        %2442 = vmatprep.subr.mxu0 0.0
        %2443 = vmatpush1.msra.mxu0 0.0
        %2444 = vmatprep.subr.mxu0 0.0
        %2445 = vmatpush1.msra.mxu0 0.0
        %2446 = vmatprep.subr.mxu0 0.0
        %2447 = vmatpush1.msra.mxu0 0.0
        %2448 = vmatprep.subr.mxu0 0.0
        %2449 = vmatpush1.msra.mxu0 0.0
        %2450 = vmatprep.subr.mxu0 0.0
        %2451 = vmatpush1.msra.mxu0 0.0
        %2452 = vmatprep.subr.mxu0 0.0
        %2453 = vmatpush1.msra.mxu0 0.0
        %2454 = vmatprep.subr.mxu0 0.0
        %2455 = vmatpush1.msra.mxu0 0.0
        %2456 = vmatprep.subr.mxu0 0.0
        %2457 = vmatpush1.msra.mxu0 0.0
        %2458 = vmatprep.subr.mxu0 0.0
        %2459 = vmatpush1.msra.mxu0 0.0
        %2460 = vmatprep.subr.mxu0 0.0
        %2461 = vmatpush1.msra.mxu0 0.0
        %2462 = vmatprep.subr.mxu0 0.0
        %2463 = vmatpush1.msra.mxu0 0.0
        %2464 = vmatprep.subr.mxu0 0.0
        %2465 = vmatpush1.msra.mxu0 0.0
        %2466 = vmatprep.subr.mxu0 0.0
        %2467 = vmatpush1.msra.mxu0 0.0
        %2468 = vmatprep.mubr.f32.mxu0 0.0
        %v2469 = vand.u32 %v221, 4294901760
        %2470 = vmatmul.mubr.f32.gmra.mrb[0].mxu0 %v2469
        %v2471 = vpop.f32.mrb[0].mxu0
        %v2472 = vadd.f32 %v2371, %v2471
        %v2473 = vpop.f32.mrb[0].mxu0
        %2474 = vmatprep.mubr.f32.mxu0 0.0
        %v2475 = vand.u32 %v224, 4294901760
        %2476 = vmatmul.mubr.f32.gmra.mrb[0].mxu0 %v2475
        %v2477 = vpop.f32.mrb[0].mxu0
        %v2478 = vadd.f32 %v2379, %v2477
        %v2479 = vpop.f32.mrb[0].mxu0
        %2480 = vmatprep.mubr.f32.mxu0 0.0
        %v2481 = vand.u32 %v227, 4294901760
        %2482 = vmatmul.mubr.f32.gmra.mrb[0].mxu0 %v2481
        %v2483 = vpop.f32.mrb[0].mxu0
        %v2484 = vadd.f32 %v2387, %v2483
        %v2485 = vpop.f32.mrb[0].mxu0
        %2486 = vmatprep.mubr.f32.mxu0 0.0
        %v2487 = vand.u32 %v230, 4294901760
        %2488 = vmatmul.mubr.f32.gmra.mrb[0].mxu0 %v2487
        %v2489 = vpop.f32.mrb[0].mxu0
        %v2490 = vadd.f32 %v2395, %v2489
        %v2491 = vpop.f32.mrb[0].mxu0
        %2492 = vdwg.mxu0
        %2493 = vmatprep.subr.mxu0 0.0
        %v2494 = vand.u32 %v213, 4294901760
        %2495 = vmatpush1.msra.mxu0 %v2494
        %2496 = vmatprep.subr.mxu0 0.0
        %v2497 = vand.u32 %v214, 4294901760
        %2498 = vmatpush1.msra.mxu0 %v2497
        %2499 = vmatprep.subr.mxu0 0.0
        %2500 = vmatpush1.msra.mxu0 0.0
        %2501 = vmatprep.subr.mxu0 0.0
        %2502 = vmatpush1.msra.mxu0 0.0
        %2503 = vmatprep.subr.mxu0 0.0
        %2504 = vmatpush1.msra.mxu0 0.0
        %2505 = vmatprep.subr.mxu0 0.0
        %2506 = vmatpush1.msra.mxu0 0.0
        %2507 = vmatprep.subr.mxu0 0.0
        %2508 = vmatpush1.msra.mxu0 0.0
        %2509 = vmatprep.subr.mxu0 0.0
        %2510 = vmatpush1.msra.mxu0 0.0
        %2511 = vmatprep.subr.mxu0 0.0
        %2512 = vmatpush1.msra.mxu0 0.0
        %2513 = vmatprep.subr.mxu0 0.0
        %2514 = vmatpush1.msra.mxu0 0.0
        %2515 = vmatprep.subr.mxu0 0.0
        %2516 = vmatpush1.msra.mxu0 0.0
        %2517 = vmatprep.subr.mxu0 0.0
        %2518 = vmatpush1.msra.mxu0 0.0
        %2519 = vmatprep.subr.mxu0 0.0
        %2520 = vmatpush1.msra.mxu0 0.0
        %2521 = vmatprep.subr.mxu0 0.0
        %2522 = vmatpush1.msra.mxu0 0.0
        %2523 = vmatprep.subr.mxu0 0.0
        %2524 = vmatpush1.msra.mxu0 0.0
        %2525 = vmatprep.subr.mxu0 0.0
        %2526 = vmatpush1.msra.mxu0 0.0
        %2527 = vmatprep.subr.mxu0 0.0
        %2528 = vmatpush1.msra.mxu0 0.0
        %2529 = vmatprep.subr.mxu0 0.0
        %2530 = vmatpush1.msra.mxu0 0.0
        %2531 = vmatprep.subr.mxu0 0.0
        %2532 = vmatpush1.msra.mxu0 0.0
        %2533 = vmatprep.subr.mxu0 0.0
        %2534 = vmatpush1.msra.mxu0 0.0
        %2535 = vmatprep.subr.mxu0 0.0
        %2536 = vmatpush1.msra.mxu0 0.0
        %2537 = vmatprep.subr.mxu0 0.0
        %2538 = vmatpush1.msra.mxu0 0.0
        %2539 = vmatprep.subr.mxu0 0.0
        %2540 = vmatpush1.msra.mxu0 0.0
        %2541 = vmatprep.subr.mxu0 0.0
        %2542 = vmatpush1.msra.mxu0 0.0
        %2543 = vmatprep.subr.mxu0 0.0
        %2544 = vmatpush1.msra.mxu0 0.0
        %2545 = vmatprep.subr.mxu0 0.0
        %2546 = vmatpush1.msra.mxu0 0.0
        %2547 = vmatprep.subr.mxu0 0.0
        %2548 = vmatpush1.msra.mxu0 0.0
        %2549 = vmatprep.subr.mxu0 0.0
        %2550 = vmatpush1.msra.mxu0 0.0
        %2551 = vmatprep.subr.mxu0 0.0
        %2552 = vmatpush1.msra.mxu0 0.0
        %2553 = vmatprep.subr.mxu0 0.0
        %2554 = vmatpush1.msra.mxu0 0.0
        %2555 = vmatprep.subr.mxu0 0.0
        %2556 = vmatpush1.msra.mxu0 0.0
        %2557 = vmatprep.subr.mxu0 0.0
        %2558 = vmatpush1.msra.mxu0 0.0
        %2559 = vmatprep.mubr.f32.mxu0 0.0
        %v2560 = vand.u32 %v221, 4294901760
        %2561 = vmatmul.mubr.f32.gmra.mrb[0].mxu0 %v2560
        %v2562 = vpop.f32.mrb[0].mxu0
        %v2563 = vadd.f32 %v2472, %v2562
        %v2564 = vpop.f32.mrb[0].mxu0
        %2565 = vmatprep.mubr.f32.mxu0 0.0
        %v2566 = vand.u32 %v224, 4294901760
        %2567 = vmatmul.mubr.f32.gmra.mrb[0].mxu0 %v2566
        %v2568 = vpop.f32.mrb[0].mxu0
        %v2569 = vadd.f32 %v2478, %v2568
        %v2570 = vpop.f32.mrb[0].mxu0
        %2571 = vmatprep.mubr.f32.mxu0 0.0
        %v2572 = vand.u32 %v227, 4294901760
        %2573 = vmatmul.mubr.f32.gmra.mrb[0].mxu0 %v2572
        %v2574 = vpop.f32.mrb[0].mxu0
        %v2575 = vadd.f32 %v2484, %v2574
        %v2576 = vpop.f32.mrb[0].mxu0
        %2577 = vmatprep.mubr.f32.mxu0 0.0
        %v2578 = vand.u32 %v230, 4294901760
        %2579 = vmatmul.mubr.f32.gmra.mrb[0].mxu0 %v2578
        %v2580 = vpop.f32.mrb[0].mxu0
        %v2581 = vadd.f32 %v2490, %v2580
        %v2582 = vpop.f32.mrb[0].mxu0
        %2583 = vdwg.mxu0
        %v2584 = vld [vmem:[#allocation5] sm:$0xff]
        %v2585 = vld [vmem:[#allocation5 + $0x8] sm:$0xff]
        %v2586 = vld [vmem:[#allocation5 + $0x10] sm:$0xff]
        %v2587 = vld [vmem:[#allocation5 + $0x18] sm:$0xff]
        %v2588 = vld [vmem:[#allocation5 + $0x20] sm:$0xff]
        %v2589 = vld [vmem:[#allocation5 + $0x28] sm:$0xff]
        %v2590 = vld [vmem:[#allocation5 + $0x30] sm:$0xff]
        %v2591 = vld [vmem:[#allocation5 + $0x38] sm:$0xff]
        %v2592 = vld [vmem:[#allocation5 + $0x40] sm:$0xff]
        %v2593 = vld [vmem:[#allocation5 + $0x48] sm:$0xff]
        %v2594 = vld [vmem:[#allocation5 + $0x50] sm:$0xff]
        %v2595 = vld [vmem:[#allocation5 + $0x58] sm:$0xff]
        %v2596 = vld [vmem:[#allocation5 + $0x60] sm:$0xff]
        %v2597 = vld [vmem:[#allocation5 + $0x68] sm:$0xff]
        %v2598 = vld [vmem:[#allocation5 + $0x70] sm:$0xff]
        %v2599 = vld [vmem:[#allocation5 + $0x78] sm:$0xff]
        %v2600 = vld [vmem:[#allocation5 + $0x80] sm:$0xff]
        %v2601 = vld [vmem:[#allocation5 + $0x88] sm:$0xff]
        %v2602 = vld [vmem:[#allocation5 + $0x90] sm:$0xff]
        %v2603 = vld [vmem:[#allocation5 + $0x98] sm:$0xff]
        %v2604 = vld [vmem:[#allocation5 + $0xa0] sm:$0xff]
        %v2605 = vld [vmem:[#allocation5 + $0xa8] sm:$0xff]
        %v2606 = vld [vmem:[#allocation5 + $0xb0] sm:$0xff]
        %v2607 = vld [vmem:[#allocation5 + $0xb8] sm:$0xff]
        %v2608 = vld [vmem:[#allocation5 + $0xc0] sm:$0xff]
        %v2609 = vld [vmem:[#allocation5 + $0xc8] sm:$0xff]
        %v2610 = vld [vmem:[#allocation5 + $0xd0] sm:$0xff]
        %v2611 = vld [vmem:[#allocation5 + $0xd8] sm:$0xff]
        %v2612 = vld [vmem:[#allocation5 + $0xe0] sm:$0xff]
        %v2613 = vld [vmem:[#allocation5 + $0xe8] sm:$0xff]
        %v2614 = vld [vmem:[#allocation5 + $0xf0] sm:$0xff]
        %v2615 = vld [vmem:[#allocation5 + $0xf8] sm:$0xff]
        %v2616 = vand.u32 %v2585, 4294901760
        %2617 = vmatprep.subr.mxu0 %v2616
        %v2618 = vand.u32 %v2584, 4294901760
        %2619 = vmatpush1.msra.mxu0 %v2618
        %v2620 = vand.u32 %v2587, 4294901760
        %2621 = vmatprep.subr.mxu0 %v2620
        %v2622 = vand.u32 %v2586, 4294901760
        %2623 = vmatpush1.msra.mxu0 %v2622
        %v2624 = vand.u32 %v2589, 4294901760
        %2625 = vmatprep.subr.mxu0 %v2624
        %v2626 = vand.u32 %v2588, 4294901760
        %2627 = vmatpush1.msra.mxu0 %v2626
        %v2628 = vand.u32 %v2591, 4294901760
        %2629 = vmatprep.subr.mxu0 %v2628
        %v2630 = vand.u32 %v2590, 4294901760
        %2631 = vmatpush1.msra.mxu0 %v2630
        %v2632 = vand.u32 %v2593, 4294901760
        %2633 = vmatprep.subr.mxu0 %v2632
        %v2634 = vand.u32 %v2592, 4294901760
        %2635 = vmatpush1.msra.mxu0 %v2634
        %v2636 = vand.u32 %v2595, 4294901760
        %2637 = vmatprep.subr.mxu0 %v2636
        %v2638 = vand.u32 %v2594, 4294901760
        %2639 = vmatpush1.msra.mxu0 %v2638
        %v2640 = vand.u32 %v2597, 4294901760
        %2641 = vmatprep.subr.mxu0 %v2640
        %v2642 = vand.u32 %v2596, 4294901760
        %2643 = vmatpush1.msra.mxu0 %v2642
        %v2644 = vand.u32 %v2599, 4294901760
        %2645 = vmatprep.subr.mxu0 %v2644
        %v2646 = vand.u32 %v2598, 4294901760
        %2647 = vmatpush1.msra.mxu0 %v2646
        %v2648 = vand.u32 %v2601, 4294901760
        %2649 = vmatprep.subr.mxu0 %v2648
        %v2650 = vand.u32 %v2600, 4294901760
        %2651 = vmatpush1.msra.mxu0 %v2650
        %v2652 = vand.u32 %v2603, 4294901760
        %2653 = vmatprep.subr.mxu0 %v2652
        %v2654 = vand.u32 %v2602, 4294901760
        %2655 = vmatpush1.msra.mxu0 %v2654
        %v2656 = vand.u32 %v2605, 4294901760
        %2657 = vmatprep.subr.mxu0 %v2656
        %v2658 = vand.u32 %v2604, 4294901760
        %2659 = vmatpush1.msra.mxu0 %v2658
        %v2660 = vand.u32 %v2607, 4294901760
        %2661 = vmatprep.subr.mxu0 %v2660
        %v2662 = vand.u32 %v2606, 4294901760
        %2663 = vmatpush1.msra.mxu0 %v2662
        %v2664 = vand.u32 %v2609, 4294901760
        %2665 = vmatprep.subr.mxu0 %v2664
        %v2666 = vand.u32 %v2608, 4294901760
        %2667 = vmatpush1.msra.mxu0 %v2666
        %v2668 = vand.u32 %v2611, 4294901760
        %2669 = vmatprep.subr.mxu0 %v2668
        %v2670 = vand.u32 %v2610, 4294901760
        %2671 = vmatpush1.msra.mxu0 %v2670
        %v2672 = vand.u32 %v2613, 4294901760
        %2673 = vmatprep.subr.mxu0 %v2672
        %v2674 = vand.u32 %v2612, 4294901760
        %2675 = vmatpush1.msra.mxu0 %v2674
        %v2676 = vand.u32 %v2615, 4294901760
        %2677 = vmatprep.subr.mxu0 %v2676
        %v2678 = vand.u32 %v2614, 4294901760
        %2679 = vmatpush1.msra.mxu0 %v2678
        %2680 = vmatprep.subr.mxu0 0.0
        %2681 = vmatpush1.msra.mxu0 0.0
        %2682 = vmatprep.subr.mxu0 0.0
        %2683 = vmatpush1.msra.mxu0 0.0
        %2684 = vmatprep.subr.mxu0 0.0
        %2685 = vmatpush1.msra.mxu0 0.0
        %2686 = vmatprep.subr.mxu0 0.0
        %2687 = vmatpush1.msra.mxu0 0.0
        %2688 = vmatprep.subr.mxu0 0.0
        %2689 = vmatpush1.msra.mxu0 0.0
        %2690 = vmatprep.subr.mxu0 0.0
        %2691 = vmatpush1.msra.mxu0 0.0
        %2692 = vmatprep.subr.mxu0 0.0
        %2693 = vmatpush1.msra.mxu0 0.0
        %2694 = vmatprep.subr.mxu0 0.0
        %2695 = vmatpush1.msra.mxu0 0.0
        %2696 = vmatprep.subr.mxu0 0.0
        %2697 = vmatpush1.msra.mxu0 0.0
        %2698 = vmatprep.subr.mxu0 0.0
        %2699 = vmatpush1.msra.mxu0 0.0
        %2700 = vmatprep.subr.mxu0 0.0
        %2701 = vmatpush1.msra.mxu0 0.0
        %2702 = vmatprep.subr.mxu0 0.0
        %2703 = vmatpush1.msra.mxu0 0.0
        %2704 = vmatprep.subr.mxu0 0.0
        %2705 = vmatpush1.msra.mxu0 0.0
        %2706 = vmatprep.subr.mxu0 0.0
        %2707 = vmatpush1.msra.mxu0 0.0
        %2708 = vmatprep.subr.mxu0 0.0
        %2709 = vmatpush1.msra.mxu0 0.0
        %2710 = vmatprep.subr.mxu0 0.0
        %2711 = vmatpush1.msra.mxu0 0.0
        %2712 = vmatprep.mubr.f32.mxu0 0.0
        %v2713 = vand.u32 %v799, 4294901760
        %v2714 = vsub.f32 %v799, %v2713
        %v2715 = vand.u32 %v2714, 4294901760
        %v2716 = vsub.f32 %v2714, %v2715
        %v2717 = vand.u32 %v2716, 4294901760
        %2718 = vmatmul.mubr.f32.gmra.mrb[0].mxu0 %v2717
        %v2719 = vpop.f32.mrb[0].mxu0
        %v2720 = vadd.f32 0.0, %v2719
        %v2721 = vpop.f32.mrb[0].mxu0
        %v2722 = vadd.f32 0.0, %v2721
        %2723 = vmatprep.mubr.f32.mxu0 0.0
        %v2724 = vand.u32 %v805, 4294901760
        %v2725 = vsub.f32 %v805, %v2724
        %v2726 = vand.u32 %v2725, 4294901760
        %v2727 = vsub.f32 %v2725, %v2726
        %v2728 = vand.u32 %v2727, 4294901760
        %2729 = vmatmul.mubr.f32.gmra.mrb[0].mxu0 %v2728
        %v2730 = vpop.f32.mrb[0].mxu0
        %v2731 = vadd.f32 0.0, %v2730
        %v2732 = vpop.f32.mrb[0].mxu0
        %v2733 = vadd.f32 0.0, %v2732
        %2734 = vmatprep.mubr.f32.mxu0 0.0
        %v2735 = vand.u32 %v811, 4294901760
        %v2736 = vsub.f32 %v811, %v2735
        %v2737 = vand.u32 %v2736, 4294901760
        %v2738 = vsub.f32 %v2736, %v2737
        %v2739 = vand.u32 %v2738, 4294901760
        %2740 = vmatmul.mubr.f32.gmra.mrb[0].mxu0 %v2739
        %v2741 = vpop.f32.mrb[0].mxu0
        %v2742 = vadd.f32 0.0, %v2741
        %v2743 = vpop.f32.mrb[0].mxu0
        %v2744 = vadd.f32 0.0, %v2743
        %2745 = vmatprep.mubr.f32.mxu0 0.0
        %v2746 = vand.u32 %v817, 4294901760
        %v2747 = vsub.f32 %v817, %v2746
        %v2748 = vand.u32 %v2747, 4294901760
        %v2749 = vsub.f32 %v2747, %v2748
        %v2750 = vand.u32 %v2749, 4294901760
        %2751 = vmatmul.mubr.f32.gmra.mrb[0].mxu0 %v2750
        %v2752 = vpop.f32.mrb[0].mxu0
        %v2753 = vadd.f32 0.0, %v2752
        %v2754 = vpop.f32.mrb[0].mxu0
        %v2755 = vadd.f32 0.0, %v2754
        %2756 = vmatprep.mubr.f32.mxu0 0.0
        %v2757 = vand.u32 %v1387, 4294901760
        %v2758 = vsub.f32 %v1387, %v2757
        %v2759 = vand.u32 %v2758, 4294901760
        %v2760 = vsub.f32 %v2758, %v2759
        %v2761 = vand.u32 %v2760, 4294901760
        %2762 = vmatmul.mubr.f32.gmra.mrb[0].mxu0 %v2761
        %v2763 = vpop.f32.mrb[0].mxu0
        %v2764 = vadd.f32 0.0, %v2763
        %v2765 = vpop.f32.mrb[0].mxu0
        %v2766 = vadd.f32 0.0, %v2765
        %2767 = vmatprep.mubr.f32.mxu0 0.0
        %v2768 = vand.u32 %v1393, 4294901760
        %v2769 = vsub.f32 %v1393, %v2768
        %v2770 = vand.u32 %v2769, 4294901760
        %v2771 = vsub.f32 %v2769, %v2770
        %v2772 = vand.u32 %v2771, 4294901760
        %2773 = vmatmul.mubr.f32.gmra.mrb[0].mxu0 %v2772
        %v2774 = vpop.f32.mrb[0].mxu0
        %v2775 = vadd.f32 0.0, %v2774
        %v2776 = vpop.f32.mrb[0].mxu0
        %v2777 = vadd.f32 0.0, %v2776
        %2778 = vmatprep.mubr.f32.mxu0 0.0
        %v2779 = vand.u32 %v1399, 4294901760
        %v2780 = vsub.f32 %v1399, %v2779
        %v2781 = vand.u32 %v2780, 4294901760
        %v2782 = vsub.f32 %v2780, %v2781
        %v2783 = vand.u32 %v2782, 4294901760
        %2784 = vmatmul.mubr.f32.gmra.mrb[0].mxu0 %v2783
        %v2785 = vpop.f32.mrb[0].mxu0
        %v2786 = vadd.f32 0.0, %v2785
        %v2787 = vpop.f32.mrb[0].mxu0
        %v2788 = vadd.f32 0.0, %v2787
        %2789 = vmatprep.mubr.f32.mxu0 0.0
        %v2790 = vand.u32 %v1405, 4294901760
        %v2791 = vsub.f32 %v1405, %v2790
        %v2792 = vand.u32 %v2791, 4294901760
        %v2793 = vsub.f32 %v2791, %v2792
        %v2794 = vand.u32 %v2793, 4294901760
        %2795 = vmatmul.mubr.f32.gmra.mrb[0].mxu0 %v2794
        %v2796 = vpop.f32.mrb[0].mxu0
        %v2797 = vadd.f32 0.0, %v2796
        %v2798 = vpop.f32.mrb[0].mxu0
        %v2799 = vadd.f32 0.0, %v2798
        %2800 = vmatprep.mubr.f32.mxu0 0.0
        %v2801 = vand.u32 %v1975, 4294901760
        %v2802 = vsub.f32 %v1975, %v2801
        %v2803 = vand.u32 %v2802, 4294901760
        %v2804 = vsub.f32 %v2802, %v2803
        %v2805 = vand.u32 %v2804, 4294901760
        %2806 = vmatmul.mubr.f32.gmra.mrb[0].mxu0 %v2805
        %v2807 = vpop.f32.mrb[0].mxu0
        %v2808 = vadd.f32 0.0, %v2807
        %v2809 = vpop.f32.mrb[0].mxu0
        %v2810 = vadd.f32 0.0, %v2809
        %2811 = vmatprep.mubr.f32.mxu0 0.0
        %v2812 = vand.u32 %v1981, 4294901760
        %v2813 = vsub.f32 %v1981, %v2812
        %v2814 = vand.u32 %v2813, 4294901760
        %v2815 = vsub.f32 %v2813, %v2814
        %v2816 = vand.u32 %v2815, 4294901760
        %2817 = vmatmul.mubr.f32.gmra.mrb[0].mxu0 %v2816
        %v2818 = vpop.f32.mrb[0].mxu0
        %v2819 = vadd.f32 0.0, %v2818
        %v2820 = vpop.f32.mrb[0].mxu0
        %v2821 = vadd.f32 0.0, %v2820
        %2822 = vmatprep.mubr.f32.mxu0 0.0
        %v2823 = vand.u32 %v1987, 4294901760
        %v2824 = vsub.f32 %v1987, %v2823
        %v2825 = vand.u32 %v2824, 4294901760
        %v2826 = vsub.f32 %v2824, %v2825
        %v2827 = vand.u32 %v2826, 4294901760
        %2828 = vmatmul.mubr.f32.gmra.mrb[0].mxu0 %v2827
        %v2829 = vpop.f32.mrb[0].mxu0
        %v2830 = vadd.f32 0.0, %v2829
        %v2831 = vpop.f32.mrb[0].mxu0
        %v2832 = vadd.f32 0.0, %v2831
        %2833 = vmatprep.mubr.f32.mxu0 0.0
        %v2834 = vand.u32 %v1993, 4294901760
        %v2835 = vsub.f32 %v1993, %v2834
        %v2836 = vand.u32 %v2835, 4294901760
        %v2837 = vsub.f32 %v2835, %v2836
        %v2838 = vand.u32 %v2837, 4294901760
        %2839 = vmatmul.mubr.f32.gmra.mrb[0].mxu0 %v2838
        %v2840 = vpop.f32.mrb[0].mxu0
        %v2841 = vadd.f32 0.0, %v2840
        %v2842 = vpop.f32.mrb[0].mxu0
        %v2843 = vadd.f32 0.0, %v2842
        %2844 = vmatprep.mubr.f32.mxu0 0.0
        %v2845 = vand.u32 %v2563, 4294901760
        %v2846 = vsub.f32 %v2563, %v2845
        %v2847 = vand.u32 %v2846, 4294901760
        %v2848 = vsub.f32 %v2846, %v2847
        %v2849 = vand.u32 %v2848, 4294901760
        %2850 = vmatmul.mubr.f32.gmra.mrb[0].mxu0 %v2849
        %v2851 = vpop.f32.mrb[0].mxu0
        %v2852 = vadd.f32 0.0, %v2851
        %v2853 = vpop.f32.mrb[0].mxu0
        %v2854 = vadd.f32 0.0, %v2853
        %2855 = vmatprep.mubr.f32.mxu0 0.0
        %v2856 = vand.u32 %v2569, 4294901760
        %v2857 = vsub.f32 %v2569, %v2856
        %v2858 = vand.u32 %v2857, 4294901760
        %v2859 = vsub.f32 %v2857, %v2858
        %v2860 = vand.u32 %v2859, 4294901760
        %2861 = vmatmul.mubr.f32.gmra.mrb[0].mxu0 %v2860
        %v2862 = vpop.f32.mrb[0].mxu0
        %v2863 = vadd.f32 0.0, %v2862
        %v2864 = vpop.f32.mrb[0].mxu0
        %v2865 = vadd.f32 0.0, %v2864
        %2866 = vmatprep.mubr.f32.mxu0 0.0
        %v2867 = vand.u32 %v2575, 4294901760
        %v2868 = vsub.f32 %v2575, %v2867
        %v2869 = vand.u32 %v2868, 4294901760
        %v2870 = vsub.f32 %v2868, %v2869
        %v2871 = vand.u32 %v2870, 4294901760
        %2872 = vmatmul.mubr.f32.gmra.mrb[0].mxu0 %v2871
        %v2873 = vpop.f32.mrb[0].mxu0
        %v2874 = vadd.f32 0.0, %v2873
        %v2875 = vpop.f32.mrb[0].mxu0
        %v2876 = vadd.f32 0.0, %v2875
        %2877 = vmatprep.mubr.f32.mxu0 0.0
        %v2878 = vand.u32 %v2581, 4294901760
        %v2879 = vsub.f32 %v2581, %v2878
        %v2880 = vand.u32 %v2879, 4294901760
        %v2881 = vsub.f32 %v2879, %v2880
        %v2882 = vand.u32 %v2881, 4294901760
        %2883 = vmatmul.mubr.f32.gmra.mrb[0].mxu0 %v2882
        %v2884 = vpop.f32.mrb[0].mxu0
        %v2885 = vadd.f32 0.0, %v2884
        %v2886 = vpop.f32.mrb[0].mxu0
        %v2887 = vadd.f32 0.0, %v2886
        %2888 = vdwg.mxu0
        %v2889 = vand.u32 %v2585, 4294901760
        %v2890 = vsub.f32 %v2585, %v2889
        %v2891 = vand.u32 %v2890, 4294901760
        %v2892 = vsub.f32 %v2890, %v2891
        %v2893 = vand.u32 %v2892, 4294901760
        %2894 = vmatprep.subr.mxu0 %v2893
        %v2895 = vand.u32 %v2584, 4294901760
        %v2896 = vsub.f32 %v2584, %v2895
        %v2897 = vand.u32 %v2896, 4294901760
        %v2898 = vsub.f32 %v2896, %v2897
        %v2899 = vand.u32 %v2898, 4294901760
        %2900 = vmatpush1.msra.mxu0 %v2899
        %v2901 = vand.u32 %v2587, 4294901760
        %v2902 = vsub.f32 %v2587, %v2901
        %v2903 = vand.u32 %v2902, 4294901760
        %v2904 = vsub.f32 %v2902, %v2903
        %v2905 = vand.u32 %v2904, 4294901760
        %2906 = vmatprep.subr.mxu0 %v2905
        %v2907 = vand.u32 %v2586, 4294901760
        %v2908 = vsub.f32 %v2586, %v2907
        %v2909 = vand.u32 %v2908, 4294901760
        %v2910 = vsub.f32 %v2908, %v2909
        %v2911 = vand.u32 %v2910, 4294901760
        %2912 = vmatpush1.msra.mxu0 %v2911
        %v2913 = vand.u32 %v2589, 4294901760
        %v2914 = vsub.f32 %v2589, %v2913
        %v2915 = vand.u32 %v2914, 4294901760
        %v2916 = vsub.f32 %v2914, %v2915
        %v2917 = vand.u32 %v2916, 4294901760
        %2918 = vmatprep.subr.mxu0 %v2917
        %v2919 = vand.u32 %v2588, 4294901760
        %v2920 = vsub.f32 %v2588, %v2919
        %v2921 = vand.u32 %v2920, 4294901760
        %v2922 = vsub.f32 %v2920, %v2921
        %v2923 = vand.u32 %v2922, 4294901760
        %2924 = vmatpush1.msra.mxu0 %v2923
        %v2925 = vand.u32 %v2591, 4294901760
        %v2926 = vsub.f32 %v2591, %v2925
        %v2927 = vand.u32 %v2926, 4294901760
        %v2928 = vsub.f32 %v2926, %v2927
        %v2929 = vand.u32 %v2928, 4294901760
        %2930 = vmatprep.subr.mxu0 %v2929
        %v2931 = vand.u32 %v2590, 4294901760
        %v2932 = vsub.f32 %v2590, %v2931
        %v2933 = vand.u32 %v2932, 4294901760
        %v2934 = vsub.f32 %v2932, %v2933
        %v2935 = vand.u32 %v2934, 4294901760
        %2936 = vmatpush1.msra.mxu0 %v2935
        %v2937 = vand.u32 %v2593, 4294901760
        %v2938 = vsub.f32 %v2593, %v2937
        %v2939 = vand.u32 %v2938, 4294901760
        %v2940 = vsub.f32 %v2938, %v2939
        %v2941 = vand.u32 %v2940, 4294901760
        %2942 = vmatprep.subr.mxu0 %v2941
        %v2943 = vand.u32 %v2592, 4294901760
        %v2944 = vsub.f32 %v2592, %v2943
        %v2945 = vand.u32 %v2944, 4294901760
        %v2946 = vsub.f32 %v2944, %v2945
        %v2947 = vand.u32 %v2946, 4294901760
        %2948 = vmatpush1.msra.mxu0 %v2947
        %v2949 = vand.u32 %v2595, 4294901760
        %v2950 = vsub.f32 %v2595, %v2949
        %v2951 = vand.u32 %v2950, 4294901760
        %v2952 = vsub.f32 %v2950, %v2951
        %v2953 = vand.u32 %v2952, 4294901760
        %2954 = vmatprep.subr.mxu0 %v2953
        %v2955 = vand.u32 %v2594, 4294901760
        %v2956 = vsub.f32 %v2594, %v2955
        %v2957 = vand.u32 %v2956, 4294901760
        %v2958 = vsub.f32 %v2956, %v2957
        %v2959 = vand.u32 %v2958, 4294901760
        %2960 = vmatpush1.msra.mxu0 %v2959
        %v2961 = vand.u32 %v2597, 4294901760
        %v2962 = vsub.f32 %v2597, %v2961
        %v2963 = vand.u32 %v2962, 4294901760
        %v2964 = vsub.f32 %v2962, %v2963
        %v2965 = vand.u32 %v2964, 4294901760
        %2966 = vmatprep.subr.mxu0 %v2965
        %v2967 = vand.u32 %v2596, 4294901760
        %v2968 = vsub.f32 %v2596, %v2967
        %v2969 = vand.u32 %v2968, 4294901760
        %v2970 = vsub.f32 %v2968, %v2969
        %v2971 = vand.u32 %v2970, 4294901760
        %2972 = vmatpush1.msra.mxu0 %v2971
        %v2973 = vand.u32 %v2599, 4294901760
        %v2974 = vsub.f32 %v2599, %v2973
        %v2975 = vand.u32 %v2974, 4294901760
        %v2976 = vsub.f32 %v2974, %v2975
        %v2977 = vand.u32 %v2976, 4294901760
        %2978 = vmatprep.subr.mxu0 %v2977
        %v2979 = vand.u32 %v2598, 4294901760
        %v2980 = vsub.f32 %v2598, %v2979
        %v2981 = vand.u32 %v2980, 4294901760
        %v2982 = vsub.f32 %v2980, %v2981
        %v2983 = vand.u32 %v2982, 4294901760
        %2984 = vmatpush1.msra.mxu0 %v2983
        %v2985 = vand.u32 %v2601, 4294901760
        %v2986 = vsub.f32 %v2601, %v2985
        %v2987 = vand.u32 %v2986, 4294901760
        %v2988 = vsub.f32 %v2986, %v2987
        %v2989 = vand.u32 %v2988, 4294901760
        %2990 = vmatprep.subr.mxu0 %v2989
        %v2991 = vand.u32 %v2600, 4294901760
        %v2992 = vsub.f32 %v2600, %v2991
        %v2993 = vand.u32 %v2992, 4294901760
        %v2994 = vsub.f32 %v2992, %v2993
        %v2995 = vand.u32 %v2994, 4294901760
        %2996 = vmatpush1.msra.mxu0 %v2995
        %v2997 = vand.u32 %v2603, 4294901760
        %v2998 = vsub.f32 %v2603, %v2997
        %v2999 = vand.u32 %v2998, 4294901760
        %v3000 = vsub.f32 %v2998, %v2999
        %v3001 = vand.u32 %v3000, 4294901760
        %3002 = vmatprep.subr.mxu0 %v3001
        %v3003 = vand.u32 %v2602, 4294901760
        %v3004 = vsub.f32 %v2602, %v3003
        %v3005 = vand.u32 %v3004, 4294901760
        %v3006 = vsub.f32 %v3004, %v3005
        %v3007 = vand.u32 %v3006, 4294901760
        %3008 = vmatpush1.msra.mxu0 %v3007
        %v3009 = vand.u32 %v2605, 4294901760
        %v3010 = vsub.f32 %v2605, %v3009
        %v3011 = vand.u32 %v3010, 4294901760
        %v3012 = vsub.f32 %v3010, %v3011
        %v3013 = vand.u32 %v3012, 4294901760
        %3014 = vmatprep.subr.mxu0 %v3013
        %v3015 = vand.u32 %v2604, 4294901760
        %v3016 = vsub.f32 %v2604, %v3015
        %v3017 = vand.u32 %v3016, 4294901760
        %v3018 = vsub.f32 %v3016, %v3017
        %v3019 = vand.u32 %v3018, 4294901760
        %3020 = vmatpush1.msra.mxu0 %v3019
        %v3021 = vand.u32 %v2607, 4294901760
        %v3022 = vsub.f32 %v2607, %v3021
        %v3023 = vand.u32 %v3022, 4294901760
        %v3024 = vsub.f32 %v3022, %v3023
        %v3025 = vand.u32 %v3024, 4294901760
        %3026 = vmatprep.subr.mxu0 %v3025
        %v3027 = vand.u32 %v2606, 4294901760
        %v3028 = vsub.f32 %v2606, %v3027
        %v3029 = vand.u32 %v3028, 4294901760
        %v3030 = vsub.f32 %v3028, %v3029
        %v3031 = vand.u32 %v3030, 4294901760
        %3032 = vmatpush1.msra.mxu0 %v3031
        %v3033 = vand.u32 %v2609, 4294901760
        %v3034 = vsub.f32 %v2609, %v3033
        %v3035 = vand.u32 %v3034, 4294901760
        %v3036 = vsub.f32 %v3034, %v3035
        %v3037 = vand.u32 %v3036, 4294901760
        %3038 = vmatprep.subr.mxu0 %v3037
        %v3039 = vand.u32 %v2608, 4294901760
        %v3040 = vsub.f32 %v2608, %v3039
        %v3041 = vand.u32 %v3040, 4294901760
        %v3042 = vsub.f32 %v3040, %v3041
        %v3043 = vand.u32 %v3042, 4294901760
        %3044 = vmatpush1.msra.mxu0 %v3043
        %v3045 = vand.u32 %v2611, 4294901760
        %v3046 = vsub.f32 %v2611, %v3045
        %v3047 = vand.u32 %v3046, 4294901760
        %v3048 = vsub.f32 %v3046, %v3047
        %v3049 = vand.u32 %v3048, 4294901760
        %3050 = vmatprep.subr.mxu0 %v3049
        %v3051 = vand.u32 %v2610, 4294901760
        %v3052 = vsub.f32 %v2610, %v3051
        %v3053 = vand.u32 %v3052, 4294901760
        %v3054 = vsub.f32 %v3052, %v3053
        %v3055 = vand.u32 %v3054, 4294901760
        %3056 = vmatpush1.msra.mxu0 %v3055
        %v3057 = vand.u32 %v2613, 4294901760
        %v3058 = vsub.f32 %v2613, %v3057
        %v3059 = vand.u32 %v3058, 4294901760
        %v3060 = vsub.f32 %v3058, %v3059
        %v3061 = vand.u32 %v3060, 4294901760
        %3062 = vmatprep.subr.mxu0 %v3061
        %v3063 = vand.u32 %v2612, 4294901760
        %v3064 = vsub.f32 %v2612, %v3063
        %v3065 = vand.u32 %v3064, 4294901760
        %v3066 = vsub.f32 %v3064, %v3065
        %v3067 = vand.u32 %v3066, 4294901760
        %3068 = vmatpush1.msra.mxu0 %v3067
        %v3069 = vand.u32 %v2615, 4294901760
        %v3070 = vsub.f32 %v2615, %v3069
        %v3071 = vand.u32 %v3070, 4294901760
        %v3072 = vsub.f32 %v3070, %v3071
        %v3073 = vand.u32 %v3072, 4294901760
        %3074 = vmatprep.subr.mxu0 %v3073
        %v3075 = vand.u32 %v2614, 4294901760
        %v3076 = vsub.f32 %v2614, %v3075
        %v3077 = vand.u32 %v3076, 4294901760
        %v3078 = vsub.f32 %v3076, %v3077
        %v3079 = vand.u32 %v3078, 4294901760
        %3080 = vmatpush1.msra.mxu0 %v3079
        %3081 = vmatprep.subr.mxu0 0.0
        %3082 = vmatpush1.msra.mxu0 0.0
        %3083 = vmatprep.subr.mxu0 0.0
        %3084 = vmatpush1.msra.mxu0 0.0
        %3085 = vmatprep.subr.mxu0 0.0
        %3086 = vmatpush1.msra.mxu0 0.0
        %3087 = vmatprep.subr.mxu0 0.0
        %3088 = vmatpush1.msra.mxu0 0.0
        %3089 = vmatprep.subr.mxu0 0.0
        %3090 = vmatpush1.msra.mxu0 0.0
        %3091 = vmatprep.subr.mxu0 0.0
        %3092 = vmatpush1.msra.mxu0 0.0
        %3093 = vmatprep.subr.mxu0 0.0
        %3094 = vmatpush1.msra.mxu0 0.0
        %3095 = vmatprep.subr.mxu0 0.0
        %3096 = vmatpush1.msra.mxu0 0.0
        %3097 = vmatprep.subr.mxu0 0.0
        %3098 = vmatpush1.msra.mxu0 0.0
        %3099 = vmatprep.subr.mxu0 0.0
        %3100 = vmatpush1.msra.mxu0 0.0
        %3101 = vmatprep.subr.mxu0 0.0
        %3102 = vmatpush1.msra.mxu0 0.0
        %3103 = vmatprep.subr.mxu0 0.0
        %3104 = vmatpush1.msra.mxu0 0.0
        %3105 = vmatprep.subr.mxu0 0.0
        %3106 = vmatpush1.msra.mxu0 0.0
        %3107 = vmatprep.subr.mxu0 0.0
        %3108 = vmatpush1.msra.mxu0 0.0
        %3109 = vmatprep.subr.mxu0 0.0
        %3110 = vmatpush1.msra.mxu0 0.0
        %3111 = vmatprep.subr.mxu0 0.0
        %3112 = vmatpush1.msra.mxu0 0.0
        %3113 = vmatprep.mubr.f32.mxu0 0.0
        %v3114 = vand.u32 %v799, 4294901760
        %3115 = vmatmul.mubr.f32.gmra.mrb[0].mxu0 %v3114
        %v3116 = vpop.f32.mrb[0].mxu0
        %v3117 = vadd.f32 %v2720, %v3116
        %v3118 = vpop.f32.mrb[0].mxu0
        %v3119 = vadd.f32 %v2722, %v3118
        %3120 = vmatprep.mubr.f32.mxu0 0.0
        %v3121 = vand.u32 %v805, 4294901760
        %3122 = vmatmul.mubr.f32.gmra.mrb[0].mxu0 %v3121
        %v3123 = vpop.f32.mrb[0].mxu0
        %v3124 = vadd.f32 %v2731, %v3123
        %v3125 = vpop.f32.mrb[0].mxu0
        %v3126 = vadd.f32 %v2733, %v3125
        %3127 = vmatprep.mubr.f32.mxu0 0.0
        %v3128 = vand.u32 %v811, 4294901760
        %3129 = vmatmul.mubr.f32.gmra.mrb[0].mxu0 %v3128
        %v3130 = vpop.f32.mrb[0].mxu0
        %v3131 = vadd.f32 %v2742, %v3130
        %v3132 = vpop.f32.mrb[0].mxu0
        %v3133 = vadd.f32 %v2744, %v3132
        %3134 = vmatprep.mubr.f32.mxu0 0.0
        %v3135 = vand.u32 %v817, 4294901760
        %3136 = vmatmul.mubr.f32.gmra.mrb[0].mxu0 %v3135
        %v3137 = vpop.f32.mrb[0].mxu0
        %v3138 = vadd.f32 %v2753, %v3137
        %v3139 = vpop.f32.mrb[0].mxu0
        %v3140 = vadd.f32 %v2755, %v3139
        %3141 = vmatprep.mubr.f32.mxu0 0.0
        %v3142 = vand.u32 %v1387, 4294901760
        %3143 = vmatmul.mubr.f32.gmra.mrb[0].mxu0 %v3142
        %v3144 = vpop.f32.mrb[0].mxu0
        %v3145 = vadd.f32 %v2764, %v3144
        %v3146 = vpop.f32.mrb[0].mxu0
        %v3147 = vadd.f32 %v2766, %v3146
        %3148 = vmatprep.mubr.f32.mxu0 0.0
        %v3149 = vand.u32 %v1393, 4294901760
        %3150 = vmatmul.mubr.f32.gmra.mrb[0].mxu0 %v3149
        %v3151 = vpop.f32.mrb[0].mxu0
        %v3152 = vadd.f32 %v2775, %v3151
        %v3153 = vpop.f32.mrb[0].mxu0
        %v3154 = vadd.f32 %v2777, %v3153
        %3155 = vmatprep.mubr.f32.mxu0 0.0
        %v3156 = vand.u32 %v1399, 4294901760
        %3157 = vmatmul.mubr.f32.gmra.mrb[0].mxu0 %v3156
        %v3158 = vpop.f32.mrb[0].mxu0
        %v3159 = vadd.f32 %v2786, %v3158
        %v3160 = vpop.f32.mrb[0].mxu0
        %v3161 = vadd.f32 %v2788, %v3160
        %3162 = vmatprep.mubr.f32.mxu0 0.0
        %v3163 = vand.u32 %v1405, 4294901760
        %3164 = vmatmul.mubr.f32.gmra.mrb[0].mxu0 %v3163
        %v3165 = vpop.f32.mrb[0].mxu0
        %v3166 = vadd.f32 %v2797, %v3165
        %v3167 = vpop.f32.mrb[0].mxu0
        %v3168 = vadd.f32 %v2799, %v3167
        %3169 = vmatprep.mubr.f32.mxu0 0.0
        %v3170 = vand.u32 %v1975, 4294901760
        %3171 = vmatmul.mubr.f32.gmra.mrb[0].mxu0 %v3170
        %v3172 = vpop.f32.mrb[0].mxu0
        %v3173 = vadd.f32 %v2808, %v3172
        %v3174 = vpop.f32.mrb[0].mxu0
        %v3175 = vadd.f32 %v2810, %v3174
        %3176 = vmatprep.mubr.f32.mxu0 0.0
        %v3177 = vand.u32 %v1981, 4294901760
        %3178 = vmatmul.mubr.f32.gmra.mrb[0].mxu0 %v3177
        %v3179 = vpop.f32.mrb[0].mxu0
        %v3180 = vadd.f32 %v2819, %v3179
        %v3181 = vpop.f32.mrb[0].mxu0
        %v3182 = vadd.f32 %v2821, %v3181
        %3183 = vmatprep.mubr.f32.mxu0 0.0
        %v3184 = vand.u32 %v1987, 4294901760
        %3185 = vmatmul.mubr.f32.gmra.mrb[0].mxu0 %v3184
        %v3186 = vpop.f32.mrb[0].mxu0
        %v3187 = vadd.f32 %v2830, %v3186
        %v3188 = vpop.f32.mrb[0].mxu0
        %v3189 = vadd.f32 %v2832, %v3188
        %3190 = vmatprep.mubr.f32.mxu0 0.0
        %v3191 = vand.u32 %v1993, 4294901760
        %3192 = vmatmul.mubr.f32.gmra.mrb[0].mxu0 %v3191
        %v3193 = vpop.f32.mrb[0].mxu0
        %v3194 = vadd.f32 %v2841, %v3193
        %v3195 = vpop.f32.mrb[0].mxu0
        %v3196 = vadd.f32 %v2843, %v3195
        %3197 = vmatprep.mubr.f32.mxu0 0.0
        %v3198 = vand.u32 %v2563, 4294901760
        %3199 = vmatmul.mubr.f32.gmra.mrb[0].mxu0 %v3198
        %v3200 = vpop.f32.mrb[0].mxu0
        %v3201 = vadd.f32 %v2852, %v3200
        %v3202 = vpop.f32.mrb[0].mxu0
        %v3203 = vadd.f32 %v2854, %v3202
        %3204 = vmatprep.mubr.f32.mxu0 0.0
        %v3205 = vand.u32 %v2569, 4294901760
        %3206 = vmatmul.mubr.f32.gmra.mrb[0].mxu0 %v3205
        %v3207 = vpop.f32.mrb[0].mxu0
        %v3208 = vadd.f32 %v2863, %v3207
        %v3209 = vpop.f32.mrb[0].mxu0
        %v3210 = vadd.f32 %v2865, %v3209
        %3211 = vmatprep.mubr.f32.mxu0 0.0
        %v3212 = vand.u32 %v2575, 4294901760
        %3213 = vmatmul.mubr.f32.gmra.mrb[0].mxu0 %v3212
        %v3214 = vpop.f32.mrb[0].mxu0
        %v3215 = vadd.f32 %v2874, %v3214
        %v3216 = vpop.f32.mrb[0].mxu0
        %v3217 = vadd.f32 %v2876, %v3216
        %3218 = vmatprep.mubr.f32.mxu0 0.0
        %v3219 = vand.u32 %v2581, 4294901760
        %3220 = vmatmul.mubr.f32.gmra.mrb[0].mxu0 %v3219
        %v3221 = vpop.f32.mrb[0].mxu0
        %v3222 = vadd.f32 %v2885, %v3221
        %v3223 = vpop.f32.mrb[0].mxu0
        %v3224 = vadd.f32 %v2887, %v3223
        %3225 = vdwg.mxu0
        %v3226 = vand.u32 %v2585, 4294901760
        %v3227 = vsub.f32 %v2585, %v3226
        %3228 = vmatprep.subr.mxu0 %v3227
        %v3229 = vand.u32 %v2584, 4294901760
        %v3230 = vsub.f32 %v2584, %v3229
        %3231 = vmatpush1.msra.mxu0 %v3230
        %v3232 = vand.u32 %v2587, 4294901760
        %v3233 = vsub.f32 %v2587, %v3232
        %3234 = vmatprep.subr.mxu0 %v3233
        %v3235 = vand.u32 %v2586, 4294901760
        %v3236 = vsub.f32 %v2586, %v3235
        %3237 = vmatpush1.msra.mxu0 %v3236
        %v3238 = vand.u32 %v2589, 4294901760
        %v3239 = vsub.f32 %v2589, %v3238
        %3240 = vmatprep.subr.mxu0 %v3239
        %v3241 = vand.u32 %v2588, 4294901760
        %v3242 = vsub.f32 %v2588, %v3241
        %3243 = vmatpush1.msra.mxu0 %v3242
        %v3244 = vand.u32 %v2591, 4294901760
        %v3245 = vsub.f32 %v2591, %v3244
        %3246 = vmatprep.subr.mxu0 %v3245
        %v3247 = vand.u32 %v2590, 4294901760
        %v3248 = vsub.f32 %v2590, %v3247
        %3249 = vmatpush1.msra.mxu0 %v3248
        %v3250 = vand.u32 %v2593, 4294901760
        %v3251 = vsub.f32 %v2593, %v3250
        %3252 = vmatprep.subr.mxu0 %v3251
        %v3253 = vand.u32 %v2592, 4294901760
        %v3254 = vsub.f32 %v2592, %v3253
        %3255 = vmatpush1.msra.mxu0 %v3254
        %v3256 = vand.u32 %v2595, 4294901760
        %v3257 = vsub.f32 %v2595, %v3256
        %3258 = vmatprep.subr.mxu0 %v3257
        %v3259 = vand.u32 %v2594, 4294901760
        %v3260 = vsub.f32 %v2594, %v3259
        %3261 = vmatpush1.msra.mxu0 %v3260
        %v3262 = vand.u32 %v2597, 4294901760
        %v3263 = vsub.f32 %v2597, %v3262
        %3264 = vmatprep.subr.mxu0 %v3263
        %v3265 = vand.u32 %v2596, 4294901760
        %v3266 = vsub.f32 %v2596, %v3265
        %3267 = vmatpush1.msra.mxu0 %v3266
        %v3268 = vand.u32 %v2599, 4294901760
        %v3269 = vsub.f32 %v2599, %v3268
        %3270 = vmatprep.subr.mxu0 %v3269
        %v3271 = vand.u32 %v2598, 4294901760
        %v3272 = vsub.f32 %v2598, %v3271
        %3273 = vmatpush1.msra.mxu0 %v3272
        %v3274 = vand.u32 %v2601, 4294901760
        %v3275 = vsub.f32 %v2601, %v3274
        %3276 = vmatprep.subr.mxu0 %v3275
        %v3277 = vand.u32 %v2600, 4294901760
        %v3278 = vsub.f32 %v2600, %v3277
        %3279 = vmatpush1.msra.mxu0 %v3278
        %v3280 = vand.u32 %v2603, 4294901760
        %v3281 = vsub.f32 %v2603, %v3280
        %3282 = vmatprep.subr.mxu0 %v3281
        %v3283 = vand.u32 %v2602, 4294901760
        %v3284 = vsub.f32 %v2602, %v3283
        %3285 = vmatpush1.msra.mxu0 %v3284
        %v3286 = vand.u32 %v2605, 4294901760
        %v3287 = vsub.f32 %v2605, %v3286
        %3288 = vmatprep.subr.mxu0 %v3287
        %v3289 = vand.u32 %v2604, 4294901760
        %v3290 = vsub.f32 %v2604, %v3289
        %3291 = vmatpush1.msra.mxu0 %v3290
        %v3292 = vand.u32 %v2607, 4294901760
        %v3293 = vsub.f32 %v2607, %v3292
        %3294 = vmatprep.subr.mxu0 %v3293
        %v3295 = vand.u32 %v2606, 4294901760
        %v3296 = vsub.f32 %v2606, %v3295
        %3297 = vmatpush1.msra.mxu0 %v3296
        %v3298 = vand.u32 %v2609, 4294901760
        %v3299 = vsub.f32 %v2609, %v3298
        %3300 = vmatprep.subr.mxu0 %v3299
        %v3301 = vand.u32 %v2608, 4294901760
        %v3302 = vsub.f32 %v2608, %v3301
        %3303 = vmatpush1.msra.mxu0 %v3302
        %v3304 = vand.u32 %v2611, 4294901760
        %v3305 = vsub.f32 %v2611, %v3304
        %3306 = vmatprep.subr.mxu0 %v3305
        %v3307 = vand.u32 %v2610, 4294901760
        %v3308 = vsub.f32 %v2610, %v3307
        %3309 = vmatpush1.msra.mxu0 %v3308
        %v3310 = vand.u32 %v2613, 4294901760
        %v3311 = vsub.f32 %v2613, %v3310
        %3312 = vmatprep.subr.mxu0 %v3311
        %v3313 = vand.u32 %v2612, 4294901760
        %v3314 = vsub.f32 %v2612, %v3313
        %3315 = vmatpush1.msra.mxu0 %v3314
        %v3316 = vand.u32 %v2615, 4294901760
        %v3317 = vsub.f32 %v2615, %v3316
        %3318 = vmatprep.subr.mxu0 %v3317
        %v3319 = vand.u32 %v2614, 4294901760
        %v3320 = vsub.f32 %v2614, %v3319
        %3321 = vmatpush1.msra.mxu0 %v3320
        %3322 = vmatprep.subr.mxu0 0.0
        %3323 = vmatpush1.msra.mxu0 0.0
        %3324 = vmatprep.subr.mxu0 0.0
        %3325 = vmatpush1.msra.mxu0 0.0
        %3326 = vmatprep.subr.mxu0 0.0
        %3327 = vmatpush1.msra.mxu0 0.0
        %3328 = vmatprep.subr.mxu0 0.0
        %3329 = vmatpush1.msra.mxu0 0.0
        %3330 = vmatprep.subr.mxu0 0.0
        %3331 = vmatpush1.msra.mxu0 0.0
        %3332 = vmatprep.subr.mxu0 0.0
        %3333 = vmatpush1.msra.mxu0 0.0
        %3334 = vmatprep.subr.mxu0 0.0
        %3335 = vmatpush1.msra.mxu0 0.0
        %3336 = vmatprep.subr.mxu0 0.0
        %3337 = vmatpush1.msra.mxu0 0.0
        %3338 = vmatprep.subr.mxu0 0.0
        %3339 = vmatpush1.msra.mxu0 0.0
        %3340 = vmatprep.subr.mxu0 0.0
        %3341 = vmatpush1.msra.mxu0 0.0
        %3342 = vmatprep.subr.mxu0 0.0
        %3343 = vmatpush1.msra.mxu0 0.0
        %3344 = vmatprep.subr.mxu0 0.0
        %3345 = vmatpush1.msra.mxu0 0.0
        %3346 = vmatprep.subr.mxu0 0.0
        %3347 = vmatpush1.msra.mxu0 0.0
        %3348 = vmatprep.subr.mxu0 0.0
        %3349 = vmatpush1.msra.mxu0 0.0
        %3350 = vmatprep.subr.mxu0 0.0
        %3351 = vmatpush1.msra.mxu0 0.0
        %3352 = vmatprep.subr.mxu0 0.0
        %3353 = vmatpush1.msra.mxu0 0.0
        %3354 = vmatprep.mubr.f32.mxu0 0.0
        %v3355 = vand.u32 %v799, 4294901760
        %v3356 = vsub.f32 %v799, %v3355
        %3357 = vmatmul.mubr.f32.gmra.mrb[0].mxu0 %v3356
        %v3358 = vpop.f32.mrb[0].mxu0
        %v3359 = vadd.f32 %v3117, %v3358
        %v3360 = vpop.f32.mrb[0].mxu0
        %v3361 = vadd.f32 %v3119, %v3360
        %3362 = vmatprep.mubr.f32.mxu0 0.0
        %v3363 = vand.u32 %v805, 4294901760
        %v3364 = vsub.f32 %v805, %v3363
        %3365 = vmatmul.mubr.f32.gmra.mrb[0].mxu0 %v3364
        %v3366 = vpop.f32.mrb[0].mxu0
        %v3367 = vadd.f32 %v3124, %v3366
        %v3368 = vpop.f32.mrb[0].mxu0
        %v3369 = vadd.f32 %v3126, %v3368
        %3370 = vmatprep.mubr.f32.mxu0 0.0
        %v3371 = vand.u32 %v811, 4294901760
        %v3372 = vsub.f32 %v811, %v3371
        %3373 = vmatmul.mubr.f32.gmra.mrb[0].mxu0 %v3372
        %v3374 = vpop.f32.mrb[0].mxu0
        %v3375 = vadd.f32 %v3131, %v3374
        %v3376 = vpop.f32.mrb[0].mxu0
        %v3377 = vadd.f32 %v3133, %v3376
        %3378 = vmatprep.mubr.f32.mxu0 0.0
        %v3379 = vand.u32 %v817, 4294901760
        %v3380 = vsub.f32 %v817, %v3379
        %3381 = vmatmul.mubr.f32.gmra.mrb[0].mxu0 %v3380
        %v3382 = vpop.f32.mrb[0].mxu0
        %v3383 = vadd.f32 %v3138, %v3382
        %v3384 = vpop.f32.mrb[0].mxu0
        %v3385 = vadd.f32 %v3140, %v3384
        %3386 = vmatprep.mubr.f32.mxu0 0.0
        %v3387 = vand.u32 %v1387, 4294901760
        %v3388 = vsub.f32 %v1387, %v3387
        %3389 = vmatmul.mubr.f32.gmra.mrb[0].mxu0 %v3388
        %v3390 = vpop.f32.mrb[0].mxu0
        %v3391 = vadd.f32 %v3145, %v3390
        %v3392 = vpop.f32.mrb[0].mxu0
        %v3393 = vadd.f32 %v3147, %v3392
        %3394 = vmatprep.mubr.f32.mxu0 0.0
        %v3395 = vand.u32 %v1393, 4294901760
        %v3396 = vsub.f32 %v1393, %v3395
        %3397 = vmatmul.mubr.f32.gmra.mrb[0].mxu0 %v3396
        %v3398 = vpop.f32.mrb[0].mxu0
        %v3399 = vadd.f32 %v3152, %v3398
        %v3400 = vpop.f32.mrb[0].mxu0
        %v3401 = vadd.f32 %v3154, %v3400
        %3402 = vmatprep.mubr.f32.mxu0 0.0
        %v3403 = vand.u32 %v1399, 4294901760
        %v3404 = vsub.f32 %v1399, %v3403
        %3405 = vmatmul.mubr.f32.gmra.mrb[0].mxu0 %v3404
        %v3406 = vpop.f32.mrb[0].mxu0
        %v3407 = vadd.f32 %v3159, %v3406
        %v3408 = vpop.f32.mrb[0].mxu0
        %v3409 = vadd.f32 %v3161, %v3408
        %3410 = vmatprep.mubr.f32.mxu0 0.0
        %v3411 = vand.u32 %v1405, 4294901760
        %v3412 = vsub.f32 %v1405, %v3411
        %3413 = vmatmul.mubr.f32.gmra.mrb[0].mxu0 %v3412
        %v3414 = vpop.f32.mrb[0].mxu0
        %v3415 = vadd.f32 %v3166, %v3414
        %v3416 = vpop.f32.mrb[0].mxu0
        %v3417 = vadd.f32 %v3168, %v3416
        %3418 = vmatprep.mubr.f32.mxu0 0.0
        %v3419 = vand.u32 %v1975, 4294901760
        %v3420 = vsub.f32 %v1975, %v3419
        %3421 = vmatmul.mubr.f32.gmra.mrb[0].mxu0 %v3420
        %v3422 = vpop.f32.mrb[0].mxu0
        %v3423 = vadd.f32 %v3173, %v3422
        %v3424 = vpop.f32.mrb[0].mxu0
        %v3425 = vadd.f32 %v3175, %v3424
        %3426 = vmatprep.mubr.f32.mxu0 0.0
        %v3427 = vand.u32 %v1981, 4294901760
        %v3428 = vsub.f32 %v1981, %v3427
        %3429 = vmatmul.mubr.f32.gmra.mrb[0].mxu0 %v3428
        %v3430 = vpop.f32.mrb[0].mxu0
        %v3431 = vadd.f32 %v3180, %v3430
        %v3432 = vpop.f32.mrb[0].mxu0
        %v3433 = vadd.f32 %v3182, %v3432
        %3434 = vmatprep.mubr.f32.mxu0 0.0
        %v3435 = vand.u32 %v1987, 4294901760
        %v3436 = vsub.f32 %v1987, %v3435
        %3437 = vmatmul.mubr.f32.gmra.mrb[0].mxu0 %v3436
        %v3438 = vpop.f32.mrb[0].mxu0
        %v3439 = vadd.f32 %v3187, %v3438
        %v3440 = vpop.f32.mrb[0].mxu0
        %v3441 = vadd.f32 %v3189, %v3440
        %3442 = vmatprep.mubr.f32.mxu0 0.0
        %v3443 = vand.u32 %v1993, 4294901760
        %v3444 = vsub.f32 %v1993, %v3443
        %3445 = vmatmul.mubr.f32.gmra.mrb[0].mxu0 %v3444
        %v3446 = vpop.f32.mrb[0].mxu0
        %v3447 = vadd.f32 %v3194, %v3446
        %v3448 = vpop.f32.mrb[0].mxu0
        %v3449 = vadd.f32 %v3196, %v3448
        %3450 = vmatprep.mubr.f32.mxu0 0.0
        %v3451 = vand.u32 %v2563, 4294901760
        %v3452 = vsub.f32 %v2563, %v3451
        %3453 = vmatmul.mubr.f32.gmra.mrb[0].mxu0 %v3452
        %v3454 = vpop.f32.mrb[0].mxu0
        %v3455 = vadd.f32 %v3201, %v3454
        %v3456 = vpop.f32.mrb[0].mxu0
        %v3457 = vadd.f32 %v3203, %v3456
        %3458 = vmatprep.mubr.f32.mxu0 0.0
        %v3459 = vand.u32 %v2569, 4294901760
        %v3460 = vsub.f32 %v2569, %v3459
        %3461 = vmatmul.mubr.f32.gmra.mrb[0].mxu0 %v3460
        %v3462 = vpop.f32.mrb[0].mxu0
        %v3463 = vadd.f32 %v3208, %v3462
        %v3464 = vpop.f32.mrb[0].mxu0
        %v3465 = vadd.f32 %v3210, %v3464
        %3466 = vmatprep.mubr.f32.mxu0 0.0
        %v3467 = vand.u32 %v2575, 4294901760
        %v3468 = vsub.f32 %v2575, %v3467
        %3469 = vmatmul.mubr.f32.gmra.mrb[0].mxu0 %v3468
        %v3470 = vpop.f32.mrb[0].mxu0
        %v3471 = vadd.f32 %v3215, %v3470
        %v3472 = vpop.f32.mrb[0].mxu0
        %v3473 = vadd.f32 %v3217, %v3472
        %3474 = vmatprep.mubr.f32.mxu0 0.0
        %v3475 = vand.u32 %v2581, 4294901760
        %v3476 = vsub.f32 %v2581, %v3475
        %3477 = vmatmul.mubr.f32.gmra.mrb[0].mxu0 %v3476
        %v3478 = vpop.f32.mrb[0].mxu0
        %v3479 = vadd.f32 %v3222, %v3478
        %v3480 = vpop.f32.mrb[0].mxu0
        %v3481 = vadd.f32 %v3224, %v3480
        %3482 = vdwg.mxu0
        %v3483 = vand.u32 %v2585, 4294901760
        %3484 = vmatprep.subr.mxu0 %v3483
        %v3485 = vand.u32 %v2584, 4294901760
        %3486 = vmatpush1.msra.mxu0 %v3485
        %v3487 = vand.u32 %v2587, 4294901760
        %3488 = vmatprep.subr.mxu0 %v3487
        %v3489 = vand.u32 %v2586, 4294901760
        %3490 = vmatpush1.msra.mxu0 %v3489
        %v3491 = vand.u32 %v2589, 4294901760
        %3492 = vmatprep.subr.mxu0 %v3491
        %v3493 = vand.u32 %v2588, 4294901760
        %3494 = vmatpush1.msra.mxu0 %v3493
        %v3495 = vand.u32 %v2591, 4294901760
        %3496 = vmatprep.subr.mxu0 %v3495
        %v3497 = vand.u32 %v2590, 4294901760
        %3498 = vmatpush1.msra.mxu0 %v3497
        %v3499 = vand.u32 %v2593, 4294901760
        %3500 = vmatprep.subr.mxu0 %v3499
        %v3501 = vand.u32 %v2592, 4294901760
        %3502 = vmatpush1.msra.mxu0 %v3501
        %v3503 = vand.u32 %v2595, 4294901760
        %3504 = vmatprep.subr.mxu0 %v3503
        %v3505 = vand.u32 %v2594, 4294901760
        %3506 = vmatpush1.msra.mxu0 %v3505
        %v3507 = vand.u32 %v2597, 4294901760
        %3508 = vmatprep.subr.mxu0 %v3507
        %v3509 = vand.u32 %v2596, 4294901760
        %3510 = vmatpush1.msra.mxu0 %v3509
        %v3511 = vand.u32 %v2599, 4294901760
        %3512 = vmatprep.subr.mxu0 %v3511
        %v3513 = vand.u32 %v2598, 4294901760
        %3514 = vmatpush1.msra.mxu0 %v3513
        %v3515 = vand.u32 %v2601, 4294901760
        %3516 = vmatprep.subr.mxu0 %v3515
        %v3517 = vand.u32 %v2600, 4294901760
        %3518 = vmatpush1.msra.mxu0 %v3517
        %v3519 = vand.u32 %v2603, 4294901760
        %3520 = vmatprep.subr.mxu0 %v3519
        %v3521 = vand.u32 %v2602, 4294901760
        %3522 = vmatpush1.msra.mxu0 %v3521
        %v3523 = vand.u32 %v2605, 4294901760
        %3524 = vmatprep.subr.mxu0 %v3523
        %v3525 = vand.u32 %v2604, 4294901760
        %3526 = vmatpush1.msra.mxu0 %v3525
        %v3527 = vand.u32 %v2607, 4294901760
        %3528 = vmatprep.subr.mxu0 %v3527
        %v3529 = vand.u32 %v2606, 4294901760
        %3530 = vmatpush1.msra.mxu0 %v3529
        %v3531 = vand.u32 %v2609, 4294901760
        %3532 = vmatprep.subr.mxu0 %v3531
        %v3533 = vand.u32 %v2608, 4294901760
        %3534 = vmatpush1.msra.mxu0 %v3533
        %v3535 = vand.u32 %v2611, 4294901760
        %3536 = vmatprep.subr.mxu0 %v3535
        %v3537 = vand.u32 %v2610, 4294901760
        %3538 = vmatpush1.msra.mxu0 %v3537
        %v3539 = vand.u32 %v2613, 4294901760
        %3540 = vmatprep.subr.mxu0 %v3539
        %v3541 = vand.u32 %v2612, 4294901760
        %3542 = vmatpush1.msra.mxu0 %v3541
        %v3543 = vand.u32 %v2615, 4294901760
        %3544 = vmatprep.subr.mxu0 %v3543
        %v3545 = vand.u32 %v2614, 4294901760
        %3546 = vmatpush1.msra.mxu0 %v3545
        %3547 = vmatprep.subr.mxu0 0.0
        %3548 = vmatpush1.msra.mxu0 0.0
        %3549 = vmatprep.subr.mxu0 0.0
        %3550 = vmatpush1.msra.mxu0 0.0
        %3551 = vmatprep.subr.mxu0 0.0
        %3552 = vmatpush1.msra.mxu0 0.0
        %3553 = vmatprep.subr.mxu0 0.0
        %3554 = vmatpush1.msra.mxu0 0.0
        %3555 = vmatprep.subr.mxu0 0.0
        %3556 = vmatpush1.msra.mxu0 0.0
        %3557 = vmatprep.subr.mxu0 0.0
        %3558 = vmatpush1.msra.mxu0 0.0
        %3559 = vmatprep.subr.mxu0 0.0
        %3560 = vmatpush1.msra.mxu0 0.0
        %3561 = vmatprep.subr.mxu0 0.0
        %3562 = vmatpush1.msra.mxu0 0.0
        %3563 = vmatprep.subr.mxu0 0.0
        %3564 = vmatpush1.msra.mxu0 0.0
        %3565 = vmatprep.subr.mxu0 0.0
        %3566 = vmatpush1.msra.mxu0 0.0
        %3567 = vmatprep.subr.mxu0 0.0
        %3568 = vmatpush1.msra.mxu0 0.0
        %3569 = vmatprep.subr.mxu0 0.0
        %3570 = vmatpush1.msra.mxu0 0.0
        %3571 = vmatprep.subr.mxu0 0.0
        %3572 = vmatpush1.msra.mxu0 0.0
        %3573 = vmatprep.subr.mxu0 0.0
        %3574 = vmatpush1.msra.mxu0 0.0
        %3575 = vmatprep.subr.mxu0 0.0
        %3576 = vmatpush1.msra.mxu0 0.0
        %3577 = vmatprep.subr.mxu0 0.0
        %3578 = vmatpush1.msra.mxu0 0.0
        %3579 = vmatprep.mubr.f32.mxu0 0.0
        %v3580 = vand.u32 %v799, 4294901760
        %v3581 = vsub.f32 %v799, %v3580
        %v3582 = vand.u32 %v3581, 4294901760
        %3583 = vmatmul.mubr.f32.gmra.mrb[0].mxu0 %v3582
        %v3584 = vpop.f32.mrb[0].mxu0
        %v3585 = vadd.f32 %v3359, %v3584
        %v3586 = vpop.f32.mrb[0].mxu0
        %v3587 = vadd.f32 %v3361, %v3586
        %3588 = vmatprep.mubr.f32.mxu0 0.0
        %v3589 = vand.u32 %v805, 4294901760
        %v3590 = vsub.f32 %v805, %v3589
        %v3591 = vand.u32 %v3590, 4294901760
        %3592 = vmatmul.mubr.f32.gmra.mrb[0].mxu0 %v3591
        %v3593 = vpop.f32.mrb[0].mxu0
        %v3594 = vadd.f32 %v3367, %v3593
        %v3595 = vpop.f32.mrb[0].mxu0
        %v3596 = vadd.f32 %v3369, %v3595
        %3597 = vmatprep.mubr.f32.mxu0 0.0
        %v3598 = vand.u32 %v811, 4294901760
        %v3599 = vsub.f32 %v811, %v3598
        %v3600 = vand.u32 %v3599, 4294901760
        %3601 = vmatmul.mubr.f32.gmra.mrb[0].mxu0 %v3600
        %v3602 = vpop.f32.mrb[0].mxu0
        %v3603 = vadd.f32 %v3375, %v3602
        %v3604 = vpop.f32.mrb[0].mxu0
        %v3605 = vadd.f32 %v3377, %v3604
        %3606 = vmatprep.mubr.f32.mxu0 0.0
        %v3607 = vand.u32 %v817, 4294901760
        %v3608 = vsub.f32 %v817, %v3607
        %v3609 = vand.u32 %v3608, 4294901760
        %3610 = vmatmul.mubr.f32.gmra.mrb[0].mxu0 %v3609
        %v3611 = vpop.f32.mrb[0].mxu0
        %v3612 = vadd.f32 %v3383, %v3611
        %v3613 = vpop.f32.mrb[0].mxu0
        %v3614 = vadd.f32 %v3385, %v3613
        %3615 = vmatprep.mubr.f32.mxu0 0.0
        %v3616 = vand.u32 %v1387, 4294901760
        %v3617 = vsub.f32 %v1387, %v3616
        %v3618 = vand.u32 %v3617, 4294901760
        %3619 = vmatmul.mubr.f32.gmra.mrb[0].mxu0 %v3618
        %v3620 = vpop.f32.mrb[0].mxu0
        %v3621 = vadd.f32 %v3391, %v3620
        %v3622 = vpop.f32.mrb[0].mxu0
        %v3623 = vadd.f32 %v3393, %v3622
        %3624 = vmatprep.mubr.f32.mxu0 0.0
        %v3625 = vand.u32 %v1393, 4294901760
        %v3626 = vsub.f32 %v1393, %v3625
        %v3627 = vand.u32 %v3626, 4294901760
        %3628 = vmatmul.mubr.f32.gmra.mrb[0].mxu0 %v3627
        %v3629 = vpop.f32.mrb[0].mxu0
        %v3630 = vadd.f32 %v3399, %v3629
        %v3631 = vpop.f32.mrb[0].mxu0
        %v3632 = vadd.f32 %v3401, %v3631
        %3633 = vmatprep.mubr.f32.mxu0 0.0
        %v3634 = vand.u32 %v1399, 4294901760
        %v3635 = vsub.f32 %v1399, %v3634
        %v3636 = vand.u32 %v3635, 4294901760
        %3637 = vmatmul.mubr.f32.gmra.mrb[0].mxu0 %v3636
        %v3638 = vpop.f32.mrb[0].mxu0
        %v3639 = vadd.f32 %v3407, %v3638
        %v3640 = vpop.f32.mrb[0].mxu0
        %v3641 = vadd.f32 %v3409, %v3640
        %3642 = vmatprep.mubr.f32.mxu0 0.0
        %v3643 = vand.u32 %v1405, 4294901760
        %v3644 = vsub.f32 %v1405, %v3643
        %v3645 = vand.u32 %v3644, 4294901760
        %3646 = vmatmul.mubr.f32.gmra.mrb[0].mxu0 %v3645
        %v3647 = vpop.f32.mrb[0].mxu0
        %v3648 = vadd.f32 %v3415, %v3647
        %v3649 = vpop.f32.mrb[0].mxu0
        %v3650 = vadd.f32 %v3417, %v3649
        %3651 = vmatprep.mubr.f32.mxu0 0.0
        %v3652 = vand.u32 %v1975, 4294901760
        %v3653 = vsub.f32 %v1975, %v3652
        %v3654 = vand.u32 %v3653, 4294901760
        %3655 = vmatmul.mubr.f32.gmra.mrb[0].mxu0 %v3654
        %v3656 = vpop.f32.mrb[0].mxu0
        %v3657 = vadd.f32 %v3423, %v3656
        %v3658 = vpop.f32.mrb[0].mxu0
        %v3659 = vadd.f32 %v3425, %v3658
        %3660 = vmatprep.mubr.f32.mxu0 0.0
        %v3661 = vand.u32 %v1981, 4294901760
        %v3662 = vsub.f32 %v1981, %v3661
        %v3663 = vand.u32 %v3662, 4294901760
        %3664 = vmatmul.mubr.f32.gmra.mrb[0].mxu0 %v3663
        %v3665 = vpop.f32.mrb[0].mxu0
        %v3666 = vadd.f32 %v3431, %v3665
        %v3667 = vpop.f32.mrb[0].mxu0
        %v3668 = vadd.f32 %v3433, %v3667
        %3669 = vmatprep.mubr.f32.mxu0 0.0
        %v3670 = vand.u32 %v1987, 4294901760
        %v3671 = vsub.f32 %v1987, %v3670
        %v3672 = vand.u32 %v3671, 4294901760
        %3673 = vmatmul.mubr.f32.gmra.mrb[0].mxu0 %v3672
        %v3674 = vpop.f32.mrb[0].mxu0
        %v3675 = vadd.f32 %v3439, %v3674
        %v3676 = vpop.f32.mrb[0].mxu0
        %v3677 = vadd.f32 %v3441, %v3676
        %3678 = vmatprep.mubr.f32.mxu0 0.0
        %v3679 = vand.u32 %v1993, 4294901760
        %v3680 = vsub.f32 %v1993, %v3679
        %v3681 = vand.u32 %v3680, 4294901760
        %3682 = vmatmul.mubr.f32.gmra.mrb[0].mxu0 %v3681
        %v3683 = vpop.f32.mrb[0].mxu0
        %v3684 = vadd.f32 %v3447, %v3683
        %v3685 = vpop.f32.mrb[0].mxu0
        %v3686 = vadd.f32 %v3449, %v3685
        %3687 = vmatprep.mubr.f32.mxu0 0.0
        %v3688 = vand.u32 %v2563, 4294901760
        %v3689 = vsub.f32 %v2563, %v3688
        %v3690 = vand.u32 %v3689, 4294901760
        %3691 = vmatmul.mubr.f32.gmra.mrb[0].mxu0 %v3690
        %v3692 = vpop.f32.mrb[0].mxu0
        %v3693 = vadd.f32 %v3455, %v3692
        %v3694 = vpop.f32.mrb[0].mxu0
        %v3695 = vadd.f32 %v3457, %v3694
        %3696 = vmatprep.mubr.f32.mxu0 0.0
        %v3697 = vand.u32 %v2569, 4294901760
        %v3698 = vsub.f32 %v2569, %v3697
        %v3699 = vand.u32 %v3698, 4294901760
        %3700 = vmatmul.mubr.f32.gmra.mrb[0].mxu0 %v3699
        %v3701 = vpop.f32.mrb[0].mxu0
        %v3702 = vadd.f32 %v3463, %v3701
        %v3703 = vpop.f32.mrb[0].mxu0
        %v3704 = vadd.f32 %v3465, %v3703
        %3705 = vmatprep.mubr.f32.mxu0 0.0
        %v3706 = vand.u32 %v2575, 4294901760
        %v3707 = vsub.f32 %v2575, %v3706
        %v3708 = vand.u32 %v3707, 4294901760
        %3709 = vmatmul.mubr.f32.gmra.mrb[0].mxu0 %v3708
        %v3710 = vpop.f32.mrb[0].mxu0
        %v3711 = vadd.f32 %v3471, %v3710
        %v3712 = vpop.f32.mrb[0].mxu0
        %v3713 = vadd.f32 %v3473, %v3712
        %3714 = vmatprep.mubr.f32.mxu0 0.0
        %v3715 = vand.u32 %v2581, 4294901760
        %v3716 = vsub.f32 %v2581, %v3715
        %v3717 = vand.u32 %v3716, 4294901760
        %3718 = vmatmul.mubr.f32.gmra.mrb[0].mxu0 %v3717
        %v3719 = vpop.f32.mrb[0].mxu0
        %v3720 = vadd.f32 %v3479, %v3719
        %v3721 = vpop.f32.mrb[0].mxu0
        %v3722 = vadd.f32 %v3481, %v3721
        %3723 = vdwg.mxu0
        %v3724 = vand.u32 %v2585, 4294901760
        %v3725 = vsub.f32 %v2585, %v3724
        %v3726 = vand.u32 %v3725, 4294901760
        %3727 = vmatprep.subr.mxu0 %v3726
        %v3728 = vand.u32 %v2584, 4294901760
        %v3729 = vsub.f32 %v2584, %v3728
        %v3730 = vand.u32 %v3729, 4294901760
        %3731 = vmatpush1.msra.mxu0 %v3730
        %v3732 = vand.u32 %v2587, 4294901760
        %v3733 = vsub.f32 %v2587, %v3732
        %v3734 = vand.u32 %v3733, 4294901760
        %3735 = vmatprep.subr.mxu0 %v3734
        %v3736 = vand.u32 %v2586, 4294901760
        %v3737 = vsub.f32 %v2586, %v3736
        %v3738 = vand.u32 %v3737, 4294901760
        %3739 = vmatpush1.msra.mxu0 %v3738
        %v3740 = vand.u32 %v2589, 4294901760
        %v3741 = vsub.f32 %v2589, %v3740
        %v3742 = vand.u32 %v3741, 4294901760
        %3743 = vmatprep.subr.mxu0 %v3742
        %v3744 = vand.u32 %v2588, 4294901760
        %v3745 = vsub.f32 %v2588, %v3744
        %v3746 = vand.u32 %v3745, 4294901760
        %3747 = vmatpush1.msra.mxu0 %v3746
        %v3748 = vand.u32 %v2591, 4294901760
        %v3749 = vsub.f32 %v2591, %v3748
        %v3750 = vand.u32 %v3749, 4294901760
        %3751 = vmatprep.subr.mxu0 %v3750
        %v3752 = vand.u32 %v2590, 4294901760
        %v3753 = vsub.f32 %v2590, %v3752
        %v3754 = vand.u32 %v3753, 4294901760
        %3755 = vmatpush1.msra.mxu0 %v3754
        %v3756 = vand.u32 %v2593, 4294901760
        %v3757 = vsub.f32 %v2593, %v3756
        %v3758 = vand.u32 %v3757, 4294901760
        %3759 = vmatprep.subr.mxu0 %v3758
        %v3760 = vand.u32 %v2592, 4294901760
        %v3761 = vsub.f32 %v2592, %v3760
        %v3762 = vand.u32 %v3761, 4294901760
        %3763 = vmatpush1.msra.mxu0 %v3762
        %v3764 = vand.u32 %v2595, 4294901760
        %v3765 = vsub.f32 %v2595, %v3764
        %v3766 = vand.u32 %v3765, 4294901760
        %3767 = vmatprep.subr.mxu0 %v3766
        %v3768 = vand.u32 %v2594, 4294901760
        %v3769 = vsub.f32 %v2594, %v3768
        %v3770 = vand.u32 %v3769, 4294901760
        %3771 = vmatpush1.msra.mxu0 %v3770
        %v3772 = vand.u32 %v2597, 4294901760
        %v3773 = vsub.f32 %v2597, %v3772
        %v3774 = vand.u32 %v3773, 4294901760
        %3775 = vmatprep.subr.mxu0 %v3774
        %v3776 = vand.u32 %v2596, 4294901760
        %v3777 = vsub.f32 %v2596, %v3776
        %v3778 = vand.u32 %v3777, 4294901760
        %3779 = vmatpush1.msra.mxu0 %v3778
        %v3780 = vand.u32 %v2599, 4294901760
        %v3781 = vsub.f32 %v2599, %v3780
        %v3782 = vand.u32 %v3781, 4294901760
        %3783 = vmatprep.subr.mxu0 %v3782
        %v3784 = vand.u32 %v2598, 4294901760
        %v3785 = vsub.f32 %v2598, %v3784
        %v3786 = vand.u32 %v3785, 4294901760
        %3787 = vmatpush1.msra.mxu0 %v3786
        %v3788 = vand.u32 %v2601, 4294901760
        %v3789 = vsub.f32 %v2601, %v3788
        %v3790 = vand.u32 %v3789, 4294901760
        %3791 = vmatprep.subr.mxu0 %v3790
        %v3792 = vand.u32 %v2600, 4294901760
        %v3793 = vsub.f32 %v2600, %v3792
        %v3794 = vand.u32 %v3793, 4294901760
        %3795 = vmatpush1.msra.mxu0 %v3794
        %v3796 = vand.u32 %v2603, 4294901760
        %v3797 = vsub.f32 %v2603, %v3796
        %v3798 = vand.u32 %v3797, 4294901760
        %3799 = vmatprep.subr.mxu0 %v3798
        %v3800 = vand.u32 %v2602, 4294901760
        %v3801 = vsub.f32 %v2602, %v3800
        %v3802 = vand.u32 %v3801, 4294901760
        %3803 = vmatpush1.msra.mxu0 %v3802
        %v3804 = vand.u32 %v2605, 4294901760
        %v3805 = vsub.f32 %v2605, %v3804
        %v3806 = vand.u32 %v3805, 4294901760
        %3807 = vmatprep.subr.mxu0 %v3806
        %v3808 = vand.u32 %v2604, 4294901760
        %v3809 = vsub.f32 %v2604, %v3808
        %v3810 = vand.u32 %v3809, 4294901760
        %3811 = vmatpush1.msra.mxu0 %v3810
        %v3812 = vand.u32 %v2607, 4294901760
        %v3813 = vsub.f32 %v2607, %v3812
        %v3814 = vand.u32 %v3813, 4294901760
        %3815 = vmatprep.subr.mxu0 %v3814
        %v3816 = vand.u32 %v2606, 4294901760
        %v3817 = vsub.f32 %v2606, %v3816
        %v3818 = vand.u32 %v3817, 4294901760
        %3819 = vmatpush1.msra.mxu0 %v3818
        %v3820 = vand.u32 %v2609, 4294901760
        %v3821 = vsub.f32 %v2609, %v3820
        %v3822 = vand.u32 %v3821, 4294901760
        %3823 = vmatprep.subr.mxu0 %v3822
        %v3824 = vand.u32 %v2608, 4294901760
        %v3825 = vsub.f32 %v2608, %v3824
        %v3826 = vand.u32 %v3825, 4294901760
        %3827 = vmatpush1.msra.mxu0 %v3826
        %v3828 = vand.u32 %v2611, 4294901760
        %v3829 = vsub.f32 %v2611, %v3828
        %v3830 = vand.u32 %v3829, 4294901760
        %3831 = vmatprep.subr.mxu0 %v3830
        %v3832 = vand.u32 %v2610, 4294901760
        %v3833 = vsub.f32 %v2610, %v3832
        %v3834 = vand.u32 %v3833, 4294901760
        %3835 = vmatpush1.msra.mxu0 %v3834
        %v3836 = vand.u32 %v2613, 4294901760
        %v3837 = vsub.f32 %v2613, %v3836
        %v3838 = vand.u32 %v3837, 4294901760
        %3839 = vmatprep.subr.mxu0 %v3838
        %v3840 = vand.u32 %v2612, 4294901760
        %v3841 = vsub.f32 %v2612, %v3840
        %v3842 = vand.u32 %v3841, 4294901760
        %3843 = vmatpush1.msra.mxu0 %v3842
        %v3844 = vand.u32 %v2615, 4294901760
        %v3845 = vsub.f32 %v2615, %v3844
        %v3846 = vand.u32 %v3845, 4294901760
        %3847 = vmatprep.subr.mxu0 %v3846
        %v3848 = vand.u32 %v2614, 4294901760
        %v3849 = vsub.f32 %v2614, %v3848
        %v3850 = vand.u32 %v3849, 4294901760
        %3851 = vmatpush1.msra.mxu0 %v3850
        %3852 = vmatprep.subr.mxu0 0.0
        %3853 = vmatpush1.msra.mxu0 0.0
        %3854 = vmatprep.subr.mxu0 0.0
        %3855 = vmatpush1.msra.mxu0 0.0
        %3856 = vmatprep.subr.mxu0 0.0
        %3857 = vmatpush1.msra.mxu0 0.0
        %3858 = vmatprep.subr.mxu0 0.0
        %3859 = vmatpush1.msra.mxu0 0.0
        %3860 = vmatprep.subr.mxu0 0.0
        %3861 = vmatpush1.msra.mxu0 0.0
        %3862 = vmatprep.subr.mxu0 0.0
        %3863 = vmatpush1.msra.mxu0 0.0
        %3864 = vmatprep.subr.mxu0 0.0
        %3865 = vmatpush1.msra.mxu0 0.0
        %3866 = vmatprep.subr.mxu0 0.0
        %3867 = vmatpush1.msra.mxu0 0.0
        %3868 = vmatprep.subr.mxu0 0.0
        %3869 = vmatpush1.msra.mxu0 0.0
        %3870 = vmatprep.subr.mxu0 0.0
        %3871 = vmatpush1.msra.mxu0 0.0
        %3872 = vmatprep.subr.mxu0 0.0
        %3873 = vmatpush1.msra.mxu0 0.0
        %3874 = vmatprep.subr.mxu0 0.0
        %3875 = vmatpush1.msra.mxu0 0.0
        %3876 = vmatprep.subr.mxu0 0.0
        %3877 = vmatpush1.msra.mxu0 0.0
        %3878 = vmatprep.subr.mxu0 0.0
        %3879 = vmatpush1.msra.mxu0 0.0
        %3880 = vmatprep.subr.mxu0 0.0
        %3881 = vmatpush1.msra.mxu0 0.0
        %3882 = vmatprep.subr.mxu0 0.0
        %3883 = vmatpush1.msra.mxu0 0.0
        %3884 = vmatprep.mubr.f32.mxu0 0.0
        %v3885 = vand.u32 %v799, 4294901760
        %3886 = vmatmul.mubr.f32.gmra.mrb[0].mxu0 %v3885
        %v3887 = vpop.f32.mrb[0].mxu0
        %v3888 = vadd.f32 %v3585, %v3887
        %v3889 = vpop.f32.mrb[0].mxu0
        %v3890 = vadd.f32 %v3587, %v3889
        %3891 = vmatprep.mubr.f32.mxu0 0.0
        %v3892 = vand.u32 %v805, 4294901760
        %3893 = vmatmul.mubr.f32.gmra.mrb[0].mxu0 %v3892
        %v3894 = vpop.f32.mrb[0].mxu0
        %v3895 = vadd.f32 %v3594, %v3894
        %v3896 = vpop.f32.mrb[0].mxu0
        %v3897 = vadd.f32 %v3596, %v3896
        %3898 = vmatprep.mubr.f32.mxu0 0.0
        %v3899 = vand.u32 %v811, 4294901760
        %3900 = vmatmul.mubr.f32.gmra.mrb[0].mxu0 %v3899
        %v3901 = vpop.f32.mrb[0].mxu0
        %v3902 = vadd.f32 %v3603, %v3901
        %v3903 = vpop.f32.mrb[0].mxu0
        %v3904 = vadd.f32 %v3605, %v3903
        %3905 = vmatprep.mubr.f32.mxu0 0.0
        %v3906 = vand.u32 %v817, 4294901760
        %3907 = vmatmul.mubr.f32.gmra.mrb[0].mxu0 %v3906
        %v3908 = vpop.f32.mrb[0].mxu0
        %v3909 = vadd.f32 %v3612, %v3908
        %v3910 = vpop.f32.mrb[0].mxu0
        %v3911 = vadd.f32 %v3614, %v3910
        %3912 = vmatprep.mubr.f32.mxu0 0.0
        %v3913 = vand.u32 %v1387, 4294901760
        %3914 = vmatmul.mubr.f32.gmra.mrb[0].mxu0 %v3913
        %v3915 = vpop.f32.mrb[0].mxu0
        %v3916 = vadd.f32 %v3621, %v3915
        %v3917 = vpop.f32.mrb[0].mxu0
        %v3918 = vadd.f32 %v3623, %v3917
        %3919 = vmatprep.mubr.f32.mxu0 0.0
        %v3920 = vand.u32 %v1393, 4294901760
        %3921 = vmatmul.mubr.f32.gmra.mrb[0].mxu0 %v3920
        %v3922 = vpop.f32.mrb[0].mxu0
        %v3923 = vadd.f32 %v3630, %v3922
        %v3924 = vpop.f32.mrb[0].mxu0
        %v3925 = vadd.f32 %v3632, %v3924
        %3926 = vmatprep.mubr.f32.mxu0 0.0
        %v3927 = vand.u32 %v1399, 4294901760
        %3928 = vmatmul.mubr.f32.gmra.mrb[0].mxu0 %v3927
        %v3929 = vpop.f32.mrb[0].mxu0
        %v3930 = vadd.f32 %v3639, %v3929
        %v3931 = vpop.f32.mrb[0].mxu0
        %v3932 = vadd.f32 %v3641, %v3931
        %3933 = vmatprep.mubr.f32.mxu0 0.0
        %v3934 = vand.u32 %v1405, 4294901760
        %3935 = vmatmul.mubr.f32.gmra.mrb[0].mxu0 %v3934
        %v3936 = vpop.f32.mrb[0].mxu0
        %v3937 = vadd.f32 %v3648, %v3936
        %v3938 = vpop.f32.mrb[0].mxu0
        %v3939 = vadd.f32 %v3650, %v3938
        %3940 = vmatprep.mubr.f32.mxu0 0.0
        %v3941 = vand.u32 %v1975, 4294901760
        %3942 = vmatmul.mubr.f32.gmra.mrb[0].mxu0 %v3941
        %v3943 = vpop.f32.mrb[0].mxu0
        %v3944 = vadd.f32 %v3657, %v3943
        %v3945 = vpop.f32.mrb[0].mxu0
        %v3946 = vadd.f32 %v3659, %v3945
        %3947 = vmatprep.mubr.f32.mxu0 0.0
        %v3948 = vand.u32 %v1981, 4294901760
        %3949 = vmatmul.mubr.f32.gmra.mrb[0].mxu0 %v3948
        %v3950 = vpop.f32.mrb[0].mxu0
        %v3951 = vadd.f32 %v3666, %v3950
        %v3952 = vpop.f32.mrb[0].mxu0
        %v3953 = vadd.f32 %v3668, %v3952
        %3954 = vmatprep.mubr.f32.mxu0 0.0
        %v3955 = vand.u32 %v1987, 4294901760
        %3956 = vmatmul.mubr.f32.gmra.mrb[0].mxu0 %v3955
        %v3957 = vpop.f32.mrb[0].mxu0
        %v3958 = vadd.f32 %v3675, %v3957
        %v3959 = vpop.f32.mrb[0].mxu0
        %v3960 = vadd.f32 %v3677, %v3959
        %3961 = vmatprep.mubr.f32.mxu0 0.0
        %v3962 = vand.u32 %v1993, 4294901760
        %3963 = vmatmul.mubr.f32.gmra.mrb[0].mxu0 %v3962
        %v3964 = vpop.f32.mrb[0].mxu0
        %v3965 = vadd.f32 %v3684, %v3964
        %v3966 = vpop.f32.mrb[0].mxu0
        %v3967 = vadd.f32 %v3686, %v3966
        %3968 = vmatprep.mubr.f32.mxu0 0.0
        %v3969 = vand.u32 %v2563, 4294901760
        %3970 = vmatmul.mubr.f32.gmra.mrb[0].mxu0 %v3969
        %v3971 = vpop.f32.mrb[0].mxu0
        %v3972 = vadd.f32 %v3693, %v3971
        %v3973 = vpop.f32.mrb[0].mxu0
        %v3974 = vadd.f32 %v3695, %v3973
        %3975 = vmatprep.mubr.f32.mxu0 0.0
        %v3976 = vand.u32 %v2569, 4294901760
        %3977 = vmatmul.mubr.f32.gmra.mrb[0].mxu0 %v3976
        %v3978 = vpop.f32.mrb[0].mxu0
        %v3979 = vadd.f32 %v3702, %v3978
        %v3980 = vpop.f32.mrb[0].mxu0
        %v3981 = vadd.f32 %v3704, %v3980
        %3982 = vmatprep.mubr.f32.mxu0 0.0
        %v3983 = vand.u32 %v2575, 4294901760
        %3984 = vmatmul.mubr.f32.gmra.mrb[0].mxu0 %v3983
        %v3985 = vpop.f32.mrb[0].mxu0
        %v3986 = vadd.f32 %v3711, %v3985
        %v3987 = vpop.f32.mrb[0].mxu0
        %v3988 = vadd.f32 %v3713, %v3987
        %3989 = vmatprep.mubr.f32.mxu0 0.0
        %v3990 = vand.u32 %v2581, 4294901760
        %3991 = vmatmul.mubr.f32.gmra.mrb[0].mxu0 %v3990
        %v3992 = vpop.f32.mrb[0].mxu0
        %v3993 = vadd.f32 %v3720, %v3992
        %v3994 = vpop.f32.mrb[0].mxu0
        %v3995 = vadd.f32 %v3722, %v3994
        %3996 = vdwg.mxu0
        %v3997 = vand.u32 %v2585, 4294901760
        %3998 = vmatprep.subr.mxu0 %v3997
        %v3999 = vand.u32 %v2584, 4294901760
        %4000 = vmatpush1.msra.mxu0 %v3999
        %v4001 = vand.u32 %v2587, 4294901760
        %4002 = vmatprep.subr.mxu0 %v4001
        %v4003 = vand.u32 %v2586, 4294901760
        %4004 = vmatpush1.msra.mxu0 %v4003
        %v4005 = vand.u32 %v2589, 4294901760
        %4006 = vmatprep.subr.mxu0 %v4005
        %v4007 = vand.u32 %v2588, 4294901760
        %4008 = vmatpush1.msra.mxu0 %v4007
        %v4009 = vand.u32 %v2591, 4294901760
        %4010 = vmatprep.subr.mxu0 %v4009
        %v4011 = vand.u32 %v2590, 4294901760
        %4012 = vmatpush1.msra.mxu0 %v4011
        %v4013 = vand.u32 %v2593, 4294901760
        %4014 = vmatprep.subr.mxu0 %v4013
        %v4015 = vand.u32 %v2592, 4294901760
        %4016 = vmatpush1.msra.mxu0 %v4015
        %v4017 = vand.u32 %v2595, 4294901760
        %4018 = vmatprep.subr.mxu0 %v4017
        %v4019 = vand.u32 %v2594, 4294901760
        %4020 = vmatpush1.msra.mxu0 %v4019
        %v4021 = vand.u32 %v2597, 4294901760
        %4022 = vmatprep.subr.mxu0 %v4021
        %v4023 = vand.u32 %v2596, 4294901760
        %4024 = vmatpush1.msra.mxu0 %v4023
        %v4025 = vand.u32 %v2599, 4294901760
        %4026 = vmatprep.subr.mxu0 %v4025
        %v4027 = vand.u32 %v2598, 4294901760
        %4028 = vmatpush1.msra.mxu0 %v4027
        %v4029 = vand.u32 %v2601, 4294901760
        %4030 = vmatprep.subr.mxu0 %v4029
        %v4031 = vand.u32 %v2600, 4294901760
        %4032 = vmatpush1.msra.mxu0 %v4031
        %v4033 = vand.u32 %v2603, 4294901760
        %4034 = vmatprep.subr.mxu0 %v4033
        %v4035 = vand.u32 %v2602, 4294901760
        %4036 = vmatpush1.msra.mxu0 %v4035
        %v4037 = vand.u32 %v2605, 4294901760
        %4038 = vmatprep.subr.mxu0 %v4037
        %v4039 = vand.u32 %v2604, 4294901760
        %4040 = vmatpush1.msra.mxu0 %v4039
        %v4041 = vand.u32 %v2607, 4294901760
        %4042 = vmatprep.subr.mxu0 %v4041
        %v4043 = vand.u32 %v2606, 4294901760
        %4044 = vmatpush1.msra.mxu0 %v4043
        %v4045 = vand.u32 %v2609, 4294901760
        %4046 = vmatprep.subr.mxu0 %v4045
        %v4047 = vand.u32 %v2608, 4294901760
        %4048 = vmatpush1.msra.mxu0 %v4047
        %v4049 = vand.u32 %v2611, 4294901760
        %4050 = vmatprep.subr.mxu0 %v4049
        %v4051 = vand.u32 %v2610, 4294901760
        %4052 = vmatpush1.msra.mxu0 %v4051
        %v4053 = vand.u32 %v2613, 4294901760
        %4054 = vmatprep.subr.mxu0 %v4053
        %v4055 = vand.u32 %v2612, 4294901760
        %4056 = vmatpush1.msra.mxu0 %v4055
        %v4057 = vand.u32 %v2615, 4294901760
        %4058 = vmatprep.subr.mxu0 %v4057
        %v4059 = vand.u32 %v2614, 4294901760
        %4060 = vmatpush1.msra.mxu0 %v4059
        %4061 = vmatprep.subr.mxu0 0.0
        %4062 = vmatpush1.msra.mxu0 0.0
        %4063 = vmatprep.subr.mxu0 0.0
        %4064 = vmatpush1.msra.mxu0 0.0
        %4065 = vmatprep.subr.mxu0 0.0
        %4066 = vmatpush1.msra.mxu0 0.0
        %4067 = vmatprep.subr.mxu0 0.0
        %4068 = vmatpush1.msra.mxu0 0.0
        %4069 = vmatprep.subr.mxu0 0.0
        %4070 = vmatpush1.msra.mxu0 0.0
        %4071 = vmatprep.subr.mxu0 0.0
        %4072 = vmatpush1.msra.mxu0 0.0
        %4073 = vmatprep.subr.mxu0 0.0
        %4074 = vmatpush1.msra.mxu0 0.0
        %4075 = vmatprep.subr.mxu0 0.0
        %4076 = vmatpush1.msra.mxu0 0.0
        %4077 = vmatprep.subr.mxu0 0.0
        %4078 = vmatpush1.msra.mxu0 0.0
        %4079 = vmatprep.subr.mxu0 0.0
        %4080 = vmatpush1.msra.mxu0 0.0
        %4081 = vmatprep.subr.mxu0 0.0
        %4082 = vmatpush1.msra.mxu0 0.0
        %4083 = vmatprep.subr.mxu0 0.0
        %4084 = vmatpush1.msra.mxu0 0.0
        %4085 = vmatprep.subr.mxu0 0.0
        %4086 = vmatpush1.msra.mxu0 0.0
        %4087 = vmatprep.subr.mxu0 0.0
        %4088 = vmatpush1.msra.mxu0 0.0
        %4089 = vmatprep.subr.mxu0 0.0
        %4090 = vmatpush1.msra.mxu0 0.0
        %4091 = vmatprep.subr.mxu0 0.0
        %4092 = vmatpush1.msra.mxu0 0.0
        %4093 = vmatprep.mubr.f32.mxu0 0.0
        %v4094 = vand.u32 %v799, 4294901760
        %4095 = vmatmul.mubr.f32.gmra.mrb[0].mxu0 %v4094
        %v4096 = vpop.f32.mrb[0].mxu0
        %v4097 = vadd.f32 %v3888, %v4096
        %v4098 = vpop.f32.mrb[0].mxu0
        %v4099 = vadd.f32 %v3890, %v4098
        %4100 = vmatprep.mubr.f32.mxu0 0.0
        %v4101 = vand.u32 %v805, 4294901760
        %4102 = vmatmul.mubr.f32.gmra.mrb[0].mxu0 %v4101
        %v4103 = vpop.f32.mrb[0].mxu0
        %v4104 = vadd.f32 %v3895, %v4103
        %v4105 = vpop.f32.mrb[0].mxu0
        %v4106 = vadd.f32 %v3897, %v4105
        %4107 = vmatprep.mubr.f32.mxu0 0.0
        %v4108 = vand.u32 %v811, 4294901760
        %4109 = vmatmul.mubr.f32.gmra.mrb[0].mxu0 %v4108
        %v4110 = vpop.f32.mrb[0].mxu0
        %v4111 = vadd.f32 %v3902, %v4110
        %v4112 = vpop.f32.mrb[0].mxu0
        %v4113 = vadd.f32 %v3904, %v4112
        %4114 = vmatprep.mubr.f32.mxu0 0.0
        %v4115 = vand.u32 %v817, 4294901760
        %4116 = vmatmul.mubr.f32.gmra.mrb[0].mxu0 %v4115
        %v4117 = vpop.f32.mrb[0].mxu0
        %v4118 = vadd.f32 %v3909, %v4117
        %v4119 = vpop.f32.mrb[0].mxu0
        %v4120 = vadd.f32 %v3911, %v4119
        %4121 = vmatprep.mubr.f32.mxu0 0.0
        %v4122 = vand.u32 %v1387, 4294901760
        %4123 = vmatmul.mubr.f32.gmra.mrb[0].mxu0 %v4122
        %v4124 = vpop.f32.mrb[0].mxu0
        %v4125 = vadd.f32 %v3916, %v4124
        %v4126 = vpop.f32.mrb[0].mxu0
        %v4127 = vadd.f32 %v3918, %v4126
        %4128 = vmatprep.mubr.f32.mxu0 0.0
        %v4129 = vand.u32 %v1393, 4294901760
        %4130 = vmatmul.mubr.f32.gmra.mrb[0].mxu0 %v4129
        %v4131 = vpop.f32.mrb[0].mxu0
        %v4132 = vadd.f32 %v3923, %v4131
        %v4133 = vpop.f32.mrb[0].mxu0
        %v4134 = vadd.f32 %v3925, %v4133
        %4135 = vmatprep.mubr.f32.mxu0 0.0
        %v4136 = vand.u32 %v1399, 4294901760
        %4137 = vmatmul.mubr.f32.gmra.mrb[0].mxu0 %v4136
        %v4138 = vpop.f32.mrb[0].mxu0
        %v4139 = vadd.f32 %v3930, %v4138
        %v4140 = vpop.f32.mrb[0].mxu0
        %v4141 = vadd.f32 %v3932, %v4140
        %4142 = vmatprep.mubr.f32.mxu0 0.0
        %v4143 = vand.u32 %v1405, 4294901760
        %4144 = vmatmul.mubr.f32.gmra.mrb[0].mxu0 %v4143
        %v4145 = vpop.f32.mrb[0].mxu0
        %v4146 = vadd.f32 %v3937, %v4145
        %v4147 = vpop.f32.mrb[0].mxu0
        %v4148 = vadd.f32 %v3939, %v4147
        %4149 = vmatprep.mubr.f32.mxu0 0.0
        %v4150 = vand.u32 %v1975, 4294901760
        %4151 = vmatmul.mubr.f32.gmra.mrb[0].mxu0 %v4150
        %v4152 = vpop.f32.mrb[0].mxu0
        %v4153 = vadd.f32 %v3944, %v4152
        %v4154 = vpop.f32.mrb[0].mxu0
        %v4155 = vadd.f32 %v3946, %v4154
        %4156 = vmatprep.mubr.f32.mxu0 0.0
        %v4157 = vand.u32 %v1981, 4294901760
        %4158 = vmatmul.mubr.f32.gmra.mrb[0].mxu0 %v4157
        %v4159 = vpop.f32.mrb[0].mxu0
        %v4160 = vadd.f32 %v3951, %v4159
        %v4161 = vpop.f32.mrb[0].mxu0
        %v4162 = vadd.f32 %v3953, %v4161
        %4163 = vmatprep.mubr.f32.mxu0 0.0
        %v4164 = vand.u32 %v1987, 4294901760
        %4165 = vmatmul.mubr.f32.gmra.mrb[0].mxu0 %v4164
        %v4166 = vpop.f32.mrb[0].mxu0
        %v4167 = vadd.f32 %v3958, %v4166
        %v4168 = vpop.f32.mrb[0].mxu0
        %v4169 = vadd.f32 %v3960, %v4168
        %4170 = vmatprep.mubr.f32.mxu0 0.0
        %v4171 = vand.u32 %v1993, 4294901760
        %4172 = vmatmul.mubr.f32.gmra.mrb[0].mxu0 %v4171
        %v4173 = vpop.f32.mrb[0].mxu0
        %v4174 = vadd.f32 %v3965, %v4173
        %v4175 = vpop.f32.mrb[0].mxu0
        %v4176 = vadd.f32 %v3967, %v4175
        %4177 = vmatprep.mubr.f32.mxu0 0.0
        %v4178 = vand.u32 %v2563, 4294901760
        %4179 = vmatmul.mubr.f32.gmra.mrb[0].mxu0 %v4178
        %v4180 = vpop.f32.mrb[0].mxu0
        %v4181 = vadd.f32 %v3972, %v4180
        %v4182 = vpop.f32.mrb[0].mxu0
        %v4183 = vadd.f32 %v3974, %v4182
        %4184 = vmatprep.mubr.f32.mxu0 0.0
        %v4185 = vand.u32 %v2569, 4294901760
        %4186 = vmatmul.mubr.f32.gmra.mrb[0].mxu0 %v4185
        %v4187 = vpop.f32.mrb[0].mxu0
        %v4188 = vadd.f32 %v3979, %v4187
        %v4189 = vpop.f32.mrb[0].mxu0
        %v4190 = vadd.f32 %v3981, %v4189
        %4191 = vmatprep.mubr.f32.mxu0 0.0
        %v4192 = vand.u32 %v2575, 4294901760
        %4193 = vmatmul.mubr.f32.gmra.mrb[0].mxu0 %v4192
        %v4194 = vpop.f32.mrb[0].mxu0
        %v4195 = vadd.f32 %v3986, %v4194
        %v4196 = vpop.f32.mrb[0].mxu0
        %v4197 = vadd.f32 %v3988, %v4196
        %4198 = vmatprep.mubr.f32.mxu0 0.0
        %v4199 = vand.u32 %v2581, 4294901760
        %4200 = vmatmul.mubr.f32.gmra.mrb[0].mxu0 %v4199
        %v4201 = vpop.f32.mrb[0].mxu0
        %v4202 = vadd.f32 %v3993, %v4201
        %v4203 = vpop.f32.mrb[0].mxu0
        %v4204 = vadd.f32 %v3995, %v4203
        %4205 = vdwg.mxu0
        %4206 = vst [vmem:[%s204] sm:$0xff] %v4097
        %4207 = vst [vmem:[%s204 + $0x8] sm:$0xff] %v4099
        %4208 = vst [vmem:[%s204 + $0x10] sm:$0xff] %v4104
        %4209 = vst [vmem:[%s204 + $0x18] sm:$0xff] %v4106
        %4210 = vst [vmem:[%s204 + $0x20] sm:$0xff] %v4111
        %4211 = vst [vmem:[%s204 + $0x28] sm:$0xff] %v4113
        %4212 = vst [vmem:[%s204 + $0x30] sm:$0xff] %v4118
        %4213 = vst [vmem:[%s204 + $0x38] sm:$0xff] %v4120
        %4214 = vst [vmem:[%s204 + $0x40] sm:$0xff] %v4125
        %4215 = vst [vmem:[%s204 + $0x48] sm:$0xff] %v4127
        %4216 = vst [vmem:[%s204 + $0x50] sm:$0xff] %v4132
        %4217 = vst [vmem:[%s204 + $0x58] sm:$0xff] %v4134
        %4218 = vst [vmem:[%s204 + $0x60] sm:$0xff] %v4139
        %4219 = vst [vmem:[%s204 + $0x68] sm:$0xff] %v4141
        %4220 = vst [vmem:[%s204 + $0x70] sm:$0xff] %v4146
        %4221 = vst [vmem:[%s204 + $0x78] sm:$0xff] %v4148
        %4222 = vst [vmem:[%s204 + $0x80] sm:$0xff] %v4153
        %4223 = vst [vmem:[%s204 + $0x88] sm:$0xff] %v4155
        %4224 = vst [vmem:[%s204 + $0x90] sm:$0xff] %v4160
        %4225 = vst [vmem:[%s204 + $0x98] sm:$0xff] %v4162
        %4226 = vst [vmem:[%s204 + $0xa0] sm:$0xff] %v4167
        %4227 = vst [vmem:[%s204 + $0xa8] sm:$0xff] %v4169
        %4228 = vst [vmem:[%s204 + $0xb0] sm:$0xff] %v4174
        %4229 = vst [vmem:[%s204 + $0xb8] sm:$0xff] %v4176
        %4230 = vst [vmem:[%s204 + $0xc0] sm:$0xff] %v4181
        %4231 = vst [vmem:[%s204 + $0xc8] sm:$0xff] %v4183
        %4232 = vst [vmem:[%s204 + $0xd0] sm:$0xff] %v4188
        %4233 = vst [vmem:[%s204 + $0xd8] sm:$0xff] %v4190
        %4234 = vst [vmem:[%s204 + $0xe0] sm:$0xff] %v4195
        %4235 = vst [vmem:[%s204 + $0xe8] sm:$0xff] %v4197
        %4236 = vst [vmem:[%s204 + $0xf0] sm:$0xff] %v4202
        %4237 = vst [vmem:[%s204 + $0xf8] sm:$0xff] %v4204
        %s4238 = sand.u32 %s97, 1
        %s4239 = scalar_lea.sflag [#allocation4], %s4238
        %s4240 = sand.u32 %s97, 1
        %s4241 = smul.addr %s4240, 256
        %s4242 = scalar_lea.vmem [#allocation7], %s4241
        // Predicated region
        $region41: #{tpu_custom_call.1} parent=31 // pred_check
          %p4243 = pneg %p107
        $region42: #{tpu_custom_call.1} parent=31 // pred_check_branch
          %4245 = sbr.rel (%p4243) target = $region44
        $region43: #{tpu_custom_call.1} parent=31 // pred_region
          %s4246 = smul.u32 4, %s21
          %s4248 = ssub.s32 4096, 4096
          %4249 = vsyncadd %s4239, %s4248
          %s4250 = smul.addr %s4246, 8
          %s4251 = smul.addr %s4250, 128
          %s4252 = scalar_lea.hbm %s3, %s4251
          %s4253 = sshll.u32 %s4242, 4
          %s4254 = int_to_ptr.vmem [resolvable:$true] %s4253
          %4259 = dma.vmem_to_hbm [thread:$0]  %s4254, 4096, %s4252, %s4239, 256, 256, 16
        $region44: #{tpu_custom_call.1} parent=31 // pred_fallthru
          _
      $region32: #{tpu_custom_call.1} parent=5 // pred_fallthru
        _
      %p4260 = scmp.le.s32.totalorder 2, %s16
      // Predicated region
      $region45: #{tpu_custom_call.1} parent=5 // pred_check
        %p4261 = pneg %p4260
      $region46: #{tpu_custom_call.1} parent=5 // pred_check_branch
        %4263 = sbr.rel (%p4261) target = $region48
      $region47: #{tpu_custom_call.1} parent=5 // pred_region
        %s4264 = ssub.s32 %s16, 2
        // Predicated region
        $region49: #{tpu_custom_call.1} parent=47 // pred_check
          %p4265 = pneg %p113
        $region50: #{tpu_custom_call.1} parent=47 // pred_check_branch
          %4267 = sbr.rel (%p4265) target = $region52
        $region51: #{tpu_custom_call.1} parent=47 // pred_region
          %s4268 = sand.u32 %s98, 1
          %s4269 = scalar_lea.sflag [#allocation4], %s4268
          %s4270 = sand.u32 %s98, 1
          %s4271 = smul.addr %s4270, 256
          %s4272 = scalar_lea.vmem [#allocation7], %s4271
          %4273 = dma.done %s4269, 4096
        $region52: #{tpu_custom_call.1} parent=47 // pred_fallthru
          _
      $region48: #{tpu_custom_call.1} parent=5 // pred_fallthru
        _
    $region6: #{tpu_custom_call.1} parent=1 // loop_footer
      %s20 = sadd.s32 1, %s16
    $region7: #{tpu_custom_call.1} parent=1 // loop_footer_branch
      %15 = sbr.rel target = $region3
    $region8: #{tpu_custom_call.1} parent=1 // loop_exit
      _
    %4274 = vsyncpa [#allocation3], 1
    %s4275 = scalar_lea.sflag [#allocation3], 1
    %4276 = vsyncpa %s4275, 1
    %4277 = vsyncpa [#allocation6], 1
    %4278 = vsyncpa [#allocation4], 1
    %s4279 = scalar_lea.sflag [#allocation4], 1
    %4280 = vsyncpa %s4279, 1

</llo_original>
